<compile_context>
chip_gen: v5e
topology: v5e:2x2
jax: 0.10.0
libtpu: 0.0.40
codegen_flags: <defaults>
</compile_context>

<pallas_src>
import jax
import jax.numpy as jnp
from jax.experimental import pallas as pl
from jax.experimental.pallas import tpu as pltpu

LN_EPS = 1e-5  # torch.nn.LayerNorm default


def _round_up(n, m):
    return ((n + m - 1) // m) * m


def _vmem_capacity_bytes():
    """Physical VMEM per TensorCore (v5e/v6e: 128 MiB, v7x: 64 MiB)."""
    try:
        cap = getattr(pltpu.get_tpu_info(), "vmem_capacity_bytes", None)
        if cap:
            return int(cap)
    except Exception:
        pass
    return 64 * 1024 * 1024  # conservative fallback (v7x-sized)


def _spec(shape, index_map, nbuf=None):
    """BlockSpec; nbuf=1 single-buffers grid-invariant operands (saves VMEM)."""
    if nbuf is None:
        return pl.BlockSpec(shape, index_map)
    try:
        return pl.BlockSpec(shape, index_map, pipeline_mode=pl.Buffered(nbuf))
    except TypeError:  # older jax without pipeline_mode= on BlockSpec
        return pl.BlockSpec(shape, index_map)


def _layer_norm_f32(x, gamma, beta):
    # Fused one-pass statistics: sum and sum-of-squares together,
    # var = E[x^2] - mean^2 (kept in f32; cancellation risk acceptable at
    # LN-scale inputs, clamped at 0 for safety).
    inv_d = 1.0 / x.shape[-1]
    s = jnp.sum(x, axis=-1, keepdims=True)
    s2 = jnp.sum(x * x, axis=-1, keepdims=True)
    mean = s * inv_d
    var = jnp.maximum(s2 * inv_d - mean * mean, 0.0)
    xn = (x - mean) * jax.lax.rsqrt(var + LN_EPS)
    return xn * gamma + beta


def _ffn_kernel(x_ref, gamma_ref, beta_ref, w1_ref, b1_ref, w2_ref, b2_ref, o_ref):
    """Fused FFN for one (TM, D) row tile; full H resident."""
    x = x_ref[...].astype(jnp.float32)
    xn = _layer_norm_f32(x, gamma_ref[...].astype(jnp.float32),
                         beta_ref[...].astype(jnp.float32))
    # Linear(D->H): bf16 MXU operands, f32 accumulation.
    h = jnp.dot(xn.astype(w1_ref.dtype), w1_ref[...],
                preferred_element_type=jnp.float32)
    h = h + b1_ref[...].astype(jnp.float32)
    h = h * jax.nn.sigmoid(h)  # SiLU: sigmoid -> EUP, multiply -> VPU
    # Dropout(p=0.0) is identity.
    # TODO(synk): stochastic dropout via pltpu.prng_* if p>0 training is needed.
    # TODO(synk): on v6e/v7x the bias+SiLU could run in bf16 to halve the hidden
    # buffer; kept in f32 here for accuracy and v5e portability.
    y = jnp.dot(h.astype(w2_ref.dtype), w2_ref[...],
                preferred_element_type=jnp.float32)
    o_ref[...] = (y + b2_ref[...].astype(jnp.float32)).astype(o_ref.dtype)


def _ffn_kernel_htiled(x_ref, gamma_ref, beta_ref, w1_ref, b1_ref, w2_ref, b2_ref,
                       o_ref, acc_ref, xn_ref):
    """H-tiled FFN: grid = (row tiles, H tiles); accumulates (TM, D) in f32."""
    hi = pl.program_id(1)

    @pl.when(hi == 0)
    def _init():
        # LayerNorm once per row tile; cache normalized rows in matmul dtype.
        x = x_ref[...].astype(jnp.float32)
        xn = _layer_norm_f32(x, gamma_ref[...].astype(jnp.float32),
                             beta_ref[...].astype(jnp.float32))
        xn_ref[...] = xn.astype(xn_ref.dtype)
        acc_ref[...] = jnp.zeros_like(acc_ref)

    h = jnp.dot(xn_ref[...], w1_ref[...], preferred_element_type=jnp.float32)
    h = h + b1_ref[...].astype(jnp.float32)
    h = h * jax.nn.sigmoid(h)
    acc_ref[...] += jnp.dot(h.astype(w2_ref.dtype), w2_ref[...],
                            preferred_element_type=jnp.float32)

    @pl.when(hi == pl.num_programs(1) - 1)
    def _finish():
        o_ref[...] = (acc_ref[...] +
                      b2_ref[...].astype(jnp.float32)).astype(o_ref.dtype)


def feed_forward_module(x, gamma, beta, w1, b1, w2, b2, *,
                        tile_rows=512, tile_h=None, matmul_dtype=jnp.bfloat16):
    """x: (..., D) -> (..., D). w1: (D,H), b1: (H,), w2: (H,D), b2: (D,).

    Pass w1/w2 already cast to `matmul_dtype` (bf16) so the cast happens once at
    setup rather than every call. D and H should be multiples of 128. bf16
    activations are supported directly (LN statistics stay f32 in-kernel).
    """
    orig_shape = x.shape
    D = int(orig_shape[-1])
    H = int(w1.shape[1])
    xf = x.reshape(-1, D)
    N = xf.shape[0]

    # Weights: cast only if caller did not pre-cast (avoid per-call HBM traffic).
    w1c = w1 if w1.dtype == matmul_dtype else w1.astype(matmul_dtype)
    w2c = w2 if w2.dtype == matmul_dtype else w2.astype(matmul_dtype)
    gamma2 = gamma.reshape(1, D).astype(jnp.float32)
    beta2 = beta.reshape(1, D).astype(jnp.float32)
    b1_2 = b1.reshape(1, H).astype(jnp.float32)
    b2_2 = b2.reshape(1, D).astype(jnp.float32)

    itm = jnp.dtype(x.dtype).itemsize
    wdt = jnp.dtype(matmul_dtype).itemsize
    wbytes = 2 * D * H * wdt
    small = (2 * D + H + D) * 4

    # Per-generation VMEM budget: ~80% of physical (headroom for compiler
    # scratch / spills); tile sizes are fitted against 75% of that budget.
    budget = int(_vmem_capacity_bytes() * 0.8)
    fit = int(budget * 0.75)

    def need_full(tm_):
        # x/out double-buffered, weights single-buffered, f32 hidden + row temps.
        return (4 * tm_ * D * itm + wbytes + small
                + tm_ * H * 4 + 2 * tm_ * D * 4)

    def need_htiled(tm_, th_):
        # w1/w2 H-slices double-buffered, f32 (tm, th) hidden,
        # f32 (tm, D) accumulator + matmul-dtype xn cache.
        return (4 * tm_ * D * itm + 4 * D * th_ * wdt + small
                + tm_ * th_ * 4 + 3 * tm_ * D * 4 + tm_ * D * wdt)

    # --- row tile selection ---
    tm = min(int(tile_rows), _round_up(N, 8))
    tm = max(8, (tm // 8) * 8)
    if N > 8 and pl.cdiv(N, tm) < 2:
        # >= 2 row-grid steps so both v7x TensorCores (megacore) get work.
        tm = max(8, _round_up(pl.cdiv(N, 2), 8))

    use_h_tiling = tile_h is not None and int(tile_h) < H
    if not use_h_tiling:
        while tm > 128 and need_full(tm) > fit:
            tm = max(128, ((tm // 2) // 8) * 8)
        if need_full(tm) > fit and H > 128:
            use_h_tiling = True  # weights+hidden can't stay resident (v7x scale)

    th = H
    if use_h_tiling:
        if tile_h is not None:
            th = int(tile_h)
            if H % th != 0:
                raise ValueError(f"tile_h={th} must divide H={H}")
        else:
            while th > 128 and th % 2 == 0 and need_htiled(tm, th) > fit:
                th //= 2
        while tm > 128 and need_htiled(tm, th) > fit:
            tm = max(128, ((tm // 2) // 8) * 8)

    n_pad = _round_up(N, tm)
    if n_pad != N:
        # Zero rows are LN-safe (var + eps > 0); padded outputs sliced off below.
        xf = jnp.pad(xf, ((0, n_pad - N), (0, 0)))
    n_row = n_pad // tm

    if not use_h_tiling:
        cost = pl.CostEstimate(
            flops=4 * n_pad * D * H,
            transcendentals=n_pad * H,
            bytes_accessed=2 * n_pad * D * itm + wbytes + small)
        out = pl.pallas_call(
            _ffn_kernel,
            out_shape=jax.ShapeDtypeStruct((n_pad, D), x.dtype),
            grid_spec=pltpu.PrefetchScalarGridSpec(
                num_scalar_prefetch=0,
                grid=(n_row,),
                in_specs=[
                    _spec((tm, D), lambda i: (i, 0)),           # x rows (pipelined)
                    _spec((1, D), lambda i: (0, 0), nbuf=1),    # gamma (invariant)
                    _spec((1, D), lambda i: (0, 0), nbuf=1),    # beta
                    _spec((D, H), lambda i: (0, 0), nbuf=1),    # w1 (resident)
                    _spec((1, H), lambda i: (0, 0), nbuf=1),    # b1
                    _spec((H, D), lambda i: (0, 0), nbuf=1),    # w2 (resident)
                    _spec((1, D), lambda i: (0, 0), nbuf=1),    # b2
                ],
                out_specs=pl.BlockSpec((tm, D), lambda i: (i, 0)),
            ),
            compiler_params=pltpu.CompilerParams(
                dimension_semantics=("parallel",),
                vmem_limit_bytes=budget,
            ),
            cost_estimate=cost,
        )(xf, gamma2, beta2, w1c, b1_2, w2c, b2_2)
    else:
        n_h = H // th
        cost = pl.CostEstimate(
            flops=4 * n_pad * D * H,
            transcendentals=n_pad * H,
            bytes_accessed=2 * n_pad * D * itm + n_row * wbytes + small)
        out = pl.pallas_call(
            _ffn_kernel_htiled,
            out_shape=jax.ShapeDtypeStruct((n_pad, D), x.dtype),
            grid_spec=pltpu.PrefetchScalarGridSpec(
                num_scalar_prefetch=0,
                grid=(n_row, n_h),
                in_specs=[
                    _spec((tm, D), lambda i, h: (i, 0)),          # x rows
                    _spec((1, D), lambda i, h: (0, 0), nbuf=1),   # gamma
                    _spec((1, D), lambda i, h: (0, 0), nbuf=1),   # beta
                    _spec((D, th), lambda i, h: (0, h)),          # w1 H-slice
                    _spec((1, th), lambda i, h: (0, h)),          # b1 H-slice
                    _spec((th, D), lambda i, h: (h, 0)),          # w2 H-slice
                    _spec((1, D), lambda i, h: (0, 0), nbuf=1),   # b2
                ],
                out_specs=pl.BlockSpec((tm, D), lambda i, h: (i, 0)),
                scratch_shapes=[pltpu.VMEM((tm, D), jnp.float32),   # f32 acc
                                pltpu.VMEM((tm, D), matmul_dtype)], # cached LN(x)
            ),
            compiler_params=pltpu.CompilerParams(
                dimension_semantics=("parallel", "arbitrary"),
                vmem_limit_bytes=budget,
            ),
            cost_estimate=cost,
        )(xf, gamma2, beta2, w1c, b1_2, w2c, b2_2)

    if n_pad != N:
        out = out[:N]
    return out.reshape(orig_shape)


def init_params(key, input_dim, hidden_dim, dtype=jnp.float32):
    """Deterministic synthetic init mirroring the module's parameter shapes."""
    k1, k2, k3, k4 = jax.random.split(key, 4)
    gamma = jnp.ones((input_dim,), dtype)                 # LayerNorm weight
    beta = jnp.zeros((input_dim,), dtype)                 # LayerNorm bias
    # nn.Linear default init: U(-1/sqrt(fan_in), 1/sqrt(fan_in))
    lim1 = 1.0 / (input_dim ** 0.5)
    w1 = jax.random.uniform(k1, (input_dim, hidden_dim), dtype, -lim1, lim1)
    b1 = jax.random.uniform(k2, (hidden_dim,), dtype, -lim1, lim1)
    lim2 = 1.0 / (hidden_dim ** 0.5)
    w2 = jax.random.uniform(k3, (hidden_dim, input_dim), dtype, -lim2, lim2)
    b2 = jax.random.uniform(k4, (input_dim,), dtype, -lim2, lim2)
    return gamma, beta, w1, b1, w2, b2


def _reference(x, gamma, beta, w1, b1, w2, b2):
    x32 = x.astype(jnp.float32)
    mean = jnp.mean(x32, axis=-1, keepdims=True)
    var = jnp.mean((x32 - mean) ** 2, axis=-1, keepdims=True)
    xn = (x32 - mean) / jnp.sqrt(var + LN_EPS) * gamma + beta
    h = xn @ w1.astype(jnp.float32) + b1
    h = h * jax.nn.sigmoid(h)
    return h @ w2.astype(jnp.float32) + b2


if __name__ == "__main__":
    # Lane-dense shapes (D, H multiples of 128); 512 rows total.
    B, T, D, H = 2, 256, 128, 256
    key = jax.random.PRNGKey(0)
    kx, kp = jax.random.split(key)
    x = jax.random.normal(kx, (B, T, D), jnp.float32)
    gamma, beta, w1, b1, w2, b2 = init_params(kp, D, H)
    # Pre-cast matmul weights to bf16 ONCE, outside the call path (perf feedback).
    w1b = w1.astype(jnp.bfloat16)
    w2b = w2.astype(jnp.bfloat16)
    ref = _reference(x, gamma, beta, w1, b1, w2, b2)

    # 1) Default fused path (weights resident, full H, >=2 row-grid steps).
    out = jax.block_until_ready(
        feed_forward_module(x, gamma, beta, w1b, b1, w2b, b2))
    assert out.shape == x.shape
    assert jnp.allclose(out, ref, atol=5e-2, rtol=5e-2), (
        f"mismatch vs reference, max err {jnp.max(jnp.abs(out - ref))}")

    # 2) Padded-remainder path (row count not a multiple of the tile).
    x2 = jax.random.normal(jax.random.PRNGKey(1), (2, 50, D), jnp.float32)
    out2 = jax.block_until_ready(
        feed_forward_module(x2, gamma, beta, w1b, b1, w2b, b2))
    ref2 = _reference(x2, gamma, beta, w1, b1, w2, b2)
    assert out2.shape == x2.shape
    assert jnp.allclose(out2, ref2, atol=5e-2, rtol=5e-2), "mismatch (padded path)"

    # 3) H-tiled accumulator path (the route large-H Conformer shapes take on v7x).
    out3 = jax.block_until_ready(
        feed_forward_module(x, gamma, beta, w1b, b1, w2b, b2, tile_h=128))
    assert jnp.allclose(out3, ref, atol=5e-2, rtol=5e-2), "mismatch (H-tiled path)"

    # 4) bf16 activation I/O fast path (halves x-in / y-out HBM traffic).
    xb = x.astype(jnp.bfloat16)
    out4 = jax.block_until_ready(
        feed_forward_module(xb, gamma, beta, w1b, b1, w2b, b2))
    assert out4.dtype == jnp.bfloat16
    assert jnp.allclose(out4.astype(jnp.float32), ref, atol=1e-1, rtol=1e-1), (
        "mismatch (bf16 I/O path)")

    print("KERNEL_OK")
</pallas_src>

<mosaic_0001>
module attributes {stable_mosaic.version = 11 : i64} {
  func.func @_ffn_kernel(%arg0: i32, %arg1: memref<256x128xf32, #tpu.memory_space<vmem>>, %arg2: memref<1x128xf32, #tpu.memory_space<vmem>>, %arg3: memref<1x128xf32, #tpu.memory_space<vmem>>, %arg4: memref<128x256xbf16, #tpu.memory_space<vmem>>, %arg5: memref<1x256xf32, #tpu.memory_space<vmem>>, %arg6: memref<256x128xbf16, #tpu.memory_space<vmem>>, %arg7: memref<1x128xf32, #tpu.memory_space<vmem>>, %arg8: memref<256x128xf32, #tpu.memory_space<vmem>>) attributes {dimension_semantics = [#tpu.dimension_semantics<parallel>], iteration_bounds = array<i64: 2>, scalar_prefetch = 0 : i64, scratch_operands = 0 : i64, tpu.core_type = #tpu.core_type<tc>, window_params = [{transform_indices = @transform_0, window_bounds = array<i64: 256, 128>}, {pipeline_mode = #tpu.pipeline_mode<synchronous>, transform_indices = @transform_1, window_bounds = array<i64: 1, 128>}, {pipeline_mode = #tpu.pipeline_mode<synchronous>, transform_indices = @transform_2, window_bounds = array<i64: 1, 128>}, {pipeline_mode = #tpu.pipeline_mode<synchronous>, transform_indices = @transform_3, window_bounds = array<i64: 128, 256>}, {pipeline_mode = #tpu.pipeline_mode<synchronous>, transform_indices = @transform_4, window_bounds = array<i64: 1, 256>}, {pipeline_mode = #tpu.pipeline_mode<synchronous>, transform_indices = @transform_5, window_bounds = array<i64: 256, 128>}, {pipeline_mode = #tpu.pipeline_mode<synchronous>, transform_indices = @transform_6, window_bounds = array<i64: 1, 128>}, {transform_indices = @transform_7, window_bounds = array<i64: 256, 128>}]} {
    %c0 = arith.constant 0 : index
    %c0_0 = arith.constant 0 : index
    %0 = vector.load %arg1[%c0, %c0_0] : memref<256x128xf32, #tpu.memory_space<vmem>>, vector<256x128xf32>
    %c0_1 = arith.constant 0 : index
    %c0_2 = arith.constant 0 : index
    %1 = vector.load %arg2[%c0_1, %c0_2] : memref<1x128xf32, #tpu.memory_space<vmem>>, vector<1x128xf32>
    %c0_3 = arith.constant 0 : index
    %c0_4 = arith.constant 0 : index
    %2 = vector.load %arg3[%c0_3, %c0_4] : memref<1x128xf32, #tpu.memory_space<vmem>>, vector<1x128xf32>
    %cst = arith.constant dense<0.000000e+00> : vector<256xf32>
    %3 = vector.multi_reduction <add>, %0, %cst [1] : vector<256x128xf32> to vector<256xf32>
    %4 = vector.shape_cast %3 : vector<256xf32> to vector<256x1xf32>
    %5 = arith.mulf %0, %0 : vector<256x128xf32>
    %cst_5 = arith.constant dense<0.000000e+00> : vector<256xf32>
    %6 = vector.multi_reduction <add>, %5, %cst_5 [1] : vector<256x128xf32> to vector<256xf32>
    %7 = vector.shape_cast %6 : vector<256xf32> to vector<256x1xf32>
    %cst_6 = arith.constant 7.812500e-03 : f32
    %8 = vector.broadcast %cst_6 : f32 to vector<256x1xf32>
    %9 = arith.mulf %4, %8 : vector<256x1xf32>
    %cst_7 = arith.constant 7.812500e-03 : f32
    %10 = vector.broadcast %cst_7 : f32 to vector<256x1xf32>
    %11 = arith.mulf %7, %10 : vector<256x1xf32>
    %12 = arith.mulf %9, %9 : vector<256x1xf32>
    %13 = arith.subf %11, %12 : vector<256x1xf32>
    %cst_8 = arith.constant 0.000000e+00 : f32
    %14 = vector.broadcast %cst_8 : f32 to vector<256x1xf32>
    %15 = arith.maximumf %13, %14 : vector<256x1xf32>
    %16 = vector.broadcast %9 : vector<256x1xf32> to vector<256x128xf32>
    %17 = arith.subf %0, %16 : vector<256x128xf32>
    %cst_9 = arith.constant 9.99999974E-6 : f32
    %18 = vector.broadcast %cst_9 : f32 to vector<256x1xf32>
    %19 = arith.addf %15, %18 : vector<256x1xf32>
    %20 = math.rsqrt %19 : vector<256x1xf32>
    %21 = vector.broadcast %20 : vector<256x1xf32> to vector<256x128xf32>
    %22 = arith.mulf %17, %21 : vector<256x128xf32>
    %23 = vector.broadcast %1 : vector<1x128xf32> to vector<256x128xf32>
    %24 = arith.mulf %22, %23 : vector<256x128xf32>
    %25 = vector.broadcast %2 : vector<1x128xf32> to vector<256x128xf32>
    %26 = arith.addf %24, %25 : vector<256x128xf32>
    %27 = arith.truncf %26 : vector<256x128xf32> to vector<256x128xbf16>
    %c0_10 = arith.constant 0 : index
    %c0_11 = arith.constant 0 : index
    %28 = vector.load %arg4[%c0_10, %c0_11] : memref<128x256xbf16, #tpu.memory_space<vmem>>, vector<128x256xbf16>
    %cst_12 = arith.constant dense<0.000000e+00> : vector<256x256xf32>
    %29 = tpu.matmul %27, %28, %cst_12 {dimension_numbers = #tpu.dot_dimension_numbers<[1], [0], [0], [1], [0, 0, 1, 1], [], []>} : vector<256x128xbf16>, vector<128x256xbf16>, vector<256x256xf32> -> vector<256x256xf32>
    %c0_13 = arith.constant 0 : index
    %c0_14 = arith.constant 0 : index
    %30 = vector.load %arg5[%c0_13, %c0_14] : memref<1x256xf32, #tpu.memory_space<vmem>>, vector<1x256xf32>
    %31 = vector.broadcast %30 : vector<1x256xf32> to vector<256x256xf32>
    %32 = arith.addf %29, %31 : vector<256x256xf32>
    %33 = arith.negf %32 : vector<256x256xf32>
    %34 = math.exp %33 : vector<256x256xf32>
    %cst_15 = arith.constant 1.000000e+00 : f32
    %35 = vector.broadcast %cst_15 : f32 to vector<256x256xf32>
    %36 = arith.addf %35, %34 : vector<256x256xf32>
    %37 = arith.divf %35, %36 : vector<256x256xf32>
    %38 = arith.mulf %32, %37 : vector<256x256xf32>
    %39 = arith.truncf %38 : vector<256x256xf32> to vector<256x256xbf16>
    %c0_16 = arith.constant 0 : index
    %c0_17 = arith.constant 0 : index
    %40 = vector.load %arg6[%c0_16, %c0_17] : memref<256x128xbf16, #tpu.memory_space<vmem>>, vector<256x128xbf16>
    %cst_18 = arith.constant dense<0.000000e+00> : vector<256x128xf32>
    %41 = tpu.matmul %39, %40, %cst_18 {dimension_numbers = #tpu.dot_dimension_numbers<[1], [0], [0], [1], [0, 0, 1, 1], [], []>} : vector<256x256xbf16>, vector<256x128xbf16>, vector<256x128xf32> -> vector<256x128xf32>
    %c0_19 = arith.constant 0 : index
    %c0_20 = arith.constant 0 : index
    %42 = vector.load %arg7[%c0_19, %c0_20] : memref<1x128xf32, #tpu.memory_space<vmem>>, vector<1x128xf32>
    %43 = vector.broadcast %42 : vector<1x128xf32> to vector<256x128xf32>
    %44 = arith.addf %41, %43 : vector<256x128xf32>
    %c0_21 = arith.constant 0 : index
    %c0_22 = arith.constant 0 : index
    %45 = vector.load %arg8[%c0_21, %c0_22] : memref<256x128xf32, #tpu.memory_space<vmem>>, vector<256x128xf32>
    tpu.vector_store %arg8[%c0_21, %c0_22], %44 {strides = array<i32>} : memref<256x128xf32, #tpu.memory_space<vmem>>, vector<256x128xf32>,
    return
  }
  func.func @transform_0(%arg0: i32) -> (i32, i32) {
    %c0_i32 = arith.constant 0 : i32
    %c0_i32_0 = arith.constant 0 : i32
    return %arg0, %c0_i32 : i32, i32
  }
  func.func @transform_1(%arg0: i32) -> (i32, i32) {
    %c0_i32 = arith.constant 0 : i32
    %c0_i32_0 = arith.constant 0 : i32
    %c0_i32_1 = arith.constant 0 : i32
    return %c0_i32, %c0_i32_0 : i32, i32
  }
  func.func @transform_2(%arg0: i32) -> (i32, i32) {
    %c0_i32 = arith.constant 0 : i32
    %c0_i32_0 = arith.constant 0 : i32
    %c0_i32_1 = arith.constant 0 : i32
    return %c0_i32, %c0_i32_0 : i32, i32
  }
  func.func @transform_3(%arg0: i32) -> (i32, i32) {
    %c0_i32 = arith.constant 0 : i32
    %c0_i32_0 = arith.constant 0 : i32
    %c0_i32_1 = arith.constant 0 : i32
    return %c0_i32, %c0_i32_0 : i32, i32
  }
  func.func @transform_4(%arg0: i32) -> (i32, i32) {
    %c0_i32 = arith.constant 0 : i32
    %c0_i32_0 = arith.constant 0 : i32
    %c0_i32_1 = arith.constant 0 : i32
    return %c0_i32, %c0_i32_0 : i32, i32
  }
  func.func @transform_5(%arg0: i32) -> (i32, i32) {
    %c0_i32 = arith.constant 0 : i32
    %c0_i32_0 = arith.constant 0 : i32
    %c0_i32_1 = arith.constant 0 : i32
    return %c0_i32, %c0_i32_0 : i32, i32
  }
  func.func @transform_6(%arg0: i32) -> (i32, i32) {
    %c0_i32 = arith.constant 0 : i32
    %c0_i32_0 = arith.constant 0 : i32
    %c0_i32_1 = arith.constant 0 : i32
    return %c0_i32, %c0_i32_0 : i32, i32
  }
  func.func @transform_7(%arg0: i32) -> (i32, i32) {
    %c0_i32 = arith.constant 0 : i32
    %c0_i32_0 = arith.constant 0 : i32
    return %arg0, %c0_i32 : i32, i32
  }
}

</mosaic_0001>

<llo_original>
// kernel: tpu_custom_call.1
$region0: #{tpu_custom_call.1}
  #allocation0 [shape = 'u32[]', space=smem, size = 0x4, offset = 0x4, fixed_abs, tag = 'smem constant byte address 0x4 - core index']
  #allocation1 [shape = 'u32[72,128]{1,0:T(1,128)}', space=vmem, size = 0x9000, scoped, tag = 'internal scratch']
  %s0 = inlined_call_operand.hbm [shape: f32[512,128], index: 0, kind: input, shape index: {}]
  %s1 = inlined_call_operand.hbm [shape: f32[1,128], index: 1, kind: input, shape index: {}]
  %s2 = inlined_call_operand.vmem [shape: f32[1,128], index: 2, kind: input, shape index: {}]
  %s3 = inlined_call_operand.hbm [shape: bf16[128,256], index: 3, kind: input, shape index: {}]
  %s4 = inlined_call_operand.vmem [shape: f32[1,256], index: 4, kind: input, shape index: {}]
  %s5 = inlined_call_operand.hbm [shape: bf16[256,128], index: 5, kind: input, shape index: {}]
  %s6 = inlined_call_operand.vmem [shape: f32[1,128], index: 6, kind: input, shape index: {}]
  %s7 = inlined_call_operand.hbm [shape: f32[512,128], index: 7, kind: output, shape index: {}]
  %s8 = sld [smem:[#allocation0]]
  $region77: #{tpu_custom_call.1} parent=0
    _
  %s10 = ssub.s32 1, %s8
  %s11 = scalar_select 0, %s10, %s8
  $region1: #{tpu_custom_call.1} parent=0
    #allocation2 [shape = 'u8[262144]{0}', space=vmem, size = 0x40000, scoped, tag = 'input window, operand 0']
    #allocation3 [shape = 's32[2]{0}', space=sflag, size = 0x8, scoped, tag = 'scoped memory for tpu_custom_call.1']
    #allocation4 [shape = 's32[2]{0}', space=sflag, size = 0x8, scoped, tag = 'scoped memory for tpu_custom_call.1']
    #allocation5 [shape = 'u8[512]{0}', space=vmem, size = 0x400, scoped, tag = 'input window, operand 1, single buffered']
    #allocation6 [shape = 's32[1]{0}', space=sflag, size = 0x4, scoped, tag = 'scoped memory for tpu_custom_call.1']
    #allocation7 [shape = 'u8[65536]{0}', space=vmem, size = 0x10000, scoped, tag = 'input window, operand 3, single buffered']
    #allocation8 [shape = 'u8[65536]{0}', space=vmem, size = 0x10000, scoped, tag = 'input window, operand 5, single buffered']
    #allocation9 [shape = 's32[1]{0}', space=sflag, size = 0x4, scoped, tag = 'scoped memory for tpu_custom_call.1']
    #allocation10 [shape = 'u8[262144]{0}', space=vmem, size = 0x40000, scoped, tag = 'output window, operand 0']
    %12 = vsyncpa [#allocation3], 0
    %s13 = scalar_lea.sflag [#allocation3], 1
    %14 = vsyncpa %s13, 0
    %15 = vsyncpa [#allocation6], 0
    %16 = vsyncpa [#allocation9], 0
    %17 = vsyncpa [#allocation4], 0
    %s18 = scalar_lea.sflag [#allocation4], 1
    %19 = vsyncpa %s18, 0
    loop: start=0, step=1, limit=4
    $region2: #{tpu_custom_call.1} parent=1 // loop_pre_header
      _
    $region3: #{tpu_custom_call.1} parent=1 // loop_header
      %s21 = sphi 0, %s25
      %p22 = scmp.ge.s32.totalorder %s21, 4
      %s31 = sphi 0, %s33
      %s34 = sphi 0, %s31
      %s35 = sphi 0, %s34
      %s51 = sphi 0, %s35
      %s55 = sphi 0, %s55
      %s57 = sphi 0, %s55
      %s58 = sphi 0, %s57
      %s72 = sphi 0, %s58
      %s76 = sphi 0, %s76
      %s78 = sphi 0, %s76
      %s79 = sphi 0, %s78
      %s93 = sphi 0, %s79
      %s97 = sphi 0, %s97
      %s99 = sphi 0, %s97
      %s100 = sphi 0, %s99
      %s114 = sphi 0, %s100
      %s118 = sphi 0, %s118
      %s120 = sphi 0, %s118
      %s121 = sphi 0, %s120
      %s135 = sphi 0, %s121
      %s139 = sphi 0, %s139
      %s141 = sphi 0, %s139
      %s142 = sphi 0, %s141
      %s156 = sphi 0, %s142
      %s160 = sphi 0, %s160
      %s162 = sphi 0, %s160
      %s163 = sphi 0, %s162
      %s177 = sphi 0, %s163
      %s183 = sphi 0, %s185
      %s186 = sphi 0, %s183
      %s187 = sphi 0, %s186
      %s203 = sphi 0, %s187
    $region4: #{tpu_custom_call.1} parent=1 // loop_header_branch
      %24 = sbr.rel (%p22) target = $region8
    $region5: #{tpu_custom_call.1} parent=1 // loop_body
      %s26 = ssub.s32 %s21, 1
      %s27 = ssub.s32 %s21, 2
      %s28 = sadd.s32 %s21, 1
      %s29 = ssub.s32 %s21, %s28
      %p30 = scmp.eq.s32.totalorder %s29, 0
      %s32 = sadd.s32 %s31, 1
      %s33 = scalar_select %p30, %s31, %s32
      %p36 = pneg %p30
      %p37 = scmp.eq.s32.totalorder %s21, 1
      %p38 = por %p36, %p37
      %p39 = scmp.ne.s32.totalorder %s31, %s34
      %p40 = scmp.eq.s32.totalorder %s21, 0
      %p41 = por %p39, %p40
      %p42 = scmp.ne.s32.totalorder %s31, %s34
      %p43 = scmp.eq.s32.totalorder %s26, 1
      %p44 = por %p42, %p43
      %p45 = scmp.ne.s32.totalorder %s34, %s35
      %p46 = scmp.eq.s32.totalorder %s26, 0
      %p47 = por %p45, %p46
      %p48 = scmp.ne.s32.totalorder %s34, %s35
      %p49 = scmp.eq.s32.totalorder %s27, 1
      %p50 = por %p48, %p49
      %p52 = scmp.ne.s32.totalorder %s35, %s51
      %p53 = scmp.eq.s32.totalorder %s27, 0
      %p54 = por %p52, %p53
      %s56 = sadd.s32 %s55, 1
      %p59 = scmp.eq.s32.totalorder %s21, 1
      %p60 = scmp.ne.s32.totalorder %s55, %s57
      %p61 = scmp.eq.s32.totalorder %s21, 0
      %p62 = por %p60, %p61
      %p63 = scmp.ne.s32.totalorder %s55, %s57
      %p64 = scmp.eq.s32.totalorder %s26, 1
      %p65 = por %p63, %p64
      %p66 = scmp.ne.s32.totalorder %s57, %s58
      %p67 = scmp.eq.s32.totalorder %s26, 0
      %p68 = por %p66, %p67
      %p69 = scmp.ne.s32.totalorder %s57, %s58
      %p70 = scmp.eq.s32.totalorder %s27, 1
      %p71 = por %p69, %p70
      %p73 = scmp.ne.s32.totalorder %s58, %s72
      %p74 = scmp.eq.s32.totalorder %s27, 0
      %p75 = por %p73, %p74
      %s77 = sadd.s32 %s76, 1
      %p80 = scmp.eq.s32.totalorder %s21, 1
      %p81 = scmp.ne.s32.totalorder %s76, %s78
      %p82 = scmp.eq.s32.totalorder %s21, 0
      %p83 = por %p81, %p82
      %p84 = scmp.ne.s32.totalorder %s76, %s78
      %p85 = scmp.eq.s32.totalorder %s26, 1
      %p86 = por %p84, %p85
      %p87 = scmp.ne.s32.totalorder %s78, %s79
      %p88 = scmp.eq.s32.totalorder %s26, 0
      %p89 = por %p87, %p88
      %p90 = scmp.ne.s32.totalorder %s78, %s79
      %p91 = scmp.eq.s32.totalorder %s27, 1
      %p92 = por %p90, %p91
      %p94 = scmp.ne.s32.totalorder %s79, %s93
      %p95 = scmp.eq.s32.totalorder %s27, 0
      %p96 = por %p94, %p95
      %s98 = sadd.s32 %s97, 1
      %p101 = scmp.eq.s32.totalorder %s21, 1
      %p102 = scmp.ne.s32.totalorder %s97, %s99
      %p103 = scmp.eq.s32.totalorder %s21, 0
      %p104 = por %p102, %p103
      %p105 = scmp.ne.s32.totalorder %s97, %s99
      %p106 = scmp.eq.s32.totalorder %s26, 1
      %p107 = por %p105, %p106
      %p108 = scmp.ne.s32.totalorder %s99, %s100
      %p109 = scmp.eq.s32.totalorder %s26, 0
      %p110 = por %p108, %p109
      %p111 = scmp.ne.s32.totalorder %s99, %s100
      %p112 = scmp.eq.s32.totalorder %s27, 1
      %p113 = por %p111, %p112
      %p115 = scmp.ne.s32.totalorder %s100, %s114
      %p116 = scmp.eq.s32.totalorder %s27, 0
      %p117 = por %p115, %p116
      %s119 = sadd.s32 %s118, 1
      %p122 = scmp.eq.s32.totalorder %s21, 1
      %p123 = scmp.ne.s32.totalorder %s118, %s120
      %p124 = scmp.eq.s32.totalorder %s21, 0
      %p125 = por %p123, %p124
      %p126 = scmp.ne.s32.totalorder %s118, %s120
      %p127 = scmp.eq.s32.totalorder %s26, 1
      %p128 = por %p126, %p127
      %p129 = scmp.ne.s32.totalorder %s120, %s121
      %p130 = scmp.eq.s32.totalorder %s26, 0
      %p131 = por %p129, %p130
      %p132 = scmp.ne.s32.totalorder %s120, %s121
      %p133 = scmp.eq.s32.totalorder %s27, 1
      %p134 = por %p132, %p133
      %p136 = scmp.ne.s32.totalorder %s121, %s135
      %p137 = scmp.eq.s32.totalorder %s27, 0
      %p138 = por %p136, %p137
      %s140 = sadd.s32 %s139, 1
      %p143 = scmp.eq.s32.totalorder %s21, 1
      %p144 = scmp.ne.s32.totalorder %s139, %s141
      %p145 = scmp.eq.s32.totalorder %s21, 0
      %p146 = por %p144, %p145
      %p147 = scmp.ne.s32.totalorder %s139, %s141
      %p148 = scmp.eq.s32.totalorder %s26, 1
      %p149 = por %p147, %p148
      %p150 = scmp.ne.s32.totalorder %s141, %s142
      %p151 = scmp.eq.s32.totalorder %s26, 0
      %p152 = por %p150, %p151
      %p153 = scmp.ne.s32.totalorder %s141, %s142
      %p154 = scmp.eq.s32.totalorder %s27, 1
      %p155 = por %p153, %p154
      %p157 = scmp.ne.s32.totalorder %s142, %s156
      %p158 = scmp.eq.s32.totalorder %s27, 0
      %p159 = por %p157, %p158
      %s161 = sadd.s32 %s160, 1
      %p164 = scmp.eq.s32.totalorder %s21, 1
      %p165 = scmp.ne.s32.totalorder %s160, %s162
      %p166 = scmp.eq.s32.totalorder %s21, 0
      %p167 = por %p165, %p166
      %p168 = scmp.ne.s32.totalorder %s160, %s162
      %p169 = scmp.eq.s32.totalorder %s26, 1
      %p170 = por %p168, %p169
      %p171 = scmp.ne.s32.totalorder %s162, %s163
      %p172 = scmp.eq.s32.totalorder %s26, 0
      %p173 = por %p171, %p172
      %p174 = scmp.ne.s32.totalorder %s162, %s163
      %p175 = scmp.eq.s32.totalorder %s27, 1
      %p176 = por %p174, %p175
      %p178 = scmp.ne.s32.totalorder %s163, %s177
      %p179 = scmp.eq.s32.totalorder %s27, 0
      %p180 = por %p178, %p179
      %s181 = ssub.s32 %s21, %s28
      %p182 = scmp.eq.s32.totalorder %s181, 0
      %s184 = sadd.s32 %s183, 1
      %s185 = scalar_select %p182, %s183, %s184
      %p188 = pneg %p182
      %p189 = scmp.eq.s32.totalorder %s21, 1
      %p190 = por %p188, %p189
      %p191 = scmp.ne.s32.totalorder %s183, %s186
      %p192 = scmp.eq.s32.totalorder %s21, 0
      %p193 = por %p191, %p192
      %p194 = scmp.ne.s32.totalorder %s183, %s186
      %p195 = scmp.eq.s32.totalorder %s26, 1
      %p196 = por %p194, %p195
      %p197 = scmp.ne.s32.totalorder %s186, %s187
      %p198 = scmp.eq.s32.totalorder %s26, 0
      %p199 = por %p197, %p198
      %p200 = scmp.ne.s32.totalorder %s186, %s187
      %p201 = scmp.eq.s32.totalorder %s27, 1
      %p202 = por %p200, %p201
      %p204 = scmp.ne.s32.totalorder %s187, %s203
      %p205 = scmp.eq.s32.totalorder %s27, 0
      %p206 = por %p204, %p205
      %p207 = scmp.le.s32.totalorder 1, %s21
      %p208 = scmp.lt.s32.totalorder %s21, 3
      %p209 = pnand %p207, %p208
      %p210 = pneg %p209
      // Predicated region
      $region9: #{tpu_custom_call.1} parent=5 // pred_check
        _
      $region10: #{tpu_custom_call.1} parent=5 // pred_check_branch
        %212 = sbr.rel (%p209) target = $region12
      $region11: #{tpu_custom_call.1} parent=5 // pred_region
        %s213 = ssub.s32 %s21, 1
        // Predicated region
        $region13: #{tpu_custom_call.1} parent=11 // pred_check
          %p214 = pneg %p68
        $region14: #{tpu_custom_call.1} parent=11 // pred_check_branch
          %216 = sbr.rel (%p214) target = $region16
        $region15: #{tpu_custom_call.1} parent=11 // pred_region
          %218 = vsyncadd [#allocation6], 0
          %s220 = sshll.u32 %s1, 4
          %s221 = int_to_ptr.hbm [resolvable:$true] %s220
          %s222 = sshll.u32 [#allocation5], 4
          %s223 = int_to_ptr.vmem [resolvable:$true] %s222
          %225 = dma.hbm_to_vmem [thread:$0]  %s221, 16, %s223, [#allocation6]
        $region16: #{tpu_custom_call.1} parent=11 // pred_fallthru
          _
        // Predicated region
        $region17: #{tpu_custom_call.1} parent=11 // pred_check
          %p226 = pneg %p89
        $region18: #{tpu_custom_call.1} parent=11 // pred_check_branch
          %228 = sbr.rel (%p226) target = $region20
        $region19: #{tpu_custom_call.1} parent=11 // pred_region
          _
        $region20: #{tpu_custom_call.1} parent=11 // pred_fallthru
          _
        // Predicated region
        $region21: #{tpu_custom_call.1} parent=11 // pred_check
          %p229 = pneg %p110
        $region22: #{tpu_custom_call.1} parent=11 // pred_check_branch
          %231 = sbr.rel (%p229) target = $region24
        $region23: #{tpu_custom_call.1} parent=11 // pred_region
          %233 = vsyncadd [#allocation6], 0
          %s234 = sshll.u32 %s3, 4
          %s235 = int_to_ptr.hbm [resolvable:$true] %s234
          %s236 = sshll.u32 [#allocation7], 4
          %s237 = int_to_ptr.vmem [resolvable:$true] %s236
          %242 = dma.hbm_to_vmem [thread:$0]  %s235, 2048, %s237, [#allocation6], 128, 128, 8
        $region24: #{tpu_custom_call.1} parent=11 // pred_fallthru
          _
        // Predicated region
        $region25: #{tpu_custom_call.1} parent=11 // pred_check
          %p243 = pneg %p131
        $region26: #{tpu_custom_call.1} parent=11 // pred_check_branch
          %245 = sbr.rel (%p243) target = $region28
        $region27: #{tpu_custom_call.1} parent=11 // pred_region
          _
        $region28: #{tpu_custom_call.1} parent=11 // pred_fallthru
          _
        // Predicated region
        $region29: #{tpu_custom_call.1} parent=11 // pred_check
          %p246 = pneg %p152
        $region30: #{tpu_custom_call.1} parent=11 // pred_check_branch
          %248 = sbr.rel (%p246) target = $region32
        $region31: #{tpu_custom_call.1} parent=11 // pred_region
          %250 = vsyncadd [#allocation9], 0
          %s251 = sshll.u32 %s5, 4
          %s252 = int_to_ptr.hbm [resolvable:$true] %s251
          %s253 = sshll.u32 [#allocation8], 4
          %s254 = int_to_ptr.vmem [resolvable:$true] %s253
          %259 = dma.hbm_to_vmem [thread:$0]  %s252, 2048, %s254, [#allocation9], 64, 64, 4
        $region32: #{tpu_custom_call.1} parent=11 // pred_fallthru
          _
        // Predicated region
        $region33: #{tpu_custom_call.1} parent=11 // pred_check
          %p260 = pneg %p173
        $region34: #{tpu_custom_call.1} parent=11 // pred_check_branch
          %262 = sbr.rel (%p260) target = $region36
        $region35: #{tpu_custom_call.1} parent=11 // pred_region
          _
        $region36: #{tpu_custom_call.1} parent=11 // pred_fallthru
          _
      $region12: #{tpu_custom_call.1} parent=5 // pred_fallthru
        _
      %p263 = scmp.lt.s32.totalorder %s21, 2
      // Predicated region
      $region37: #{tpu_custom_call.1} parent=5 // pred_check
        %p264 = pneg %p263
      $region38: #{tpu_custom_call.1} parent=5 // pred_check_branch
        %266 = sbr.rel (%p264) target = $region40
      $region39: #{tpu_custom_call.1} parent=5 // pred_region
        // Predicated region
        $region41: #{tpu_custom_call.1} parent=39 // pred_check
          %p267 = pneg %p41
        $region42: #{tpu_custom_call.1} parent=39 // pred_check_branch
          %269 = sbr.rel (%p267) target = $region44
        $region43: #{tpu_custom_call.1} parent=39 // pred_region
          %s270 = sand.u32 %s31, 1
          %s271 = scalar_lea.sflag [#allocation3], %s270
          %s272 = sand.u32 %s31, 1
          %s273 = smul.addr %s272, 256
          %s274 = scalar_lea.vmem [#allocation2], %s273
          %s275 = smul.u32 32, %s21
          %277 = vsyncadd %s271, 0
          %s278 = smul.addr %s275, 8
          %s279 = scalar_lea.hbm %s0, %s278
          %s280 = sshll.u32 %s279, 4
          %s281 = int_to_ptr.hbm [resolvable:$true] %s280
          %s282 = sshll.u32 %s274, 4
          %s283 = int_to_ptr.vmem [resolvable:$true] %s282
          %288 = dma.hbm_to_vmem [thread:$0]  %s281, 4096, %s283, %s271, 128, 128, 8
        $region44: #{tpu_custom_call.1} parent=39 // pred_fallthru
          _
      $region40: #{tpu_custom_call.1} parent=5 // pred_fallthru
        _
      %p289 = scmp.le.s32.totalorder 1, %s21
      %p290 = scmp.lt.s32.totalorder %s21, 3
      %p291 = pnand %p289, %p290
      %p292 = pneg %p291
      // Predicated region
      $region45: #{tpu_custom_call.1} parent=5 // pred_check
        _
      $region46: #{tpu_custom_call.1} parent=5 // pred_check_branch
        %294 = sbr.rel (%p291) target = $region48
      $region47: #{tpu_custom_call.1} parent=5 // pred_region
        %s295 = ssub.s32 %s21, 1
        %s296 = sand.u32 %s34, 1
        %s297 = scalar_lea.sflag [#allocation3], %s296
        %s298 = sand.u32 %s34, 1
        %s299 = smul.addr %s298, 256
        %s300 = scalar_lea.vmem [#allocation2], %s299
        // Predicated region
        $region49: #{tpu_custom_call.1} parent=47 // pred_check
          %p301 = pneg %p47
        $region50: #{tpu_custom_call.1} parent=47 // pred_check_branch
          %303 = sbr.rel (%p301) target = $region52
        $region51: #{tpu_custom_call.1} parent=47 // pred_region
          %305 = dma.done %s297, 4096
        $region52: #{tpu_custom_call.1} parent=47 // pred_fallthru
          _
        // Predicated region
        $region53: #{tpu_custom_call.1} parent=47 // pred_check
          %p306 = pneg %p68
        $region54: #{tpu_custom_call.1} parent=47 // pred_check_branch
          %308 = sbr.rel (%p306) target = $region56
        $region55: #{tpu_custom_call.1} parent=47 // pred_region
          %310 = dma.done [#allocation6], 16
        $region56: #{tpu_custom_call.1} parent=47 // pred_fallthru
          _
        // Predicated region
        $region57: #{tpu_custom_call.1} parent=47 // pred_check
          %p311 = pneg %p110
        $region58: #{tpu_custom_call.1} parent=47 // pred_check_branch
          %313 = sbr.rel (%p311) target = $region60
        $region59: #{tpu_custom_call.1} parent=47 // pred_region
          %315 = dma.done [#allocation6], 2048
        $region60: #{tpu_custom_call.1} parent=47 // pred_fallthru
          _
        // Predicated region
        $region61: #{tpu_custom_call.1} parent=47 // pred_check
          %p316 = pneg %p152
        $region62: #{tpu_custom_call.1} parent=47 // pred_check_branch
          %318 = sbr.rel (%p316) target = $region64
        $region63: #{tpu_custom_call.1} parent=47 // pred_region
          %320 = dma.done [#allocation9], 2048
        $region64: #{tpu_custom_call.1} parent=47 // pred_fallthru
          _
        %s321 = sand.u32 %s34, 1
        %s322 = scalar_lea.sflag [#allocation3], %s321
        %s323 = sand.u32 %s34, 1
        %s324 = smul.addr %s323, 256
        %s325 = scalar_lea.vmem [#allocation2], %s324
        %p326 = pneg %p47
        %p327 = pneg %p44
        %p328 = pneg %p68
        %p329 = pneg %p65
        %p330 = pneg %p89
        %p331 = pneg %p86
        %p332 = pneg %p110
        %p333 = pneg %p107
        %p334 = pneg %p131
        %p335 = pneg %p128
        %p336 = pneg %p152
        %p337 = pneg %p149
        %p338 = pneg %p173
        %p339 = pneg %p170
        %p340 = pneg %p199
        %p341 = pneg %p196
        %s342 = sand.u32 %s186, 1
        %s343 = scalar_lea.sflag [#allocation4], %s342
        %s344 = sand.u32 %s186, 1
        %s345 = smul.addr %s344, 256
        %s346 = scalar_lea.vmem [#allocation10], %s345
        %s347 = smul.u32 32, %s26
        %s348 = smul.u32 32, %s26
        %v349 = vld [vmem:[%s300] sm:$0xff]
        %v350 = vld [vmem:[%s300 + $0x8] sm:$0xff]
        %v351 = vld [vmem:[%s300 + $0x10] sm:$0xff]
        %v352 = vld [vmem:[%s300 + $0x18] sm:$0xff]
        %v353 = vld [vmem:[%s300 + $0x20] sm:$0xff]
        %v354 = vld [vmem:[%s300 + $0x28] sm:$0xff]
        %v355 = vld [vmem:[%s300 + $0x30] sm:$0xff]
        %v356 = vld [vmem:[%s300 + $0x38] sm:$0xff]
        %v357 = vld [vmem:[%s300 + $0x40] sm:$0xff]
        %v358 = vld [vmem:[%s300 + $0x48] sm:$0xff]
        %v359 = vld [vmem:[%s300 + $0x50] sm:$0xff]
        %v360 = vld [vmem:[%s300 + $0x58] sm:$0xff]
        %v361 = vld [vmem:[%s300 + $0x60] sm:$0xff]
        %v362 = vld [vmem:[%s300 + $0x68] sm:$0xff]
        %v363 = vld [vmem:[%s300 + $0x70] sm:$0xff]
        %v364 = vld [vmem:[%s300 + $0x78] sm:$0xff]
        %v365 = vld [vmem:[%s300 + $0x80] sm:$0xff]
        %v366 = vld [vmem:[%s300 + $0x88] sm:$0xff]
        %v367 = vld [vmem:[%s300 + $0x90] sm:$0xff]
        %v368 = vld [vmem:[%s300 + $0x98] sm:$0xff]
        %v369 = vld [vmem:[%s300 + $0xa0] sm:$0xff]
        %v370 = vld [vmem:[%s300 + $0xa8] sm:$0xff]
        %v371 = vld [vmem:[%s300 + $0xb0] sm:$0xff]
        %v372 = vld [vmem:[%s300 + $0xb8] sm:$0xff]
        %v373 = vld [vmem:[%s300 + $0xc0] sm:$0xff]
        %v374 = vld [vmem:[%s300 + $0xc8] sm:$0xff]
        %v375 = vld [vmem:[%s300 + $0xd0] sm:$0xff]
        %v376 = vld [vmem:[%s300 + $0xd8] sm:$0xff]
        %v377 = vld [vmem:[%s300 + $0xe0] sm:$0xff]
        %v378 = vld [vmem:[%s300 + $0xe8] sm:$0xff]
        %v379 = vld [vmem:[%s300 + $0xf0] sm:$0xff]
        %v380 = vld [vmem:[%s300 + $0xf8] sm:$0xff]
        %v381 = vld [vmem:[#allocation5] sm:$0x1]
        %v382 = vld [vmem:[%s2] sm:$0x1]
        %383 = vadd.xlane.f32.xlu0 %v349
        %v384 = vpop.xlane.xlu0 %383
        %385 = vadd.xlane.f32.xlu0 %v350
        %v386 = vpop.xlane.xlu0 %385
        %387 = vadd.xlane.f32.xlu0 %v351
        %v388 = vpop.xlane.xlu0 %387
        %389 = vadd.xlane.f32.xlu0 %v352
        %v390 = vpop.xlane.xlu0 %389
        %391 = vadd.xlane.f32.xlu0 %v353
        %v392 = vpop.xlane.xlu0 %391
        %393 = vadd.xlane.f32.xlu0 %v354
        %v394 = vpop.xlane.xlu0 %393
        %395 = vadd.xlane.f32.xlu0 %v355
        %v396 = vpop.xlane.xlu0 %395
        %397 = vadd.xlane.f32.xlu0 %v356
        %v398 = vpop.xlane.xlu0 %397
        %399 = vadd.xlane.f32.xlu0 %v357
        %v400 = vpop.xlane.xlu0 %399
        %401 = vadd.xlane.f32.xlu0 %v358
        %v402 = vpop.xlane.xlu0 %401
        %403 = vadd.xlane.f32.xlu0 %v359
        %v404 = vpop.xlane.xlu0 %403
        %405 = vadd.xlane.f32.xlu0 %v360
        %v406 = vpop.xlane.xlu0 %405
        %407 = vadd.xlane.f32.xlu0 %v361
        %v408 = vpop.xlane.xlu0 %407
        %409 = vadd.xlane.f32.xlu0 %v362
        %v410 = vpop.xlane.xlu0 %409
        %411 = vadd.xlane.f32.xlu0 %v363
        %v412 = vpop.xlane.xlu0 %411
        %413 = vadd.xlane.f32.xlu0 %v364
        %v414 = vpop.xlane.xlu0 %413
        %415 = vadd.xlane.f32.xlu0 %v365
        %v416 = vpop.xlane.xlu0 %415
        %417 = vadd.xlane.f32.xlu0 %v366
        %v418 = vpop.xlane.xlu0 %417
        %419 = vadd.xlane.f32.xlu0 %v367
        %v420 = vpop.xlane.xlu0 %419
        %421 = vadd.xlane.f32.xlu0 %v368
        %v422 = vpop.xlane.xlu0 %421
        %423 = vadd.xlane.f32.xlu0 %v369
        %v424 = vpop.xlane.xlu0 %423
        %425 = vadd.xlane.f32.xlu0 %v370
        %v426 = vpop.xlane.xlu0 %425
        %427 = vadd.xlane.f32.xlu0 %v371
        %v428 = vpop.xlane.xlu0 %427
        %429 = vadd.xlane.f32.xlu0 %v372
        %v430 = vpop.xlane.xlu0 %429
        %431 = vadd.xlane.f32.xlu0 %v373
        %v432 = vpop.xlane.xlu0 %431
        %433 = vadd.xlane.f32.xlu0 %v374
        %v434 = vpop.xlane.xlu0 %433
        %435 = vadd.xlane.f32.xlu0 %v375
        %v436 = vpop.xlane.xlu0 %435
        %437 = vadd.xlane.f32.xlu0 %v376
        %v438 = vpop.xlane.xlu0 %437
        %439 = vadd.xlane.f32.xlu0 %v377
        %v440 = vpop.xlane.xlu0 %439
        %441 = vadd.xlane.f32.xlu0 %v378
        %v442 = vpop.xlane.xlu0 %441
        %443 = vadd.xlane.f32.xlu0 %v379
        %v444 = vpop.xlane.xlu0 %443
        %445 = vadd.xlane.f32.xlu0 %v380
        %v446 = vpop.xlane.xlu0 %445
        %v447 = vmul.f32 %v349, %v349
        %v448 = vmul.f32 %v350, %v350
        %v449 = vmul.f32 %v351, %v351
        %v450 = vmul.f32 %v352, %v352
        %v451 = vmul.f32 %v353, %v353
        %v452 = vmul.f32 %v354, %v354
        %v453 = vmul.f32 %v355, %v355
        %v454 = vmul.f32 %v356, %v356
        %v455 = vmul.f32 %v357, %v357
        %v456 = vmul.f32 %v358, %v358
        %v457 = vmul.f32 %v359, %v359
        %v458 = vmul.f32 %v360, %v360
        %v459 = vmul.f32 %v361, %v361
        %v460 = vmul.f32 %v362, %v362
        %v461 = vmul.f32 %v363, %v363
        %v462 = vmul.f32 %v364, %v364
        %v463 = vmul.f32 %v365, %v365
        %v464 = vmul.f32 %v366, %v366
        %v465 = vmul.f32 %v367, %v367
        %v466 = vmul.f32 %v368, %v368
        %v467 = vmul.f32 %v369, %v369
        %v468 = vmul.f32 %v370, %v370
        %v469 = vmul.f32 %v371, %v371
        %v470 = vmul.f32 %v372, %v372
        %v471 = vmul.f32 %v373, %v373
        %v472 = vmul.f32 %v374, %v374
        %v473 = vmul.f32 %v375, %v375
        %v474 = vmul.f32 %v376, %v376
        %v475 = vmul.f32 %v377, %v377
        %v476 = vmul.f32 %v378, %v378
        %v477 = vmul.f32 %v379, %v379
        %v478 = vmul.f32 %v380, %v380
        %479 = vadd.xlane.f32.xlu0 %v447
        %v480 = vpop.xlane.xlu0 %479
        %481 = vadd.xlane.f32.xlu0 %v448
        %v482 = vpop.xlane.xlu0 %481
        %483 = vadd.xlane.f32.xlu0 %v449
        %v484 = vpop.xlane.xlu0 %483
        %485 = vadd.xlane.f32.xlu0 %v450
        %v486 = vpop.xlane.xlu0 %485
        %487 = vadd.xlane.f32.xlu0 %v451
        %v488 = vpop.xlane.xlu0 %487
        %489 = vadd.xlane.f32.xlu0 %v452
        %v490 = vpop.xlane.xlu0 %489
        %491 = vadd.xlane.f32.xlu0 %v453
        %v492 = vpop.xlane.xlu0 %491
        %493 = vadd.xlane.f32.xlu0 %v454
        %v494 = vpop.xlane.xlu0 %493
        %495 = vadd.xlane.f32.xlu0 %v455
        %v496 = vpop.xlane.xlu0 %495
        %497 = vadd.xlane.f32.xlu0 %v456
        %v498 = vpop.xlane.xlu0 %497
        %499 = vadd.xlane.f32.xlu0 %v457
        %v500 = vpop.xlane.xlu0 %499
        %501 = vadd.xlane.f32.xlu0 %v458
        %v502 = vpop.xlane.xlu0 %501
        %503 = vadd.xlane.f32.xlu0 %v459
        %v504 = vpop.xlane.xlu0 %503
        %505 = vadd.xlane.f32.xlu0 %v460
        %v506 = vpop.xlane.xlu0 %505
        %507 = vadd.xlane.f32.xlu0 %v461
        %v508 = vpop.xlane.xlu0 %507
        %509 = vadd.xlane.f32.xlu0 %v462
        %v510 = vpop.xlane.xlu0 %509
        %511 = vadd.xlane.f32.xlu0 %v463
        %v512 = vpop.xlane.xlu0 %511
        %513 = vadd.xlane.f32.xlu0 %v464
        %v514 = vpop.xlane.xlu0 %513
        %515 = vadd.xlane.f32.xlu0 %v465
        %v516 = vpop.xlane.xlu0 %515
        %517 = vadd.xlane.f32.xlu0 %v466
        %v518 = vpop.xlane.xlu0 %517
        %519 = vadd.xlane.f32.xlu0 %v467
        %v520 = vpop.xlane.xlu0 %519
        %521 = vadd.xlane.f32.xlu0 %v468
        %v522 = vpop.xlane.xlu0 %521
        %523 = vadd.xlane.f32.xlu0 %v469
        %v524 = vpop.xlane.xlu0 %523
        %525 = vadd.xlane.f32.xlu0 %v470
        %v526 = vpop.xlane.xlu0 %525
        %527 = vadd.xlane.f32.xlu0 %v471
        %v528 = vpop.xlane.xlu0 %527
        %529 = vadd.xlane.f32.xlu0 %v472
        %v530 = vpop.xlane.xlu0 %529
        %531 = vadd.xlane.f32.xlu0 %v473
        %v532 = vpop.xlane.xlu0 %531
        %533 = vadd.xlane.f32.xlu0 %v474
        %v534 = vpop.xlane.xlu0 %533
        %535 = vadd.xlane.f32.xlu0 %v475
        %v536 = vpop.xlane.xlu0 %535
        %537 = vadd.xlane.f32.xlu0 %v476
        %v538 = vpop.xlane.xlu0 %537
        %539 = vadd.xlane.f32.xlu0 %v477
        %v540 = vpop.xlane.xlu0 %539
        %541 = vadd.xlane.f32.xlu0 %v478
        %v542 = vpop.xlane.xlu0 %541
        %v543 = vmul.f32 %v384, 0.0078125
        %v544 = vmul.f32 %v386, 0.0078125
        %v545 = vmul.f32 %v388, 0.0078125
        %v546 = vmul.f32 %v390, 0.0078125
        %v547 = vmul.f32 %v392, 0.0078125
        %v548 = vmul.f32 %v394, 0.0078125
        %v549 = vmul.f32 %v396, 0.0078125
        %v550 = vmul.f32 %v398, 0.0078125
        %v551 = vmul.f32 %v400, 0.0078125
        %v552 = vmul.f32 %v402, 0.0078125
        %v553 = vmul.f32 %v404, 0.0078125
        %v554 = vmul.f32 %v406, 0.0078125
        %v555 = vmul.f32 %v408, 0.0078125
        %v556 = vmul.f32 %v410, 0.0078125
        %v557 = vmul.f32 %v412, 0.0078125
        %v558 = vmul.f32 %v414, 0.0078125
        %v559 = vmul.f32 %v416, 0.0078125
        %v560 = vmul.f32 %v418, 0.0078125
        %v561 = vmul.f32 %v420, 0.0078125
        %v562 = vmul.f32 %v422, 0.0078125
        %v563 = vmul.f32 %v424, 0.0078125
        %v564 = vmul.f32 %v426, 0.0078125
        %v565 = vmul.f32 %v428, 0.0078125
        %v566 = vmul.f32 %v430, 0.0078125
        %v567 = vmul.f32 %v432, 0.0078125
        %v568 = vmul.f32 %v434, 0.0078125
        %v569 = vmul.f32 %v436, 0.0078125
        %v570 = vmul.f32 %v438, 0.0078125
        %v571 = vmul.f32 %v440, 0.0078125
        %v572 = vmul.f32 %v442, 0.0078125
        %v573 = vmul.f32 %v444, 0.0078125
        %v574 = vmul.f32 %v446, 0.0078125
        %v575 = vmul.f32 %v480, 0.0078125
        %v576 = vmul.f32 %v482, 0.0078125
        %v577 = vmul.f32 %v484, 0.0078125
        %v578 = vmul.f32 %v486, 0.0078125
        %v579 = vmul.f32 %v488, 0.0078125
        %v580 = vmul.f32 %v490, 0.0078125
        %v581 = vmul.f32 %v492, 0.0078125
        %v582 = vmul.f32 %v494, 0.0078125
        %v583 = vmul.f32 %v496, 0.0078125
        %v584 = vmul.f32 %v498, 0.0078125
        %v585 = vmul.f32 %v500, 0.0078125
        %v586 = vmul.f32 %v502, 0.0078125
        %v587 = vmul.f32 %v504, 0.0078125
        %v588 = vmul.f32 %v506, 0.0078125
        %v589 = vmul.f32 %v508, 0.0078125
        %v590 = vmul.f32 %v510, 0.0078125
        %v591 = vmul.f32 %v512, 0.0078125
        %v592 = vmul.f32 %v514, 0.0078125
        %v593 = vmul.f32 %v516, 0.0078125
        %v594 = vmul.f32 %v518, 0.0078125
        %v595 = vmul.f32 %v520, 0.0078125
        %v596 = vmul.f32 %v522, 0.0078125
        %v597 = vmul.f32 %v524, 0.0078125
        %v598 = vmul.f32 %v526, 0.0078125
        %v599 = vmul.f32 %v528, 0.0078125
        %v600 = vmul.f32 %v530, 0.0078125
        %v601 = vmul.f32 %v532, 0.0078125
        %v602 = vmul.f32 %v534, 0.0078125
        %v603 = vmul.f32 %v536, 0.0078125
        %v604 = vmul.f32 %v538, 0.0078125
        %v605 = vmul.f32 %v540, 0.0078125
        %v606 = vmul.f32 %v542, 0.0078125
        %v607 = vmul.f32 %v543, %v543
        %v608 = vmul.f32 %v544, %v544
        %v609 = vmul.f32 %v545, %v545
        %v610 = vmul.f32 %v546, %v546
        %v611 = vmul.f32 %v547, %v547
        %v612 = vmul.f32 %v548, %v548
        %v613 = vmul.f32 %v549, %v549
        %v614 = vmul.f32 %v550, %v550
        %v615 = vmul.f32 %v551, %v551
        %v616 = vmul.f32 %v552, %v552
        %v617 = vmul.f32 %v553, %v553
        %v618 = vmul.f32 %v554, %v554
        %v619 = vmul.f32 %v555, %v555
        %v620 = vmul.f32 %v556, %v556
        %v621 = vmul.f32 %v557, %v557
        %v622 = vmul.f32 %v558, %v558
        %v623 = vmul.f32 %v559, %v559
        %v624 = vmul.f32 %v560, %v560
        %v625 = vmul.f32 %v561, %v561
        %v626 = vmul.f32 %v562, %v562
        %v627 = vmul.f32 %v563, %v563
        %v628 = vmul.f32 %v564, %v564
        %v629 = vmul.f32 %v565, %v565
        %v630 = vmul.f32 %v566, %v566
        %v631 = vmul.f32 %v567, %v567
        %v632 = vmul.f32 %v568, %v568
        %v633 = vmul.f32 %v569, %v569
        %v634 = vmul.f32 %v570, %v570
        %v635 = vmul.f32 %v571, %v571
        %v636 = vmul.f32 %v572, %v572
        %v637 = vmul.f32 %v573, %v573
        %v638 = vmul.f32 %v574, %v574
        %v639 = vsub.f32 %v575, %v607
        %v640 = vsub.f32 %v576, %v608
        %v641 = vsub.f32 %v577, %v609
        %v642 = vsub.f32 %v578, %v610
        %v643 = vsub.f32 %v579, %v611
        %v644 = vsub.f32 %v580, %v612
        %v645 = vsub.f32 %v581, %v613
        %v646 = vsub.f32 %v582, %v614
        %v647 = vsub.f32 %v583, %v615
        %v648 = vsub.f32 %v584, %v616
        %v649 = vsub.f32 %v585, %v617
        %v650 = vsub.f32 %v586, %v618
        %v651 = vsub.f32 %v587, %v619
        %v652 = vsub.f32 %v588, %v620
        %v653 = vsub.f32 %v589, %v621
        %v654 = vsub.f32 %v590, %v622
        %v655 = vsub.f32 %v591, %v623
        %v656 = vsub.f32 %v592, %v624
        %v657 = vsub.f32 %v593, %v625
        %v658 = vsub.f32 %v594, %v626
        %v659 = vsub.f32 %v595, %v627
        %v660 = vsub.f32 %v596, %v628
        %v661 = vsub.f32 %v597, %v629
        %v662 = vsub.f32 %v598, %v630
        %v663 = vsub.f32 %v599, %v631
        %v664 = vsub.f32 %v600, %v632
        %v665 = vsub.f32 %v601, %v633
        %v666 = vsub.f32 %v602, %v634
        %v667 = vsub.f32 %v603, %v635
        %v668 = vsub.f32 %v604, %v636
        %v669 = vsub.f32 %v605, %v637
        %v670 = vsub.f32 %v606, %v638
        %v671 = vmax.f32 %v639, 0.0
        %v672 = vmax.f32 %v640, 0.0
        %v673 = vmax.f32 %v641, 0.0
        %v674 = vmax.f32 %v642, 0.0
        %v675 = vmax.f32 %v643, 0.0
        %v676 = vmax.f32 %v644, 0.0
        %v677 = vmax.f32 %v645, 0.0
        %v678 = vmax.f32 %v646, 0.0
        %v679 = vmax.f32 %v647, 0.0
        %v680 = vmax.f32 %v648, 0.0
        %v681 = vmax.f32 %v649, 0.0
        %v682 = vmax.f32 %v650, 0.0
        %v683 = vmax.f32 %v651, 0.0
        %v684 = vmax.f32 %v652, 0.0
        %v685 = vmax.f32 %v653, 0.0
        %v686 = vmax.f32 %v654, 0.0
        %v687 = vmax.f32 %v655, 0.0
        %v688 = vmax.f32 %v656, 0.0
        %v689 = vmax.f32 %v657, 0.0
        %v690 = vmax.f32 %v658, 0.0
        %v691 = vmax.f32 %v659, 0.0
        %v692 = vmax.f32 %v660, 0.0
        %v693 = vmax.f32 %v661, 0.0
        %v694 = vmax.f32 %v662, 0.0
        %v695 = vmax.f32 %v663, 0.0
        %v696 = vmax.f32 %v664, 0.0
        %v697 = vmax.f32 %v665, 0.0
        %v698 = vmax.f32 %v666, 0.0
        %v699 = vmax.f32 %v667, 0.0
        %v700 = vmax.f32 %v668, 0.0
        %v701 = vmax.f32 %v669, 0.0
        %v702 = vmax.f32 %v670, 0.0
        %v703 = vsub.f32 %v349, %v543
        %v704 = vsub.f32 %v350, %v544
        %v705 = vsub.f32 %v351, %v545
        %v706 = vsub.f32 %v352, %v546
        %v707 = vsub.f32 %v353, %v547
        %v708 = vsub.f32 %v354, %v548
        %v709 = vsub.f32 %v355, %v549
        %v710 = vsub.f32 %v356, %v550
        %v711 = vsub.f32 %v357, %v551
        %v712 = vsub.f32 %v358, %v552
        %v713 = vsub.f32 %v359, %v553
        %v714 = vsub.f32 %v360, %v554
        %v715 = vsub.f32 %v361, %v555
        %v716 = vsub.f32 %v362, %v556
        %v717 = vsub.f32 %v363, %v557
        %v718 = vsub.f32 %v364, %v558
        %v719 = vsub.f32 %v365, %v559
        %v720 = vsub.f32 %v366, %v560
        %v721 = vsub.f32 %v367, %v561
        %v722 = vsub.f32 %v368, %v562
        %v723 = vsub.f32 %v369, %v563
        %v724 = vsub.f32 %v370, %v564
        %v725 = vsub.f32 %v371, %v565
        %v726 = vsub.f32 %v372, %v566
        %v727 = vsub.f32 %v373, %v567
        %v728 = vsub.f32 %v374, %v568
        %v729 = vsub.f32 %v375, %v569
        %v730 = vsub.f32 %v376, %v570
        %v731 = vsub.f32 %v377, %v571
        %v732 = vsub.f32 %v378, %v572
        %v733 = vsub.f32 %v379, %v573
        %v734 = vsub.f32 %v380, %v574
        %v735 = vadd.f32 %v671, 1e-05
        %v736 = vadd.f32 %v672, 1e-05
        %v737 = vadd.f32 %v673, 1e-05
        %v738 = vadd.f32 %v674, 1e-05
        %v739 = vadd.f32 %v675, 1e-05
        %v740 = vadd.f32 %v676, 1e-05
        %v741 = vadd.f32 %v677, 1e-05
        %v742 = vadd.f32 %v678, 1e-05
        %v743 = vadd.f32 %v679, 1e-05
        %v744 = vadd.f32 %v680, 1e-05
        %v745 = vadd.f32 %v681, 1e-05
        %v746 = vadd.f32 %v682, 1e-05
        %v747 = vadd.f32 %v683, 1e-05
        %v748 = vadd.f32 %v684, 1e-05
        %v749 = vadd.f32 %v685, 1e-05
        %v750 = vadd.f32 %v686, 1e-05
        %v751 = vadd.f32 %v687, 1e-05
        %v752 = vadd.f32 %v688, 1e-05
        %v753 = vadd.f32 %v689, 1e-05
        %v754 = vadd.f32 %v690, 1e-05
        %v755 = vadd.f32 %v691, 1e-05
        %v756 = vadd.f32 %v692, 1e-05
        %v757 = vadd.f32 %v693, 1e-05
        %v758 = vadd.f32 %v694, 1e-05
        %v759 = vadd.f32 %v695, 1e-05
        %v760 = vadd.f32 %v696, 1e-05
        %v761 = vadd.f32 %v697, 1e-05
        %v762 = vadd.f32 %v698, 1e-05
        %v763 = vadd.f32 %v699, 1e-05
        %v764 = vadd.f32 %v700, 1e-05
        %v765 = vadd.f32 %v701, 1e-05
        %v766 = vadd.f32 %v702, 1e-05
        %v767 = vrsqrt.pop %v735
        %v768 = vmul.f32 %v767, %v735
        %v769 = vmul.f32 %v768, %v767
        %v770 = vmul.f32 0.5, %v769
        %v771 = vsub.f32 1.5, %v770
        %v772 = vmul.f32 %v767, %v771
        %vm773 = vweird.f32 %v735
        %vm774 = vweird.f32 %v767
        %vm775 = vmor %vm773, %vm774
        %v776 = vsel %vm775, %v767, %v772
        %v777 = vrsqrt.pop %v736
        %v778 = vmul.f32 %v777, %v736
        %v779 = vmul.f32 %v778, %v777
        %v780 = vmul.f32 0.5, %v779
        %v781 = vsub.f32 1.5, %v780
        %v782 = vmul.f32 %v777, %v781
        %vm783 = vweird.f32 %v736
        %vm784 = vweird.f32 %v777
        %vm785 = vmor %vm783, %vm784
        %v786 = vsel %vm785, %v777, %v782
        %v787 = vrsqrt.pop %v737
        %v788 = vmul.f32 %v787, %v737
        %v789 = vmul.f32 %v788, %v787
        %v790 = vmul.f32 0.5, %v789
        %v791 = vsub.f32 1.5, %v790
        %v792 = vmul.f32 %v787, %v791
        %vm793 = vweird.f32 %v737
        %vm794 = vweird.f32 %v787
        %vm795 = vmor %vm793, %vm794
        %v796 = vsel %vm795, %v787, %v792
        %v797 = vrsqrt.pop %v738
        %v798 = vmul.f32 %v797, %v738
        %v799 = vmul.f32 %v798, %v797
        %v800 = vmul.f32 0.5, %v799
        %v801 = vsub.f32 1.5, %v800
        %v802 = vmul.f32 %v797, %v801
        %vm803 = vweird.f32 %v738
        %vm804 = vweird.f32 %v797
        %vm805 = vmor %vm803, %vm804
        %v806 = vsel %vm805, %v797, %v802
        %v807 = vrsqrt.pop %v739
        %v808 = vmul.f32 %v807, %v739
        %v809 = vmul.f32 %v808, %v807
        %v810 = vmul.f32 0.5, %v809
        %v811 = vsub.f32 1.5, %v810
        %v812 = vmul.f32 %v807, %v811
        %vm813 = vweird.f32 %v739
        %vm814 = vweird.f32 %v807
        %vm815 = vmor %vm813, %vm814
        %v816 = vsel %vm815, %v807, %v812
        %v817 = vrsqrt.pop %v740
        %v818 = vmul.f32 %v817, %v740
        %v819 = vmul.f32 %v818, %v817
        %v820 = vmul.f32 0.5, %v819
        %v821 = vsub.f32 1.5, %v820
        %v822 = vmul.f32 %v817, %v821
        %vm823 = vweird.f32 %v740
        %vm824 = vweird.f32 %v817
        %vm825 = vmor %vm823, %vm824
        %v826 = vsel %vm825, %v817, %v822
        %v827 = vrsqrt.pop %v741
        %v828 = vmul.f32 %v827, %v741
        %v829 = vmul.f32 %v828, %v827
        %v830 = vmul.f32 0.5, %v829
        %v831 = vsub.f32 1.5, %v830
        %v832 = vmul.f32 %v827, %v831
        %vm833 = vweird.f32 %v741
        %vm834 = vweird.f32 %v827
        %vm835 = vmor %vm833, %vm834
        %v836 = vsel %vm835, %v827, %v832
        %v837 = vrsqrt.pop %v742
        %v838 = vmul.f32 %v837, %v742
        %v839 = vmul.f32 %v838, %v837
        %v840 = vmul.f32 0.5, %v839
        %v841 = vsub.f32 1.5, %v840
        %v842 = vmul.f32 %v837, %v841
        %vm843 = vweird.f32 %v742
        %vm844 = vweird.f32 %v837
        %vm845 = vmor %vm843, %vm844
        %v846 = vsel %vm845, %v837, %v842
        %v847 = vrsqrt.pop %v743
        %v848 = vmul.f32 %v847, %v743
        %v849 = vmul.f32 %v848, %v847
        %v850 = vmul.f32 0.5, %v849
        %v851 = vsub.f32 1.5, %v850
        %v852 = vmul.f32 %v847, %v851
        %vm853 = vweird.f32 %v743
        %vm854 = vweird.f32 %v847
        %vm855 = vmor %vm853, %vm854
        %v856 = vsel %vm855, %v847, %v852
        %v857 = vrsqrt.pop %v744
        %v858 = vmul.f32 %v857, %v744
        %v859 = vmul.f32 %v858, %v857
        %v860 = vmul.f32 0.5, %v859
        %v861 = vsub.f32 1.5, %v860
        %v862 = vmul.f32 %v857, %v861
        %vm863 = vweird.f32 %v744
        %vm864 = vweird.f32 %v857
        %vm865 = vmor %vm863, %vm864
        %v866 = vsel %vm865, %v857, %v862
        %v867 = vrsqrt.pop %v745
        %v868 = vmul.f32 %v867, %v745
        %v869 = vmul.f32 %v868, %v867
        %v870 = vmul.f32 0.5, %v869
        %v871 = vsub.f32 1.5, %v870
        %v872 = vmul.f32 %v867, %v871
        %vm873 = vweird.f32 %v745
        %vm874 = vweird.f32 %v867
        %vm875 = vmor %vm873, %vm874
        %v876 = vsel %vm875, %v867, %v872
        %v877 = vrsqrt.pop %v746
        %v878 = vmul.f32 %v877, %v746
        %v879 = vmul.f32 %v878, %v877
        %v880 = vmul.f32 0.5, %v879
        %v881 = vsub.f32 1.5, %v880
        %v882 = vmul.f32 %v877, %v881
        %vm883 = vweird.f32 %v746
        %vm884 = vweird.f32 %v877
        %vm885 = vmor %vm883, %vm884
        %v886 = vsel %vm885, %v877, %v882
        %v887 = vrsqrt.pop %v747
        %v888 = vmul.f32 %v887, %v747
        %v889 = vmul.f32 %v888, %v887
        %v890 = vmul.f32 0.5, %v889
        %v891 = vsub.f32 1.5, %v890
        %v892 = vmul.f32 %v887, %v891
        %vm893 = vweird.f32 %v747
        %vm894 = vweird.f32 %v887
        %vm895 = vmor %vm893, %vm894
        %v896 = vsel %vm895, %v887, %v892
        %v897 = vrsqrt.pop %v748
        %v898 = vmul.f32 %v897, %v748
        %v899 = vmul.f32 %v898, %v897
        %v900 = vmul.f32 0.5, %v899
        %v901 = vsub.f32 1.5, %v900
        %v902 = vmul.f32 %v897, %v901
        %vm903 = vweird.f32 %v748
        %vm904 = vweird.f32 %v897
        %vm905 = vmor %vm903, %vm904
        %v906 = vsel %vm905, %v897, %v902
        %v907 = vrsqrt.pop %v749
        %v908 = vmul.f32 %v907, %v749
        %v909 = vmul.f32 %v908, %v907
        %v910 = vmul.f32 0.5, %v909
        %v911 = vsub.f32 1.5, %v910
        %v912 = vmul.f32 %v907, %v911
        %vm913 = vweird.f32 %v749
        %vm914 = vweird.f32 %v907
        %vm915 = vmor %vm913, %vm914
        %v916 = vsel %vm915, %v907, %v912
        %v917 = vrsqrt.pop %v750
        %v918 = vmul.f32 %v917, %v750
        %v919 = vmul.f32 %v918, %v917
        %v920 = vmul.f32 0.5, %v919
        %v921 = vsub.f32 1.5, %v920
        %v922 = vmul.f32 %v917, %v921
        %vm923 = vweird.f32 %v750
        %vm924 = vweird.f32 %v917
        %vm925 = vmor %vm923, %vm924
        %v926 = vsel %vm925, %v917, %v922
        %v927 = vrsqrt.pop %v751
        %v928 = vmul.f32 %v927, %v751
        %v929 = vmul.f32 %v928, %v927
        %v930 = vmul.f32 0.5, %v929
        %v931 = vsub.f32 1.5, %v930
        %v932 = vmul.f32 %v927, %v931
        %vm933 = vweird.f32 %v751
        %vm934 = vweird.f32 %v927
        %vm935 = vmor %vm933, %vm934
        %v936 = vsel %vm935, %v927, %v932
        %v937 = vrsqrt.pop %v752
        %v938 = vmul.f32 %v937, %v752
        %v939 = vmul.f32 %v938, %v937
        %v940 = vmul.f32 0.5, %v939
        %v941 = vsub.f32 1.5, %v940
        %v942 = vmul.f32 %v937, %v941
        %vm943 = vweird.f32 %v752
        %vm944 = vweird.f32 %v937
        %vm945 = vmor %vm943, %vm944
        %v946 = vsel %vm945, %v937, %v942
        %v947 = vrsqrt.pop %v753
        %v948 = vmul.f32 %v947, %v753
        %v949 = vmul.f32 %v948, %v947
        %v950 = vmul.f32 0.5, %v949
        %v951 = vsub.f32 1.5, %v950
        %v952 = vmul.f32 %v947, %v951
        %vm953 = vweird.f32 %v753
        %vm954 = vweird.f32 %v947
        %vm955 = vmor %vm953, %vm954
        %v956 = vsel %vm955, %v947, %v952
        %v957 = vrsqrt.pop %v754
        %v958 = vmul.f32 %v957, %v754
        %v959 = vmul.f32 %v958, %v957
        %v960 = vmul.f32 0.5, %v959
        %v961 = vsub.f32 1.5, %v960
        %v962 = vmul.f32 %v957, %v961
        %vm963 = vweird.f32 %v754
        %vm964 = vweird.f32 %v957
        %vm965 = vmor %vm963, %vm964
        %v966 = vsel %vm965, %v957, %v962
        %v967 = vrsqrt.pop %v755
        %v968 = vmul.f32 %v967, %v755
        %v969 = vmul.f32 %v968, %v967
        %v970 = vmul.f32 0.5, %v969
        %v971 = vsub.f32 1.5, %v970
        %v972 = vmul.f32 %v967, %v971
        %vm973 = vweird.f32 %v755
        %vm974 = vweird.f32 %v967
        %vm975 = vmor %vm973, %vm974
        %v976 = vsel %vm975, %v967, %v972
        %v977 = vrsqrt.pop %v756
        %v978 = vmul.f32 %v977, %v756
        %v979 = vmul.f32 %v978, %v977
        %v980 = vmul.f32 0.5, %v979
        %v981 = vsub.f32 1.5, %v980
        %v982 = vmul.f32 %v977, %v981
        %vm983 = vweird.f32 %v756
        %vm984 = vweird.f32 %v977
        %vm985 = vmor %vm983, %vm984
        %v986 = vsel %vm985, %v977, %v982
        %v987 = vrsqrt.pop %v757
        %v988 = vmul.f32 %v987, %v757
        %v989 = vmul.f32 %v988, %v987
        %v990 = vmul.f32 0.5, %v989
        %v991 = vsub.f32 1.5, %v990
        %v992 = vmul.f32 %v987, %v991
        %vm993 = vweird.f32 %v757
        %vm994 = vweird.f32 %v987
        %vm995 = vmor %vm993, %vm994
        %v996 = vsel %vm995, %v987, %v992
        %v997 = vrsqrt.pop %v758
        %v998 = vmul.f32 %v997, %v758
        %v999 = vmul.f32 %v998, %v997
        %v1000 = vmul.f32 0.5, %v999
        %v1001 = vsub.f32 1.5, %v1000
        %v1002 = vmul.f32 %v997, %v1001
        %vm1003 = vweird.f32 %v758
        %vm1004 = vweird.f32 %v997
        %vm1005 = vmor %vm1003, %vm1004
        %v1006 = vsel %vm1005, %v997, %v1002
        %v1007 = vrsqrt.pop %v759
        %v1008 = vmul.f32 %v1007, %v759
        %v1009 = vmul.f32 %v1008, %v1007
        %v1010 = vmul.f32 0.5, %v1009
        %v1011 = vsub.f32 1.5, %v1010
        %v1012 = vmul.f32 %v1007, %v1011
        %vm1013 = vweird.f32 %v759
        %vm1014 = vweird.f32 %v1007
        %vm1015 = vmor %vm1013, %vm1014
        %v1016 = vsel %vm1015, %v1007, %v1012
        %v1017 = vrsqrt.pop %v760
        %v1018 = vmul.f32 %v1017, %v760
        %v1019 = vmul.f32 %v1018, %v1017
        %v1020 = vmul.f32 0.5, %v1019
        %v1021 = vsub.f32 1.5, %v1020
        %v1022 = vmul.f32 %v1017, %v1021
        %vm1023 = vweird.f32 %v760
        %vm1024 = vweird.f32 %v1017
        %vm1025 = vmor %vm1023, %vm1024
        %v1026 = vsel %vm1025, %v1017, %v1022
        %v1027 = vrsqrt.pop %v761
        %v1028 = vmul.f32 %v1027, %v761
        %v1029 = vmul.f32 %v1028, %v1027
        %v1030 = vmul.f32 0.5, %v1029
        %v1031 = vsub.f32 1.5, %v1030
        %v1032 = vmul.f32 %v1027, %v1031
        %vm1033 = vweird.f32 %v761
        %vm1034 = vweird.f32 %v1027
        %vm1035 = vmor %vm1033, %vm1034
        %v1036 = vsel %vm1035, %v1027, %v1032
        %v1037 = vrsqrt.pop %v762
        %v1038 = vmul.f32 %v1037, %v762
        %v1039 = vmul.f32 %v1038, %v1037
        %v1040 = vmul.f32 0.5, %v1039
        %v1041 = vsub.f32 1.5, %v1040
        %v1042 = vmul.f32 %v1037, %v1041
        %vm1043 = vweird.f32 %v762
        %vm1044 = vweird.f32 %v1037
        %vm1045 = vmor %vm1043, %vm1044
        %v1046 = vsel %vm1045, %v1037, %v1042
        %v1047 = vrsqrt.pop %v763
        %v1048 = vmul.f32 %v1047, %v763
        %v1049 = vmul.f32 %v1048, %v1047
        %v1050 = vmul.f32 0.5, %v1049
        %v1051 = vsub.f32 1.5, %v1050
        %v1052 = vmul.f32 %v1047, %v1051
        %vm1053 = vweird.f32 %v763
        %vm1054 = vweird.f32 %v1047
        %vm1055 = vmor %vm1053, %vm1054
        %v1056 = vsel %vm1055, %v1047, %v1052
        %v1057 = vrsqrt.pop %v764
        %v1058 = vmul.f32 %v1057, %v764
        %v1059 = vmul.f32 %v1058, %v1057
        %v1060 = vmul.f32 0.5, %v1059
        %v1061 = vsub.f32 1.5, %v1060
        %v1062 = vmul.f32 %v1057, %v1061
        %vm1063 = vweird.f32 %v764
        %vm1064 = vweird.f32 %v1057
        %vm1065 = vmor %vm1063, %vm1064
        %v1066 = vsel %vm1065, %v1057, %v1062
        %v1067 = vrsqrt.pop %v765
        %v1068 = vmul.f32 %v1067, %v765
        %v1069 = vmul.f32 %v1068, %v1067
        %v1070 = vmul.f32 0.5, %v1069
        %v1071 = vsub.f32 1.5, %v1070
        %v1072 = vmul.f32 %v1067, %v1071
        %vm1073 = vweird.f32 %v765
        %vm1074 = vweird.f32 %v1067
        %vm1075 = vmor %vm1073, %vm1074
        %v1076 = vsel %vm1075, %v1067, %v1072
        %v1077 = vrsqrt.pop %v766
        %v1078 = vmul.f32 %v1077, %v766
        %v1079 = vmul.f32 %v1078, %v1077
        %v1080 = vmul.f32 0.5, %v1079
        %v1081 = vsub.f32 1.5, %v1080
        %v1082 = vmul.f32 %v1077, %v1081
        %vm1083 = vweird.f32 %v766
        %vm1084 = vweird.f32 %v1077
        %vm1085 = vmor %vm1083, %vm1084
        %v1086 = vsel %vm1085, %v1077, %v1082
        %v1087 = vmul.f32 %v703, %v776
        %v1088 = vmul.f32 %v704, %v786
        %v1089 = vmul.f32 %v705, %v796
        %v1090 = vmul.f32 %v706, %v806
        %v1091 = vmul.f32 %v707, %v816
        %v1092 = vmul.f32 %v708, %v826
        %v1093 = vmul.f32 %v709, %v836
        %v1094 = vmul.f32 %v710, %v846
        %v1095 = vmul.f32 %v711, %v856
        %v1096 = vmul.f32 %v712, %v866
        %v1097 = vmul.f32 %v713, %v876
        %v1098 = vmul.f32 %v714, %v886
        %v1099 = vmul.f32 %v715, %v896
        %v1100 = vmul.f32 %v716, %v906
        %v1101 = vmul.f32 %v717, %v916
        %v1102 = vmul.f32 %v718, %v926
        %v1103 = vmul.f32 %v719, %v936
        %v1104 = vmul.f32 %v720, %v946
        %v1105 = vmul.f32 %v721, %v956
        %v1106 = vmul.f32 %v722, %v966
        %v1107 = vmul.f32 %v723, %v976
        %v1108 = vmul.f32 %v724, %v986
        %v1109 = vmul.f32 %v725, %v996
        %v1110 = vmul.f32 %v726, %v1006
        %v1111 = vmul.f32 %v727, %v1016
        %v1112 = vmul.f32 %v728, %v1026
        %v1113 = vmul.f32 %v729, %v1036
        %v1114 = vmul.f32 %v730, %v1046
        %v1115 = vmul.f32 %v731, %v1056
        %v1116 = vmul.f32 %v732, %v1066
        %v1117 = vmul.f32 %v733, %v1076
        %v1118 = vmul.f32 %v734, %v1086
        %v1120 = vperm.slane %v381, 0
        %v1122 = vmul.f32 %v1087, %v1120
        %v1123 = vmul.f32 %v1088, %v1120
        %v1124 = vmul.f32 %v1089, %v1120
        %v1125 = vmul.f32 %v1090, %v1120
        %v1126 = vmul.f32 %v1091, %v1120
        %v1127 = vmul.f32 %v1092, %v1120
        %v1128 = vmul.f32 %v1093, %v1120
        %v1129 = vmul.f32 %v1094, %v1120
        %v1130 = vmul.f32 %v1095, %v1120
        %v1131 = vmul.f32 %v1096, %v1120
        %v1132 = vmul.f32 %v1097, %v1120
        %v1133 = vmul.f32 %v1098, %v1120
        %v1134 = vmul.f32 %v1099, %v1120
        %v1135 = vmul.f32 %v1100, %v1120
        %v1136 = vmul.f32 %v1101, %v1120
        %v1137 = vmul.f32 %v1102, %v1120
        %v1138 = vmul.f32 %v1103, %v1120
        %v1139 = vmul.f32 %v1104, %v1120
        %v1140 = vmul.f32 %v1105, %v1120
        %v1141 = vmul.f32 %v1106, %v1120
        %v1142 = vmul.f32 %v1107, %v1120
        %v1143 = vmul.f32 %v1108, %v1120
        %v1144 = vmul.f32 %v1109, %v1120
        %v1145 = vmul.f32 %v1110, %v1120
        %v1146 = vmul.f32 %v1111, %v1120
        %v1147 = vmul.f32 %v1112, %v1120
        %v1148 = vmul.f32 %v1113, %v1120
        %v1149 = vmul.f32 %v1114, %v1120
        %v1150 = vmul.f32 %v1115, %v1120
        %v1151 = vmul.f32 %v1116, %v1120
        %v1152 = vmul.f32 %v1117, %v1120
        %v1153 = vmul.f32 %v1118, %v1120
        %v1155 = vperm.slane %v382, 0
        %v1157 = vadd.f32 %v1122, %v1155
        %v1158 = vadd.f32 %v1123, %v1155
        %v1159 = vadd.f32 %v1124, %v1155
        %v1160 = vadd.f32 %v1125, %v1155
        %v1161 = vadd.f32 %v1126, %v1155
        %v1162 = vadd.f32 %v1127, %v1155
        %v1163 = vadd.f32 %v1128, %v1155
        %v1164 = vadd.f32 %v1129, %v1155
        %v1165 = vadd.f32 %v1130, %v1155
        %v1166 = vadd.f32 %v1131, %v1155
        %v1167 = vadd.f32 %v1132, %v1155
        %v1168 = vadd.f32 %v1133, %v1155
        %v1169 = vadd.f32 %v1134, %v1155
        %v1170 = vadd.f32 %v1135, %v1155
        %v1171 = vadd.f32 %v1136, %v1155
        %v1172 = vadd.f32 %v1137, %v1155
        %v1173 = vadd.f32 %v1138, %v1155
        %v1174 = vadd.f32 %v1139, %v1155
        %v1175 = vadd.f32 %v1140, %v1155
        %v1176 = vadd.f32 %v1141, %v1155
        %v1177 = vadd.f32 %v1142, %v1155
        %v1178 = vadd.f32 %v1143, %v1155
        %v1179 = vadd.f32 %v1144, %v1155
        %v1180 = vadd.f32 %v1145, %v1155
        %v1181 = vadd.f32 %v1146, %v1155
        %v1182 = vadd.f32 %v1147, %v1155
        %v1183 = vadd.f32 %v1148, %v1155
        %v1184 = vadd.f32 %v1149, %v1155
        %v1185 = vadd.f32 %v1150, %v1155
        %v1186 = vadd.f32 %v1151, %v1155
        %v1187 = vadd.f32 %v1152, %v1155
        %v1188 = vadd.f32 %v1153, %v1155
        %v1189 = vpack.c.bf16 %v1158, %v1157
        %v1190 = vpack.c.bf16 %v1160, %v1159
        %v1191 = vpack.c.bf16 %v1162, %v1161
        %v1192 = vpack.c.bf16 %v1164, %v1163
        %v1193 = vpack.c.bf16 %v1166, %v1165
        %v1194 = vpack.c.bf16 %v1168, %v1167
        %v1195 = vpack.c.bf16 %v1170, %v1169
        %v1196 = vpack.c.bf16 %v1172, %v1171
        %v1197 = vpack.c.bf16 %v1174, %v1173
        %v1198 = vpack.c.bf16 %v1176, %v1175
        %v1199 = vpack.c.bf16 %v1178, %v1177
        %v1200 = vpack.c.bf16 %v1180, %v1179
        %v1201 = vpack.c.bf16 %v1182, %v1181
        %v1202 = vpack.c.bf16 %v1184, %v1183
        %v1203 = vpack.c.bf16 %v1186, %v1185
        %v1204 = vpack.c.bf16 %v1188, %v1187
        %v1205 = vld [vmem:[#allocation7] sm:$0xff]
        %v1206 = vld [vmem:[#allocation7 + $0x8] sm:$0xff]
        %v1207 = vld [vmem:[#allocation7 + $0x10] sm:$0xff]
        %v1208 = vld [vmem:[#allocation7 + $0x18] sm:$0xff]
        %v1209 = vld [vmem:[#allocation7 + $0x20] sm:$0xff]
        %v1210 = vld [vmem:[#allocation7 + $0x28] sm:$0xff]
        %v1211 = vld [vmem:[#allocation7 + $0x30] sm:$0xff]
        %v1212 = vld [vmem:[#allocation7 + $0x38] sm:$0xff]
        %v1213 = vld [vmem:[#allocation7 + $0x40] sm:$0xff]
        %v1214 = vld [vmem:[#allocation7 + $0x48] sm:$0xff]
        %v1215 = vld [vmem:[#allocation7 + $0x50] sm:$0xff]
        %v1216 = vld [vmem:[#allocation7 + $0x58] sm:$0xff]
        %v1217 = vld [vmem:[#allocation7 + $0x60] sm:$0xff]
        %v1218 = vld [vmem:[#allocation7 + $0x68] sm:$0xff]
        %v1219 = vld [vmem:[#allocation7 + $0x70] sm:$0xff]
        %v1220 = vld [vmem:[#allocation7 + $0x78] sm:$0xff]
        %v1221 = vld [vmem:[%s4] sm:$0x3]
        %v1223 = vperm.slane %v1221, 0
        %v1224 = vperm.slane %v1221, 1
        %v1243 = vunpack.c.l.b16 %v1205
        %v1244 = vunpack.c.h.b16 %v1205
        %v1245 = vunpack.c.l.b16 %v1206
        %v1246 = vunpack.c.h.b16 %v1206
        %v1247 = vunpack.c.l.b16 %v1207
        %v1248 = vunpack.c.h.b16 %v1207
        %v1249 = vunpack.c.l.b16 %v1208
        %v1250 = vunpack.c.h.b16 %v1208
        %v1251 = vunpack.c.l.b16 %v1209
        %v1252 = vunpack.c.h.b16 %v1209
        %v1253 = vunpack.c.l.b16 %v1210
        %v1254 = vunpack.c.h.b16 %v1210
        %v1255 = vunpack.c.l.b16 %v1211
        %v1256 = vunpack.c.h.b16 %v1211
        %v1257 = vunpack.c.l.b16 %v1212
        %v1258 = vunpack.c.h.b16 %v1212
        %v1259 = vunpack.c.l.b16 %v1213
        %v1260 = vunpack.c.h.b16 %v1213
        %v1261 = vunpack.c.l.b16 %v1214
        %v1262 = vunpack.c.h.b16 %v1214
        %v1263 = vunpack.c.l.b16 %v1215
        %v1264 = vunpack.c.h.b16 %v1215
        %v1265 = vunpack.c.l.b16 %v1216
        %v1266 = vunpack.c.h.b16 %v1216
        %v1267 = vunpack.c.l.b16 %v1217
        %v1268 = vunpack.c.h.b16 %v1217
        %v1269 = vunpack.c.l.b16 %v1218
        %v1270 = vunpack.c.h.b16 %v1218
        %v1271 = vunpack.c.l.b16 %v1219
        %v1272 = vunpack.c.h.b16 %v1219
        %v1273 = vunpack.c.l.b16 %v1220
        %v1274 = vunpack.c.h.b16 %v1220
        %v1275 = vpack.c.b16 %v1245, %v1243
        %v1276 = vpack.c.b16 %v1246, %v1244
        %v1277 = vpack.c.b16 %v1249, %v1247
        %v1278 = vpack.c.b16 %v1250, %v1248
        %v1279 = vpack.c.b16 %v1253, %v1251
        %v1280 = vpack.c.b16 %v1254, %v1252
        %v1281 = vpack.c.b16 %v1257, %v1255
        %v1282 = vpack.c.b16 %v1258, %v1256
        %v1283 = vpack.c.b16 %v1261, %v1259
        %v1284 = vpack.c.b16 %v1262, %v1260
        %v1285 = vpack.c.b16 %v1265, %v1263
        %v1286 = vpack.c.b16 %v1266, %v1264
        %v1287 = vpack.c.b16 %v1269, %v1267
        %v1288 = vpack.c.b16 %v1270, %v1268
        %v1289 = vpack.c.b16 %v1273, %v1271
        %v1290 = vpack.c.b16 %v1274, %v1272
        %1307 = vmatpush.bf16.msra.mxu0 %v1289
        %1308 = vmatpush.bf16.msra.mxu0 %v1287
        %1309 = vmatpush.bf16.msra.mxu0 %v1285
        %1310 = vmatpush.bf16.msra.mxu0 %v1283
        %1311 = vmatpush.bf16.msra.mxu0 %v1281
        %1312 = vmatpush.bf16.msra.mxu0 %v1279
        %1313 = vmatpush.bf16.msra.mxu0 %v1277
        %1314 = vmatpush.bf16.msra.mxu0 %v1275
        %1315 = vmatmul.bf16.gmra.mxu0 %v1189
        %v1316 = vpop.f32.mrf.mxu0
        %v1317 = vadd.f32 %v1223, %v1316
        %v1318 = vpop.f32.mrf.mxu0
        %v1319 = vadd.f32 %v1223, %v1318
        %1320 = vmatmul.bf16.gmra.mxu0 %v1190
        %v1321 = vpop.f32.mrf.mxu0
        %v1322 = vadd.f32 %v1223, %v1321
        %v1323 = vpop.f32.mrf.mxu0
        %v1324 = vadd.f32 %v1223, %v1323
        %1325 = vmatmul.bf16.gmra.mxu0 %v1191
        %v1326 = vpop.f32.mrf.mxu0
        %v1327 = vadd.f32 %v1223, %v1326
        %v1328 = vpop.f32.mrf.mxu0
        %v1329 = vadd.f32 %v1223, %v1328
        %1330 = vmatmul.bf16.gmra.mxu0 %v1192
        %v1331 = vpop.f32.mrf.mxu0
        %v1332 = vadd.f32 %v1223, %v1331
        %v1333 = vpop.f32.mrf.mxu0
        %v1334 = vadd.f32 %v1223, %v1333
        %1335 = vmatmul.bf16.gmra.mxu0 %v1193
        %v1336 = vpop.f32.mrf.mxu0
        %v1337 = vadd.f32 %v1223, %v1336
        %v1338 = vpop.f32.mrf.mxu0
        %v1339 = vadd.f32 %v1223, %v1338
        %1340 = vmatmul.bf16.gmra.mxu0 %v1194
        %v1341 = vpop.f32.mrf.mxu0
        %v1342 = vadd.f32 %v1223, %v1341
        %v1343 = vpop.f32.mrf.mxu0
        %v1344 = vadd.f32 %v1223, %v1343
        %1345 = vmatmul.bf16.gmra.mxu0 %v1195
        %v1346 = vpop.f32.mrf.mxu0
        %v1347 = vadd.f32 %v1223, %v1346
        %v1348 = vpop.f32.mrf.mxu0
        %v1349 = vadd.f32 %v1223, %v1348
        %1350 = vmatmul.bf16.gmra.mxu0 %v1196
        %v1351 = vpop.f32.mrf.mxu0
        %v1352 = vadd.f32 %v1223, %v1351
        %v1353 = vpop.f32.mrf.mxu0
        %v1354 = vadd.f32 %v1223, %v1353
        %1355 = vmatmul.bf16.gmra.mxu0 %v1197
        %v1356 = vpop.f32.mrf.mxu0
        %v1357 = vadd.f32 %v1223, %v1356
        %v1358 = vpop.f32.mrf.mxu0
        %v1359 = vadd.f32 %v1223, %v1358
        %1360 = vmatmul.bf16.gmra.mxu0 %v1198
        %v1361 = vpop.f32.mrf.mxu0
        %v1362 = vadd.f32 %v1223, %v1361
        %v1363 = vpop.f32.mrf.mxu0
        %v1364 = vadd.f32 %v1223, %v1363
        %1365 = vmatmul.bf16.gmra.mxu0 %v1199
        %v1366 = vpop.f32.mrf.mxu0
        %v1367 = vadd.f32 %v1223, %v1366
        %v1368 = vpop.f32.mrf.mxu0
        %v1369 = vadd.f32 %v1223, %v1368
        %1370 = vmatmul.bf16.gmra.mxu0 %v1200
        %v1371 = vpop.f32.mrf.mxu0
        %v1372 = vadd.f32 %v1223, %v1371
        %v1373 = vpop.f32.mrf.mxu0
        %v1374 = vadd.f32 %v1223, %v1373
        %1375 = vmatmul.bf16.gmra.mxu0 %v1201
        %v1376 = vpop.f32.mrf.mxu0
        %v1377 = vadd.f32 %v1223, %v1376
        %v1378 = vpop.f32.mrf.mxu0
        %v1379 = vadd.f32 %v1223, %v1378
        %1380 = vmatmul.bf16.gmra.mxu0 %v1202
        %v1381 = vpop.f32.mrf.mxu0
        %v1382 = vadd.f32 %v1223, %v1381
        %v1383 = vpop.f32.mrf.mxu0
        %v1384 = vadd.f32 %v1223, %v1383
        %1385 = vmatmul.bf16.gmra.mxu0 %v1203
        %v1386 = vpop.f32.mrf.mxu0
        %v1387 = vadd.f32 %v1223, %v1386
        %v1388 = vpop.f32.mrf.mxu0
        %v1389 = vadd.f32 %v1223, %v1388
        %1390 = vmatmul.bf16.gmra.mxu0 %v1204
        %v1391 = vpop.f32.mrf.mxu0
        %v1392 = vadd.f32 %v1223, %v1391
        %v1393 = vpop.f32.mrf.mxu0
        %v1394 = vadd.f32 %v1223, %v1393
        %1395 = vdwg.mxu0
        %1396 = vmatpush.bf16.msra.mxu0 %v1290
        %1397 = vmatpush.bf16.msra.mxu0 %v1288
        %1398 = vmatpush.bf16.msra.mxu0 %v1286
        %1399 = vmatpush.bf16.msra.mxu0 %v1284
        %1400 = vmatpush.bf16.msra.mxu0 %v1282
        %1401 = vmatpush.bf16.msra.mxu0 %v1280
        %1402 = vmatpush.bf16.msra.mxu0 %v1278
        %1403 = vmatpush.bf16.msra.mxu0 %v1276
        %1404 = vmatmul.bf16.gmra.mxu0 %v1189
        %v1405 = vpop.f32.mrf.mxu0
        %v1406 = vadd.f32 %v1224, %v1405
        %v1407 = vpop.f32.mrf.mxu0
        %v1408 = vadd.f32 %v1224, %v1407
        %1409 = vmatmul.bf16.gmra.mxu0 %v1190
        %v1410 = vpop.f32.mrf.mxu0
        %v1411 = vadd.f32 %v1224, %v1410
        %v1412 = vpop.f32.mrf.mxu0
        %v1413 = vadd.f32 %v1224, %v1412
        %1414 = vmatmul.bf16.gmra.mxu0 %v1191
        %v1415 = vpop.f32.mrf.mxu0
        %v1416 = vadd.f32 %v1224, %v1415
        %v1417 = vpop.f32.mrf.mxu0
        %v1418 = vadd.f32 %v1224, %v1417
        %1419 = vmatmul.bf16.gmra.mxu0 %v1192
        %v1420 = vpop.f32.mrf.mxu0
        %v1421 = vadd.f32 %v1224, %v1420
        %v1422 = vpop.f32.mrf.mxu0
        %v1423 = vadd.f32 %v1224, %v1422
        %1424 = vmatmul.bf16.gmra.mxu0 %v1193
        %v1425 = vpop.f32.mrf.mxu0
        %v1426 = vadd.f32 %v1224, %v1425
        %v1427 = vpop.f32.mrf.mxu0
        %v1428 = vadd.f32 %v1224, %v1427
        %1429 = vmatmul.bf16.gmra.mxu0 %v1194
        %v1430 = vpop.f32.mrf.mxu0
        %v1431 = vadd.f32 %v1224, %v1430
        %v1432 = vpop.f32.mrf.mxu0
        %v1433 = vadd.f32 %v1224, %v1432
        %1434 = vmatmul.bf16.gmra.mxu0 %v1195
        %v1435 = vpop.f32.mrf.mxu0
        %v1436 = vadd.f32 %v1224, %v1435
        %v1437 = vpop.f32.mrf.mxu0
        %v1438 = vadd.f32 %v1224, %v1437
        %1439 = vmatmul.bf16.gmra.mxu0 %v1196
        %v1440 = vpop.f32.mrf.mxu0
        %v1441 = vadd.f32 %v1224, %v1440
        %v1442 = vpop.f32.mrf.mxu0
        %v1443 = vadd.f32 %v1224, %v1442
        %1444 = vmatmul.bf16.gmra.mxu0 %v1197
        %v1445 = vpop.f32.mrf.mxu0
        %v1446 = vadd.f32 %v1224, %v1445
        %v1447 = vpop.f32.mrf.mxu0
        %v1448 = vadd.f32 %v1224, %v1447
        %1449 = vmatmul.bf16.gmra.mxu0 %v1198
        %v1450 = vpop.f32.mrf.mxu0
        %v1451 = vadd.f32 %v1224, %v1450
        %v1452 = vpop.f32.mrf.mxu0
        %v1453 = vadd.f32 %v1224, %v1452
        %1454 = vmatmul.bf16.gmra.mxu0 %v1199
        %v1455 = vpop.f32.mrf.mxu0
        %v1456 = vadd.f32 %v1224, %v1455
        %v1457 = vpop.f32.mrf.mxu0
        %v1458 = vadd.f32 %v1224, %v1457
        %1459 = vmatmul.bf16.gmra.mxu0 %v1200
        %v1460 = vpop.f32.mrf.mxu0
        %v1461 = vadd.f32 %v1224, %v1460
        %v1462 = vpop.f32.mrf.mxu0
        %v1463 = vadd.f32 %v1224, %v1462
        %1464 = vmatmul.bf16.gmra.mxu0 %v1201
        %v1465 = vpop.f32.mrf.mxu0
        %v1466 = vadd.f32 %v1224, %v1465
        %v1467 = vpop.f32.mrf.mxu0
        %v1468 = vadd.f32 %v1224, %v1467
        %1469 = vmatmul.bf16.gmra.mxu0 %v1202
        %v1470 = vpop.f32.mrf.mxu0
        %v1471 = vadd.f32 %v1224, %v1470
        %v1472 = vpop.f32.mrf.mxu0
        %v1473 = vadd.f32 %v1224, %v1472
        %1474 = vmatmul.bf16.gmra.mxu0 %v1203
        %v1475 = vpop.f32.mrf.mxu0
        %v1476 = vadd.f32 %v1224, %v1475
        %v1477 = vpop.f32.mrf.mxu0
        %v1478 = vadd.f32 %v1224, %v1477
        %1479 = vmatmul.bf16.gmra.mxu0 %v1204
        %v1480 = vpop.f32.mrf.mxu0
        %v1481 = vadd.f32 %v1224, %v1480
        %v1482 = vpop.f32.mrf.mxu0
        %v1483 = vadd.f32 %v1224, %v1482
        %1484 = vdwg.mxu0
        %v1485 = vxor.u32 %v1317, 2147483648
        %v1486 = vxor.u32 %v1406, 2147483648
        %v1487 = vxor.u32 %v1319, 2147483648
        %v1488 = vxor.u32 %v1408, 2147483648
        %v1489 = vxor.u32 %v1322, 2147483648
        %v1490 = vxor.u32 %v1411, 2147483648
        %v1491 = vxor.u32 %v1324, 2147483648
        %v1492 = vxor.u32 %v1413, 2147483648
        %v1493 = vxor.u32 %v1327, 2147483648
        %v1494 = vxor.u32 %v1416, 2147483648
        %v1495 = vxor.u32 %v1329, 2147483648
        %v1496 = vxor.u32 %v1418, 2147483648
        %v1497 = vxor.u32 %v1332, 2147483648
        %v1498 = vxor.u32 %v1421, 2147483648
        %v1499 = vxor.u32 %v1334, 2147483648
        %v1500 = vxor.u32 %v1423, 2147483648
        %v1501 = vxor.u32 %v1337, 2147483648
        %v1502 = vxor.u32 %v1426, 2147483648
        %v1503 = vxor.u32 %v1339, 2147483648
        %v1504 = vxor.u32 %v1428, 2147483648
        %v1505 = vxor.u32 %v1342, 2147483648
        %v1506 = vxor.u32 %v1431, 2147483648
        %v1507 = vxor.u32 %v1344, 2147483648
        %v1508 = vxor.u32 %v1433, 2147483648
        %v1509 = vxor.u32 %v1347, 2147483648
        %v1510 = vxor.u32 %v1436, 2147483648
        %v1511 = vxor.u32 %v1349, 2147483648
        %v1512 = vxor.u32 %v1438, 2147483648
        %v1513 = vxor.u32 %v1352, 2147483648
        %v1514 = vxor.u32 %v1441, 2147483648
        %v1515 = vxor.u32 %v1354, 2147483648
        %v1516 = vxor.u32 %v1443, 2147483648
        %v1517 = vxor.u32 %v1357, 2147483648
        %v1518 = vxor.u32 %v1446, 2147483648
        %v1519 = vxor.u32 %v1359, 2147483648
        %v1520 = vxor.u32 %v1448, 2147483648
        %v1521 = vxor.u32 %v1362, 2147483648
        %v1522 = vxor.u32 %v1451, 2147483648
        %v1523 = vxor.u32 %v1364, 2147483648
        %v1524 = vxor.u32 %v1453, 2147483648
        %v1525 = vxor.u32 %v1367, 2147483648
        %v1526 = vxor.u32 %v1456, 2147483648
        %v1527 = vxor.u32 %v1369, 2147483648
        %v1528 = vxor.u32 %v1458, 2147483648
        %v1529 = vxor.u32 %v1372, 2147483648
        %v1530 = vxor.u32 %v1461, 2147483648
        %v1531 = vxor.u32 %v1374, 2147483648
        %v1532 = vxor.u32 %v1463, 2147483648
        %v1533 = vxor.u32 %v1377, 2147483648
        %v1534 = vxor.u32 %v1466, 2147483648
        %v1535 = vxor.u32 %v1379, 2147483648
        %v1536 = vxor.u32 %v1468, 2147483648
        %v1537 = vxor.u32 %v1382, 2147483648
        %v1538 = vxor.u32 %v1471, 2147483648
        %v1539 = vxor.u32 %v1384, 2147483648
        %v1540 = vxor.u32 %v1473, 2147483648
        %v1541 = vxor.u32 %v1387, 2147483648
        %v1542 = vxor.u32 %v1476, 2147483648
        %v1543 = vxor.u32 %v1389, 2147483648
        %v1544 = vxor.u32 %v1478, 2147483648
        %v1545 = vxor.u32 %v1392, 2147483648
        %v1546 = vxor.u32 %v1481, 2147483648
        %v1547 = vxor.u32 %v1394, 2147483648
        %v1548 = vxor.u32 %v1483, 2147483648
        %v1549 = vmul.f32 %v1485, 1.442695
        %v1550 = vpow.pop %v1549
        %v1551 = vmul.f32 %v1486, 1.442695
        %v1552 = vpow.pop %v1551
        %v1553 = vmul.f32 %v1487, 1.442695
        %v1554 = vpow.pop %v1553
        %v1555 = vmul.f32 %v1488, 1.442695
        %v1556 = vpow.pop %v1555
        %v1557 = vmul.f32 %v1489, 1.442695
        %v1558 = vpow.pop %v1557
        %v1559 = vmul.f32 %v1490, 1.442695
        %v1560 = vpow.pop %v1559
        %v1561 = vmul.f32 %v1491, 1.442695
        %v1562 = vpow.pop %v1561
        %v1563 = vmul.f32 %v1492, 1.442695
        %v1564 = vpow.pop %v1563
        %v1565 = vmul.f32 %v1493, 1.442695
        %v1566 = vpow.pop %v1565
        %v1567 = vmul.f32 %v1494, 1.442695
        %v1568 = vpow.pop %v1567
        %v1569 = vmul.f32 %v1495, 1.442695
        %v1570 = vpow.pop %v1569
        %v1571 = vmul.f32 %v1496, 1.442695
        %v1572 = vpow.pop %v1571
        %v1573 = vmul.f32 %v1497, 1.442695
        %v1574 = vpow.pop %v1573
        %v1575 = vmul.f32 %v1498, 1.442695
        %v1576 = vpow.pop %v1575
        %v1577 = vmul.f32 %v1499, 1.442695
        %v1578 = vpow.pop %v1577
        %v1579 = vmul.f32 %v1500, 1.442695
        %v1580 = vpow.pop %v1579
        %v1581 = vmul.f32 %v1501, 1.442695
        %v1582 = vpow.pop %v1581
        %v1583 = vmul.f32 %v1502, 1.442695
        %v1584 = vpow.pop %v1583
        %v1585 = vmul.f32 %v1503, 1.442695
        %v1586 = vpow.pop %v1585
        %v1587 = vmul.f32 %v1504, 1.442695
        %v1588 = vpow.pop %v1587
        %v1589 = vmul.f32 %v1505, 1.442695
        %v1590 = vpow.pop %v1589
        %v1591 = vmul.f32 %v1506, 1.442695
        %v1592 = vpow.pop %v1591
        %v1593 = vmul.f32 %v1507, 1.442695
        %v1594 = vpow.pop %v1593
        %v1595 = vmul.f32 %v1508, 1.442695
        %v1596 = vpow.pop %v1595
        %v1597 = vmul.f32 %v1509, 1.442695
        %v1598 = vpow.pop %v1597
        %v1599 = vmul.f32 %v1510, 1.442695
        %v1600 = vpow.pop %v1599
        %v1601 = vmul.f32 %v1511, 1.442695
        %v1602 = vpow.pop %v1601
        %v1603 = vmul.f32 %v1512, 1.442695
        %v1604 = vpow.pop %v1603
        %v1605 = vmul.f32 %v1513, 1.442695
        %v1606 = vpow.pop %v1605
        %v1607 = vmul.f32 %v1514, 1.442695
        %v1608 = vpow.pop %v1607
        %v1609 = vmul.f32 %v1515, 1.442695
        %v1610 = vpow.pop %v1609
        %v1611 = vmul.f32 %v1516, 1.442695
        %v1612 = vpow.pop %v1611
        %v1613 = vmul.f32 %v1517, 1.442695
        %v1614 = vpow.pop %v1613
        %v1615 = vmul.f32 %v1518, 1.442695
        %v1616 = vpow.pop %v1615
        %v1617 = vmul.f32 %v1519, 1.442695
        %v1618 = vpow.pop %v1617
        %v1619 = vmul.f32 %v1520, 1.442695
        %v1620 = vpow.pop %v1619
        %v1621 = vmul.f32 %v1521, 1.442695
        %v1622 = vpow.pop %v1621
        %v1623 = vmul.f32 %v1522, 1.442695
        %v1624 = vpow.pop %v1623
        %v1625 = vmul.f32 %v1523, 1.442695
        %v1626 = vpow.pop %v1625
        %v1627 = vmul.f32 %v1524, 1.442695
        %v1628 = vpow.pop %v1627
        %v1629 = vmul.f32 %v1525, 1.442695
        %v1630 = vpow.pop %v1629
        %v1631 = vmul.f32 %v1526, 1.442695
        %v1632 = vpow.pop %v1631
        %v1633 = vmul.f32 %v1527, 1.442695
        %v1634 = vpow.pop %v1633
        %v1635 = vmul.f32 %v1528, 1.442695
        %v1636 = vpow.pop %v1635
        %v1637 = vmul.f32 %v1529, 1.442695
        %v1638 = vpow.pop %v1637
        %v1639 = vmul.f32 %v1530, 1.442695
        %v1640 = vpow.pop %v1639
        %v1641 = vmul.f32 %v1531, 1.442695
        %v1642 = vpow.pop %v1641
        %v1643 = vmul.f32 %v1532, 1.442695
        %v1644 = vpow.pop %v1643
        %v1645 = vmul.f32 %v1533, 1.442695
        %v1646 = vpow.pop %v1645
        %v1647 = vmul.f32 %v1534, 1.442695
        %v1648 = vpow.pop %v1647
        %v1649 = vmul.f32 %v1535, 1.442695
        %v1650 = vpow.pop %v1649
        %v1651 = vmul.f32 %v1536, 1.442695
        %v1652 = vpow.pop %v1651
        %v1653 = vmul.f32 %v1537, 1.442695
        %v1654 = vpow.pop %v1653
        %v1655 = vmul.f32 %v1538, 1.442695
        %v1656 = vpow.pop %v1655
        %v1657 = vmul.f32 %v1539, 1.442695
        %v1658 = vpow.pop %v1657
        %v1659 = vmul.f32 %v1540, 1.442695
        %v1660 = vpow.pop %v1659
        %v1661 = vmul.f32 %v1541, 1.442695
        %v1662 = vpow.pop %v1661
        %v1663 = vmul.f32 %v1542, 1.442695
        %v1664 = vpow.pop %v1663
        %v1665 = vmul.f32 %v1543, 1.442695
        %v1666 = vpow.pop %v1665
        %v1667 = vmul.f32 %v1544, 1.442695
        %v1668 = vpow.pop %v1667
        %v1669 = vmul.f32 %v1545, 1.442695
        %v1670 = vpow.pop %v1669
        %v1671 = vmul.f32 %v1546, 1.442695
        %v1672 = vpow.pop %v1671
        %v1673 = vmul.f32 %v1547, 1.442695
        %v1674 = vpow.pop %v1673
        %v1675 = vmul.f32 %v1548, 1.442695
        %v1676 = vpow.pop %v1675
        %v1677 = vadd.f32 %v1550, 1.0
        %v1678 = vadd.f32 %v1552, 1.0
        %v1679 = vadd.f32 %v1554, 1.0
        %v1680 = vadd.f32 %v1556, 1.0
        %v1681 = vadd.f32 %v1558, 1.0
        %v1682 = vadd.f32 %v1560, 1.0
        %v1683 = vadd.f32 %v1562, 1.0
        %v1684 = vadd.f32 %v1564, 1.0
        %v1685 = vadd.f32 %v1566, 1.0
        %v1686 = vadd.f32 %v1568, 1.0
        %v1687 = vadd.f32 %v1570, 1.0
        %v1688 = vadd.f32 %v1572, 1.0
        %v1689 = vadd.f32 %v1574, 1.0
        %v1690 = vadd.f32 %v1576, 1.0
        %v1691 = vadd.f32 %v1578, 1.0
        %v1692 = vadd.f32 %v1580, 1.0
        %v1693 = vadd.f32 %v1582, 1.0
        %v1694 = vadd.f32 %v1584, 1.0
        %v1695 = vadd.f32 %v1586, 1.0
        %v1696 = vadd.f32 %v1588, 1.0
        %v1697 = vadd.f32 %v1590, 1.0
        %v1698 = vadd.f32 %v1592, 1.0
        %v1699 = vadd.f32 %v1594, 1.0
        %v1700 = vadd.f32 %v1596, 1.0
        %v1701 = vadd.f32 %v1598, 1.0
        %v1702 = vadd.f32 %v1600, 1.0
        %v1703 = vadd.f32 %v1602, 1.0
        %v1704 = vadd.f32 %v1604, 1.0
        %v1705 = vadd.f32 %v1606, 1.0
        %v1706 = vadd.f32 %v1608, 1.0
        %v1707 = vadd.f32 %v1610, 1.0
        %v1708 = vadd.f32 %v1612, 1.0
        %v1709 = vadd.f32 %v1614, 1.0
        %v1710 = vadd.f32 %v1616, 1.0
        %v1711 = vadd.f32 %v1618, 1.0
        %v1712 = vadd.f32 %v1620, 1.0
        %v1713 = vadd.f32 %v1622, 1.0
        %v1714 = vadd.f32 %v1624, 1.0
        %v1715 = vadd.f32 %v1626, 1.0
        %v1716 = vadd.f32 %v1628, 1.0
        %v1717 = vadd.f32 %v1630, 1.0
        %v1718 = vadd.f32 %v1632, 1.0
        %v1719 = vadd.f32 %v1634, 1.0
        %v1720 = vadd.f32 %v1636, 1.0
        %v1721 = vadd.f32 %v1638, 1.0
        %v1722 = vadd.f32 %v1640, 1.0
        %v1723 = vadd.f32 %v1642, 1.0
        %v1724 = vadd.f32 %v1644, 1.0
        %v1725 = vadd.f32 %v1646, 1.0
        %v1726 = vadd.f32 %v1648, 1.0
        %v1727 = vadd.f32 %v1650, 1.0
        %v1728 = vadd.f32 %v1652, 1.0
        %v1729 = vadd.f32 %v1654, 1.0
        %v1730 = vadd.f32 %v1656, 1.0
        %v1731 = vadd.f32 %v1658, 1.0
        %v1732 = vadd.f32 %v1660, 1.0
        %v1733 = vadd.f32 %v1662, 1.0
        %v1734 = vadd.f32 %v1664, 1.0
        %v1735 = vadd.f32 %v1666, 1.0
        %v1736 = vadd.f32 %v1668, 1.0
        %v1737 = vadd.f32 %v1670, 1.0
        %v1738 = vadd.f32 %v1672, 1.0
        %v1739 = vadd.f32 %v1674, 1.0
        %v1740 = vadd.f32 %v1676, 1.0
        %v1741 = vrcp.pop %v1677
        %v1742 = vmul.f32 %v1677, %v1741
        %v1743 = vsub.f32 1.0, %v1742
        %v1744 = vmul.f32 %v1741, %v1743
        %v1745 = vadd.f32 %v1741, %v1744
        %vm1746 = vweird.f32 %v1677
        %vm1747 = vweird.f32 %v1741
        %vm1748 = vmor %vm1746, %vm1747
        %v1749 = vsel %vm1748, %v1741, %v1745
        %v1750 = vand.u32 2147483647, %v1677
        %vm1751 = vcmp.eq.f32.partialorder %v1750, 8.507059e+37
        %v1752 = vand.u32 %v1677, 2147483648
        %v1753 = vor.u32 1.1754944e-38, %v1752
        %v1754 = vsel %vm1751, %v1753, %v1749
        %v1755 = vmul.f32 1.0, %v1754
        %v1756 = vrcp.pop %v1678
        %v1757 = vmul.f32 %v1678, %v1756
        %v1758 = vsub.f32 1.0, %v1757
        %v1759 = vmul.f32 %v1756, %v1758
        %v1760 = vadd.f32 %v1756, %v1759
        %vm1761 = vweird.f32 %v1678
        %vm1762 = vweird.f32 %v1756
        %vm1763 = vmor %vm1761, %vm1762
        %v1764 = vsel %vm1763, %v1756, %v1760
        %v1765 = vand.u32 2147483647, %v1678
        %vm1766 = vcmp.eq.f32.partialorder %v1765, 8.507059e+37
        %v1767 = vand.u32 %v1678, 2147483648
        %v1768 = vor.u32 1.1754944e-38, %v1767
        %v1769 = vsel %vm1766, %v1768, %v1764
        %v1770 = vmul.f32 1.0, %v1769
        %v1771 = vrcp.pop %v1679
        %v1772 = vmul.f32 %v1679, %v1771
        %v1773 = vsub.f32 1.0, %v1772
        %v1774 = vmul.f32 %v1771, %v1773
        %v1775 = vadd.f32 %v1771, %v1774
        %vm1776 = vweird.f32 %v1679
        %vm1777 = vweird.f32 %v1771
        %vm1778 = vmor %vm1776, %vm1777
        %v1779 = vsel %vm1778, %v1771, %v1775
        %v1780 = vand.u32 2147483647, %v1679
        %vm1781 = vcmp.eq.f32.partialorder %v1780, 8.507059e+37
        %v1782 = vand.u32 %v1679, 2147483648
        %v1783 = vor.u32 1.1754944e-38, %v1782
        %v1784 = vsel %vm1781, %v1783, %v1779
        %v1785 = vmul.f32 1.0, %v1784
        %v1786 = vrcp.pop %v1680
        %v1787 = vmul.f32 %v1680, %v1786
        %v1788 = vsub.f32 1.0, %v1787
        %v1789 = vmul.f32 %v1786, %v1788
        %v1790 = vadd.f32 %v1786, %v1789
        %vm1791 = vweird.f32 %v1680
        %vm1792 = vweird.f32 %v1786
        %vm1793 = vmor %vm1791, %vm1792
        %v1794 = vsel %vm1793, %v1786, %v1790
        %v1795 = vand.u32 2147483647, %v1680
        %vm1796 = vcmp.eq.f32.partialorder %v1795, 8.507059e+37
        %v1797 = vand.u32 %v1680, 2147483648
        %v1798 = vor.u32 1.1754944e-38, %v1797
        %v1799 = vsel %vm1796, %v1798, %v1794
        %v1800 = vmul.f32 1.0, %v1799
        %v1801 = vrcp.pop %v1681
        %v1802 = vmul.f32 %v1681, %v1801
        %v1803 = vsub.f32 1.0, %v1802
        %v1804 = vmul.f32 %v1801, %v1803
        %v1805 = vadd.f32 %v1801, %v1804
        %vm1806 = vweird.f32 %v1681
        %vm1807 = vweird.f32 %v1801
        %vm1808 = vmor %vm1806, %vm1807
        %v1809 = vsel %vm1808, %v1801, %v1805
        %v1810 = vand.u32 2147483647, %v1681
        %vm1811 = vcmp.eq.f32.partialorder %v1810, 8.507059e+37
        %v1812 = vand.u32 %v1681, 2147483648
        %v1813 = vor.u32 1.1754944e-38, %v1812
        %v1814 = vsel %vm1811, %v1813, %v1809
        %v1815 = vmul.f32 1.0, %v1814
        %v1816 = vrcp.pop %v1682
        %v1817 = vmul.f32 %v1682, %v1816
        %v1818 = vsub.f32 1.0, %v1817
        %v1819 = vmul.f32 %v1816, %v1818
        %v1820 = vadd.f32 %v1816, %v1819
        %vm1821 = vweird.f32 %v1682
        %vm1822 = vweird.f32 %v1816
        %vm1823 = vmor %vm1821, %vm1822
        %v1824 = vsel %vm1823, %v1816, %v1820
        %v1825 = vand.u32 2147483647, %v1682
        %vm1826 = vcmp.eq.f32.partialorder %v1825, 8.507059e+37
        %v1827 = vand.u32 %v1682, 2147483648
        %v1828 = vor.u32 1.1754944e-38, %v1827
        %v1829 = vsel %vm1826, %v1828, %v1824
        %v1830 = vmul.f32 1.0, %v1829
        %v1831 = vrcp.pop %v1683
        %v1832 = vmul.f32 %v1683, %v1831
        %v1833 = vsub.f32 1.0, %v1832
        %v1834 = vmul.f32 %v1831, %v1833
        %v1835 = vadd.f32 %v1831, %v1834
        %vm1836 = vweird.f32 %v1683
        %vm1837 = vweird.f32 %v1831
        %vm1838 = vmor %vm1836, %vm1837
        %v1839 = vsel %vm1838, %v1831, %v1835
        %v1840 = vand.u32 2147483647, %v1683
        %vm1841 = vcmp.eq.f32.partialorder %v1840, 8.507059e+37
        %v1842 = vand.u32 %v1683, 2147483648
        %v1843 = vor.u32 1.1754944e-38, %v1842
        %v1844 = vsel %vm1841, %v1843, %v1839
        %v1845 = vmul.f32 1.0, %v1844
        %v1846 = vrcp.pop %v1684
        %v1847 = vmul.f32 %v1684, %v1846
        %v1848 = vsub.f32 1.0, %v1847
        %v1849 = vmul.f32 %v1846, %v1848
        %v1850 = vadd.f32 %v1846, %v1849
        %vm1851 = vweird.f32 %v1684
        %vm1852 = vweird.f32 %v1846
        %vm1853 = vmor %vm1851, %vm1852
        %v1854 = vsel %vm1853, %v1846, %v1850
        %v1855 = vand.u32 2147483647, %v1684
        %vm1856 = vcmp.eq.f32.partialorder %v1855, 8.507059e+37
        %v1857 = vand.u32 %v1684, 2147483648
        %v1858 = vor.u32 1.1754944e-38, %v1857
        %v1859 = vsel %vm1856, %v1858, %v1854
        %v1860 = vmul.f32 1.0, %v1859
        %v1861 = vrcp.pop %v1685
        %v1862 = vmul.f32 %v1685, %v1861
        %v1863 = vsub.f32 1.0, %v1862
        %v1864 = vmul.f32 %v1861, %v1863
        %v1865 = vadd.f32 %v1861, %v1864
        %vm1866 = vweird.f32 %v1685
        %vm1867 = vweird.f32 %v1861
        %vm1868 = vmor %vm1866, %vm1867
        %v1869 = vsel %vm1868, %v1861, %v1865
        %v1870 = vand.u32 2147483647, %v1685
        %vm1871 = vcmp.eq.f32.partialorder %v1870, 8.507059e+37
        %v1872 = vand.u32 %v1685, 2147483648
        %v1873 = vor.u32 1.1754944e-38, %v1872
        %v1874 = vsel %vm1871, %v1873, %v1869
        %v1875 = vmul.f32 1.0, %v1874
        %v1876 = vrcp.pop %v1686
        %v1877 = vmul.f32 %v1686, %v1876
        %v1878 = vsub.f32 1.0, %v1877
        %v1879 = vmul.f32 %v1876, %v1878
        %v1880 = vadd.f32 %v1876, %v1879
        %vm1881 = vweird.f32 %v1686
        %vm1882 = vweird.f32 %v1876
        %vm1883 = vmor %vm1881, %vm1882
        %v1884 = vsel %vm1883, %v1876, %v1880
        %v1885 = vand.u32 2147483647, %v1686
        %vm1886 = vcmp.eq.f32.partialorder %v1885, 8.507059e+37
        %v1887 = vand.u32 %v1686, 2147483648
        %v1888 = vor.u32 1.1754944e-38, %v1887
        %v1889 = vsel %vm1886, %v1888, %v1884
        %v1890 = vmul.f32 1.0, %v1889
        %v1891 = vrcp.pop %v1687
        %v1892 = vmul.f32 %v1687, %v1891
        %v1893 = vsub.f32 1.0, %v1892
        %v1894 = vmul.f32 %v1891, %v1893
        %v1895 = vadd.f32 %v1891, %v1894
        %vm1896 = vweird.f32 %v1687
        %vm1897 = vweird.f32 %v1891
        %vm1898 = vmor %vm1896, %vm1897
        %v1899 = vsel %vm1898, %v1891, %v1895
        %v1900 = vand.u32 2147483647, %v1687
        %vm1901 = vcmp.eq.f32.partialorder %v1900, 8.507059e+37
        %v1902 = vand.u32 %v1687, 2147483648
        %v1903 = vor.u32 1.1754944e-38, %v1902
        %v1904 = vsel %vm1901, %v1903, %v1899
        %v1905 = vmul.f32 1.0, %v1904
        %v1906 = vrcp.pop %v1688
        %v1907 = vmul.f32 %v1688, %v1906
        %v1908 = vsub.f32 1.0, %v1907
        %v1909 = vmul.f32 %v1906, %v1908
        %v1910 = vadd.f32 %v1906, %v1909
        %vm1911 = vweird.f32 %v1688
        %vm1912 = vweird.f32 %v1906
        %vm1913 = vmor %vm1911, %vm1912
        %v1914 = vsel %vm1913, %v1906, %v1910
        %v1915 = vand.u32 2147483647, %v1688
        %vm1916 = vcmp.eq.f32.partialorder %v1915, 8.507059e+37
        %v1917 = vand.u32 %v1688, 2147483648
        %v1918 = vor.u32 1.1754944e-38, %v1917
        %v1919 = vsel %vm1916, %v1918, %v1914
        %v1920 = vmul.f32 1.0, %v1919
        %v1921 = vrcp.pop %v1689
        %v1922 = vmul.f32 %v1689, %v1921
        %v1923 = vsub.f32 1.0, %v1922
        %v1924 = vmul.f32 %v1921, %v1923
        %v1925 = vadd.f32 %v1921, %v1924
        %vm1926 = vweird.f32 %v1689
        %vm1927 = vweird.f32 %v1921
        %vm1928 = vmor %vm1926, %vm1927
        %v1929 = vsel %vm1928, %v1921, %v1925
        %v1930 = vand.u32 2147483647, %v1689
        %vm1931 = vcmp.eq.f32.partialorder %v1930, 8.507059e+37
        %v1932 = vand.u32 %v1689, 2147483648
        %v1933 = vor.u32 1.1754944e-38, %v1932
        %v1934 = vsel %vm1931, %v1933, %v1929
        %v1935 = vmul.f32 1.0, %v1934
        %v1936 = vrcp.pop %v1690
        %v1937 = vmul.f32 %v1690, %v1936
        %v1938 = vsub.f32 1.0, %v1937
        %v1939 = vmul.f32 %v1936, %v1938
        %v1940 = vadd.f32 %v1936, %v1939
        %vm1941 = vweird.f32 %v1690
        %vm1942 = vweird.f32 %v1936
        %vm1943 = vmor %vm1941, %vm1942
        %v1944 = vsel %vm1943, %v1936, %v1940
        %v1945 = vand.u32 2147483647, %v1690
        %vm1946 = vcmp.eq.f32.partialorder %v1945, 8.507059e+37
        %v1947 = vand.u32 %v1690, 2147483648
        %v1948 = vor.u32 1.1754944e-38, %v1947
        %v1949 = vsel %vm1946, %v1948, %v1944
        %v1950 = vmul.f32 1.0, %v1949
        %v1951 = vrcp.pop %v1691
        %v1952 = vmul.f32 %v1691, %v1951
        %v1953 = vsub.f32 1.0, %v1952
        %v1954 = vmul.f32 %v1951, %v1953
        %v1955 = vadd.f32 %v1951, %v1954
        %vm1956 = vweird.f32 %v1691
        %vm1957 = vweird.f32 %v1951
        %vm1958 = vmor %vm1956, %vm1957
        %v1959 = vsel %vm1958, %v1951, %v1955
        %v1960 = vand.u32 2147483647, %v1691
        %vm1961 = vcmp.eq.f32.partialorder %v1960, 8.507059e+37
        %v1962 = vand.u32 %v1691, 2147483648
        %v1963 = vor.u32 1.1754944e-38, %v1962
        %v1964 = vsel %vm1961, %v1963, %v1959
        %v1965 = vmul.f32 1.0, %v1964
        %v1966 = vrcp.pop %v1692
        %v1967 = vmul.f32 %v1692, %v1966
        %v1968 = vsub.f32 1.0, %v1967
        %v1969 = vmul.f32 %v1966, %v1968
        %v1970 = vadd.f32 %v1966, %v1969
        %vm1971 = vweird.f32 %v1692
        %vm1972 = vweird.f32 %v1966
        %vm1973 = vmor %vm1971, %vm1972
        %v1974 = vsel %vm1973, %v1966, %v1970
        %v1975 = vand.u32 2147483647, %v1692
        %vm1976 = vcmp.eq.f32.partialorder %v1975, 8.507059e+37
        %v1977 = vand.u32 %v1692, 2147483648
        %v1978 = vor.u32 1.1754944e-38, %v1977
        %v1979 = vsel %vm1976, %v1978, %v1974
        %v1980 = vmul.f32 1.0, %v1979
        %v1981 = vrcp.pop %v1693
        %v1982 = vmul.f32 %v1693, %v1981
        %v1983 = vsub.f32 1.0, %v1982
        %v1984 = vmul.f32 %v1981, %v1983
        %v1985 = vadd.f32 %v1981, %v1984
        %vm1986 = vweird.f32 %v1693
        %vm1987 = vweird.f32 %v1981
        %vm1988 = vmor %vm1986, %vm1987
        %v1989 = vsel %vm1988, %v1981, %v1985
        %v1990 = vand.u32 2147483647, %v1693
        %vm1991 = vcmp.eq.f32.partialorder %v1990, 8.507059e+37
        %v1992 = vand.u32 %v1693, 2147483648
        %v1993 = vor.u32 1.1754944e-38, %v1992
        %v1994 = vsel %vm1991, %v1993, %v1989
        %v1995 = vmul.f32 1.0, %v1994
        %v1996 = vrcp.pop %v1694
        %v1997 = vmul.f32 %v1694, %v1996
        %v1998 = vsub.f32 1.0, %v1997
        %v1999 = vmul.f32 %v1996, %v1998
        %v2000 = vadd.f32 %v1996, %v1999
        %vm2001 = vweird.f32 %v1694
        %vm2002 = vweird.f32 %v1996
        %vm2003 = vmor %vm2001, %vm2002
        %v2004 = vsel %vm2003, %v1996, %v2000
        %v2005 = vand.u32 2147483647, %v1694
        %vm2006 = vcmp.eq.f32.partialorder %v2005, 8.507059e+37
        %v2007 = vand.u32 %v1694, 2147483648
        %v2008 = vor.u32 1.1754944e-38, %v2007
        %v2009 = vsel %vm2006, %v2008, %v2004
        %v2010 = vmul.f32 1.0, %v2009
        %v2011 = vrcp.pop %v1695
        %v2012 = vmul.f32 %v1695, %v2011
        %v2013 = vsub.f32 1.0, %v2012
        %v2014 = vmul.f32 %v2011, %v2013
        %v2015 = vadd.f32 %v2011, %v2014
        %vm2016 = vweird.f32 %v1695
        %vm2017 = vweird.f32 %v2011
        %vm2018 = vmor %vm2016, %vm2017
        %v2019 = vsel %vm2018, %v2011, %v2015
        %v2020 = vand.u32 2147483647, %v1695
        %vm2021 = vcmp.eq.f32.partialorder %v2020, 8.507059e+37
        %v2022 = vand.u32 %v1695, 2147483648
        %v2023 = vor.u32 1.1754944e-38, %v2022
        %v2024 = vsel %vm2021, %v2023, %v2019
        %v2025 = vmul.f32 1.0, %v2024
        %v2026 = vrcp.pop %v1696
        %v2027 = vmul.f32 %v1696, %v2026
        %v2028 = vsub.f32 1.0, %v2027
        %v2029 = vmul.f32 %v2026, %v2028
        %v2030 = vadd.f32 %v2026, %v2029
        %vm2031 = vweird.f32 %v1696
        %vm2032 = vweird.f32 %v2026
        %vm2033 = vmor %vm2031, %vm2032
        %v2034 = vsel %vm2033, %v2026, %v2030
        %v2035 = vand.u32 2147483647, %v1696
        %vm2036 = vcmp.eq.f32.partialorder %v2035, 8.507059e+37
        %v2037 = vand.u32 %v1696, 2147483648
        %v2038 = vor.u32 1.1754944e-38, %v2037
        %v2039 = vsel %vm2036, %v2038, %v2034
        %v2040 = vmul.f32 1.0, %v2039
        %v2041 = vrcp.pop %v1697
        %v2042 = vmul.f32 %v1697, %v2041
        %v2043 = vsub.f32 1.0, %v2042
        %v2044 = vmul.f32 %v2041, %v2043
        %v2045 = vadd.f32 %v2041, %v2044
        %vm2046 = vweird.f32 %v1697
        %vm2047 = vweird.f32 %v2041
        %vm2048 = vmor %vm2046, %vm2047
        %v2049 = vsel %vm2048, %v2041, %v2045
        %v2050 = vand.u32 2147483647, %v1697
        %vm2051 = vcmp.eq.f32.partialorder %v2050, 8.507059e+37
        %v2052 = vand.u32 %v1697, 2147483648
        %v2053 = vor.u32 1.1754944e-38, %v2052
        %v2054 = vsel %vm2051, %v2053, %v2049
        %v2055 = vmul.f32 1.0, %v2054
        %v2056 = vrcp.pop %v1698
        %v2057 = vmul.f32 %v1698, %v2056
        %v2058 = vsub.f32 1.0, %v2057
        %v2059 = vmul.f32 %v2056, %v2058
        %v2060 = vadd.f32 %v2056, %v2059
        %vm2061 = vweird.f32 %v1698
        %vm2062 = vweird.f32 %v2056
        %vm2063 = vmor %vm2061, %vm2062
        %v2064 = vsel %vm2063, %v2056, %v2060
        %v2065 = vand.u32 2147483647, %v1698
        %vm2066 = vcmp.eq.f32.partialorder %v2065, 8.507059e+37
        %v2067 = vand.u32 %v1698, 2147483648
        %v2068 = vor.u32 1.1754944e-38, %v2067
        %v2069 = vsel %vm2066, %v2068, %v2064
        %v2070 = vmul.f32 1.0, %v2069
        %v2071 = vrcp.pop %v1699
        %v2072 = vmul.f32 %v1699, %v2071
        %v2073 = vsub.f32 1.0, %v2072
        %v2074 = vmul.f32 %v2071, %v2073
        %v2075 = vadd.f32 %v2071, %v2074
        %vm2076 = vweird.f32 %v1699
        %vm2077 = vweird.f32 %v2071
        %vm2078 = vmor %vm2076, %vm2077
        %v2079 = vsel %vm2078, %v2071, %v2075
        %v2080 = vand.u32 2147483647, %v1699
        %vm2081 = vcmp.eq.f32.partialorder %v2080, 8.507059e+37
        %v2082 = vand.u32 %v1699, 2147483648
        %v2083 = vor.u32 1.1754944e-38, %v2082
        %v2084 = vsel %vm2081, %v2083, %v2079
        %v2085 = vmul.f32 1.0, %v2084
        %v2086 = vrcp.pop %v1700
        %v2087 = vmul.f32 %v1700, %v2086
        %v2088 = vsub.f32 1.0, %v2087
        %v2089 = vmul.f32 %v2086, %v2088
        %v2090 = vadd.f32 %v2086, %v2089
        %vm2091 = vweird.f32 %v1700
        %vm2092 = vweird.f32 %v2086
        %vm2093 = vmor %vm2091, %vm2092
        %v2094 = vsel %vm2093, %v2086, %v2090
        %v2095 = vand.u32 2147483647, %v1700
        %vm2096 = vcmp.eq.f32.partialorder %v2095, 8.507059e+37
        %v2097 = vand.u32 %v1700, 2147483648
        %v2098 = vor.u32 1.1754944e-38, %v2097
        %v2099 = vsel %vm2096, %v2098, %v2094
        %v2100 = vmul.f32 1.0, %v2099
        %v2101 = vrcp.pop %v1701
        %v2102 = vmul.f32 %v1701, %v2101
        %v2103 = vsub.f32 1.0, %v2102
        %v2104 = vmul.f32 %v2101, %v2103
        %v2105 = vadd.f32 %v2101, %v2104
        %vm2106 = vweird.f32 %v1701
        %vm2107 = vweird.f32 %v2101
        %vm2108 = vmor %vm2106, %vm2107
        %v2109 = vsel %vm2108, %v2101, %v2105
        %v2110 = vand.u32 2147483647, %v1701
        %vm2111 = vcmp.eq.f32.partialorder %v2110, 8.507059e+37
        %v2112 = vand.u32 %v1701, 2147483648
        %v2113 = vor.u32 1.1754944e-38, %v2112
        %v2114 = vsel %vm2111, %v2113, %v2109
        %v2115 = vmul.f32 1.0, %v2114
        %v2116 = vrcp.pop %v1702
        %v2117 = vmul.f32 %v1702, %v2116
        %v2118 = vsub.f32 1.0, %v2117
        %v2119 = vmul.f32 %v2116, %v2118
        %v2120 = vadd.f32 %v2116, %v2119
        %vm2121 = vweird.f32 %v1702
        %vm2122 = vweird.f32 %v2116
        %vm2123 = vmor %vm2121, %vm2122
        %v2124 = vsel %vm2123, %v2116, %v2120
        %v2125 = vand.u32 2147483647, %v1702
        %vm2126 = vcmp.eq.f32.partialorder %v2125, 8.507059e+37
        %v2127 = vand.u32 %v1702, 2147483648
        %v2128 = vor.u32 1.1754944e-38, %v2127
        %v2129 = vsel %vm2126, %v2128, %v2124
        %v2130 = vmul.f32 1.0, %v2129
        %v2131 = vrcp.pop %v1703
        %v2132 = vmul.f32 %v1703, %v2131
        %v2133 = vsub.f32 1.0, %v2132
        %v2134 = vmul.f32 %v2131, %v2133
        %v2135 = vadd.f32 %v2131, %v2134
        %vm2136 = vweird.f32 %v1703
        %vm2137 = vweird.f32 %v2131
        %vm2138 = vmor %vm2136, %vm2137
        %v2139 = vsel %vm2138, %v2131, %v2135
        %v2140 = vand.u32 2147483647, %v1703
        %vm2141 = vcmp.eq.f32.partialorder %v2140, 8.507059e+37
        %v2142 = vand.u32 %v1703, 2147483648
        %v2143 = vor.u32 1.1754944e-38, %v2142
        %v2144 = vsel %vm2141, %v2143, %v2139
        %v2145 = vmul.f32 1.0, %v2144
        %v2146 = vrcp.pop %v1704
        %v2147 = vmul.f32 %v1704, %v2146
        %v2148 = vsub.f32 1.0, %v2147
        %v2149 = vmul.f32 %v2146, %v2148
        %v2150 = vadd.f32 %v2146, %v2149
        %vm2151 = vweird.f32 %v1704
        %vm2152 = vweird.f32 %v2146
        %vm2153 = vmor %vm2151, %vm2152
        %v2154 = vsel %vm2153, %v2146, %v2150
        %v2155 = vand.u32 2147483647, %v1704
        %vm2156 = vcmp.eq.f32.partialorder %v2155, 8.507059e+37
        %v2157 = vand.u32 %v1704, 2147483648
        %v2158 = vor.u32 1.1754944e-38, %v2157
        %v2159 = vsel %vm2156, %v2158, %v2154
        %v2160 = vmul.f32 1.0, %v2159
        %v2161 = vrcp.pop %v1705
        %v2162 = vmul.f32 %v1705, %v2161
        %v2163 = vsub.f32 1.0, %v2162
        %v2164 = vmul.f32 %v2161, %v2163
        %v2165 = vadd.f32 %v2161, %v2164
        %vm2166 = vweird.f32 %v1705
        %vm2167 = vweird.f32 %v2161
        %vm2168 = vmor %vm2166, %vm2167
        %v2169 = vsel %vm2168, %v2161, %v2165
        %v2170 = vand.u32 2147483647, %v1705
        %vm2171 = vcmp.eq.f32.partialorder %v2170, 8.507059e+37
        %v2172 = vand.u32 %v1705, 2147483648
        %v2173 = vor.u32 1.1754944e-38, %v2172
        %v2174 = vsel %vm2171, %v2173, %v2169
        %v2175 = vmul.f32 1.0, %v2174
        %v2176 = vrcp.pop %v1706
        %v2177 = vmul.f32 %v1706, %v2176
        %v2178 = vsub.f32 1.0, %v2177
        %v2179 = vmul.f32 %v2176, %v2178
        %v2180 = vadd.f32 %v2176, %v2179
        %vm2181 = vweird.f32 %v1706
        %vm2182 = vweird.f32 %v2176
        %vm2183 = vmor %vm2181, %vm2182
        %v2184 = vsel %vm2183, %v2176, %v2180
        %v2185 = vand.u32 2147483647, %v1706
        %vm2186 = vcmp.eq.f32.partialorder %v2185, 8.507059e+37
        %v2187 = vand.u32 %v1706, 2147483648
        %v2188 = vor.u32 1.1754944e-38, %v2187
        %v2189 = vsel %vm2186, %v2188, %v2184
        %v2190 = vmul.f32 1.0, %v2189
        %v2191 = vrcp.pop %v1707
        %v2192 = vmul.f32 %v1707, %v2191
        %v2193 = vsub.f32 1.0, %v2192
        %v2194 = vmul.f32 %v2191, %v2193
        %v2195 = vadd.f32 %v2191, %v2194
        %vm2196 = vweird.f32 %v1707
        %vm2197 = vweird.f32 %v2191
        %vm2198 = vmor %vm2196, %vm2197
        %v2199 = vsel %vm2198, %v2191, %v2195
        %v2200 = vand.u32 2147483647, %v1707
        %vm2201 = vcmp.eq.f32.partialorder %v2200, 8.507059e+37
        %v2202 = vand.u32 %v1707, 2147483648
        %v2203 = vor.u32 1.1754944e-38, %v2202
        %v2204 = vsel %vm2201, %v2203, %v2199
        %v2205 = vmul.f32 1.0, %v2204
        %v2206 = vrcp.pop %v1708
        %v2207 = vmul.f32 %v1708, %v2206
        %v2208 = vsub.f32 1.0, %v2207
        %v2209 = vmul.f32 %v2206, %v2208
        %v2210 = vadd.f32 %v2206, %v2209
        %vm2211 = vweird.f32 %v1708
        %vm2212 = vweird.f32 %v2206
        %vm2213 = vmor %vm2211, %vm2212
        %v2214 = vsel %vm2213, %v2206, %v2210
        %v2215 = vand.u32 2147483647, %v1708
        %vm2216 = vcmp.eq.f32.partialorder %v2215, 8.507059e+37
        %v2217 = vand.u32 %v1708, 2147483648
        %v2218 = vor.u32 1.1754944e-38, %v2217
        %v2219 = vsel %vm2216, %v2218, %v2214
        %v2220 = vmul.f32 1.0, %v2219
        %v2221 = vrcp.pop %v1709
        %v2222 = vmul.f32 %v1709, %v2221
        %v2223 = vsub.f32 1.0, %v2222
        %v2224 = vmul.f32 %v2221, %v2223
        %v2225 = vadd.f32 %v2221, %v2224
        %vm2226 = vweird.f32 %v1709
        %vm2227 = vweird.f32 %v2221
        %vm2228 = vmor %vm2226, %vm2227
        %v2229 = vsel %vm2228, %v2221, %v2225
        %v2230 = vand.u32 2147483647, %v1709
        %vm2231 = vcmp.eq.f32.partialorder %v2230, 8.507059e+37
        %v2232 = vand.u32 %v1709, 2147483648
        %v2233 = vor.u32 1.1754944e-38, %v2232
        %v2234 = vsel %vm2231, %v2233, %v2229
        %v2235 = vmul.f32 1.0, %v2234
        %v2236 = vrcp.pop %v1710
        %v2237 = vmul.f32 %v1710, %v2236
        %v2238 = vsub.f32 1.0, %v2237
        %v2239 = vmul.f32 %v2236, %v2238
        %v2240 = vadd.f32 %v2236, %v2239
        %vm2241 = vweird.f32 %v1710
        %vm2242 = vweird.f32 %v2236
        %vm2243 = vmor %vm2241, %vm2242
        %v2244 = vsel %vm2243, %v2236, %v2240
        %v2245 = vand.u32 2147483647, %v1710
        %vm2246 = vcmp.eq.f32.partialorder %v2245, 8.507059e+37
        %v2247 = vand.u32 %v1710, 2147483648
        %v2248 = vor.u32 1.1754944e-38, %v2247
        %v2249 = vsel %vm2246, %v2248, %v2244
        %v2250 = vmul.f32 1.0, %v2249
        %v2251 = vrcp.pop %v1711
        %v2252 = vmul.f32 %v1711, %v2251
        %v2253 = vsub.f32 1.0, %v2252
        %v2254 = vmul.f32 %v2251, %v2253
        %v2255 = vadd.f32 %v2251, %v2254
        %vm2256 = vweird.f32 %v1711
        %vm2257 = vweird.f32 %v2251
        %vm2258 = vmor %vm2256, %vm2257
        %v2259 = vsel %vm2258, %v2251, %v2255
        %v2260 = vand.u32 2147483647, %v1711
        %vm2261 = vcmp.eq.f32.partialorder %v2260, 8.507059e+37
        %v2262 = vand.u32 %v1711, 2147483648
        %v2263 = vor.u32 1.1754944e-38, %v2262
        %v2264 = vsel %vm2261, %v2263, %v2259
        %v2265 = vmul.f32 1.0, %v2264
        %v2266 = vrcp.pop %v1712
        %v2267 = vmul.f32 %v1712, %v2266
        %v2268 = vsub.f32 1.0, %v2267
        %v2269 = vmul.f32 %v2266, %v2268
        %v2270 = vadd.f32 %v2266, %v2269
        %vm2271 = vweird.f32 %v1712
        %vm2272 = vweird.f32 %v2266
        %vm2273 = vmor %vm2271, %vm2272
        %v2274 = vsel %vm2273, %v2266, %v2270
        %v2275 = vand.u32 2147483647, %v1712
        %vm2276 = vcmp.eq.f32.partialorder %v2275, 8.507059e+37
        %v2277 = vand.u32 %v1712, 2147483648
        %v2278 = vor.u32 1.1754944e-38, %v2277
        %v2279 = vsel %vm2276, %v2278, %v2274
        %v2280 = vmul.f32 1.0, %v2279
        %v2281 = vrcp.pop %v1713
        %v2282 = vmul.f32 %v1713, %v2281
        %v2283 = vsub.f32 1.0, %v2282
        %v2284 = vmul.f32 %v2281, %v2283
        %v2285 = vadd.f32 %v2281, %v2284
        %vm2286 = vweird.f32 %v1713
        %vm2287 = vweird.f32 %v2281
        %vm2288 = vmor %vm2286, %vm2287
        %v2289 = vsel %vm2288, %v2281, %v2285
        %v2290 = vand.u32 2147483647, %v1713
        %vm2291 = vcmp.eq.f32.partialorder %v2290, 8.507059e+37
        %v2292 = vand.u32 %v1713, 2147483648
        %v2293 = vor.u32 1.1754944e-38, %v2292
        %v2294 = vsel %vm2291, %v2293, %v2289
        %v2295 = vmul.f32 1.0, %v2294
        %v2296 = vrcp.pop %v1714
        %v2297 = vmul.f32 %v1714, %v2296
        %v2298 = vsub.f32 1.0, %v2297
        %v2299 = vmul.f32 %v2296, %v2298
        %v2300 = vadd.f32 %v2296, %v2299
        %vm2301 = vweird.f32 %v1714
        %vm2302 = vweird.f32 %v2296
        %vm2303 = vmor %vm2301, %vm2302
        %v2304 = vsel %vm2303, %v2296, %v2300
        %v2305 = vand.u32 2147483647, %v1714
        %vm2306 = vcmp.eq.f32.partialorder %v2305, 8.507059e+37
        %v2307 = vand.u32 %v1714, 2147483648
        %v2308 = vor.u32 1.1754944e-38, %v2307
        %v2309 = vsel %vm2306, %v2308, %v2304
        %v2310 = vmul.f32 1.0, %v2309
        %v2311 = vrcp.pop %v1715
        %v2312 = vmul.f32 %v1715, %v2311
        %v2313 = vsub.f32 1.0, %v2312
        %v2314 = vmul.f32 %v2311, %v2313
        %v2315 = vadd.f32 %v2311, %v2314
        %vm2316 = vweird.f32 %v1715
        %vm2317 = vweird.f32 %v2311
        %vm2318 = vmor %vm2316, %vm2317
        %v2319 = vsel %vm2318, %v2311, %v2315
        %v2320 = vand.u32 2147483647, %v1715
        %vm2321 = vcmp.eq.f32.partialorder %v2320, 8.507059e+37
        %v2322 = vand.u32 %v1715, 2147483648
        %v2323 = vor.u32 1.1754944e-38, %v2322
        %v2324 = vsel %vm2321, %v2323, %v2319
        %v2325 = vmul.f32 1.0, %v2324
        %v2326 = vrcp.pop %v1716
        %v2327 = vmul.f32 %v1716, %v2326
        %v2328 = vsub.f32 1.0, %v2327
        %v2329 = vmul.f32 %v2326, %v2328
        %v2330 = vadd.f32 %v2326, %v2329
        %vm2331 = vweird.f32 %v1716
        %vm2332 = vweird.f32 %v2326
        %vm2333 = vmor %vm2331, %vm2332
        %v2334 = vsel %vm2333, %v2326, %v2330
        %v2335 = vand.u32 2147483647, %v1716
        %vm2336 = vcmp.eq.f32.partialorder %v2335, 8.507059e+37
        %v2337 = vand.u32 %v1716, 2147483648
        %v2338 = vor.u32 1.1754944e-38, %v2337
        %v2339 = vsel %vm2336, %v2338, %v2334
        %v2340 = vmul.f32 1.0, %v2339
        %v2341 = vrcp.pop %v1717
        %v2342 = vmul.f32 %v1717, %v2341
        %v2343 = vsub.f32 1.0, %v2342
        %v2344 = vmul.f32 %v2341, %v2343
        %v2345 = vadd.f32 %v2341, %v2344
        %vm2346 = vweird.f32 %v1717
        %vm2347 = vweird.f32 %v2341
        %vm2348 = vmor %vm2346, %vm2347
        %v2349 = vsel %vm2348, %v2341, %v2345
        %v2350 = vand.u32 2147483647, %v1717
        %vm2351 = vcmp.eq.f32.partialorder %v2350, 8.507059e+37
        %v2352 = vand.u32 %v1717, 2147483648
        %v2353 = vor.u32 1.1754944e-38, %v2352
        %v2354 = vsel %vm2351, %v2353, %v2349
        %v2355 = vmul.f32 1.0, %v2354
        %v2356 = vrcp.pop %v1718
        %v2357 = vmul.f32 %v1718, %v2356
        %v2358 = vsub.f32 1.0, %v2357
        %v2359 = vmul.f32 %v2356, %v2358
        %v2360 = vadd.f32 %v2356, %v2359
        %vm2361 = vweird.f32 %v1718
        %vm2362 = vweird.f32 %v2356
        %vm2363 = vmor %vm2361, %vm2362
        %v2364 = vsel %vm2363, %v2356, %v2360
        %v2365 = vand.u32 2147483647, %v1718
        %vm2366 = vcmp.eq.f32.partialorder %v2365, 8.507059e+37
        %v2367 = vand.u32 %v1718, 2147483648
        %v2368 = vor.u32 1.1754944e-38, %v2367
        %v2369 = vsel %vm2366, %v2368, %v2364
        %v2370 = vmul.f32 1.0, %v2369
        %v2371 = vrcp.pop %v1719
        %v2372 = vmul.f32 %v1719, %v2371
        %v2373 = vsub.f32 1.0, %v2372
        %v2374 = vmul.f32 %v2371, %v2373
        %v2375 = vadd.f32 %v2371, %v2374
        %vm2376 = vweird.f32 %v1719
        %vm2377 = vweird.f32 %v2371
        %vm2378 = vmor %vm2376, %vm2377
        %v2379 = vsel %vm2378, %v2371, %v2375
        %v2380 = vand.u32 2147483647, %v1719
        %vm2381 = vcmp.eq.f32.partialorder %v2380, 8.507059e+37
        %v2382 = vand.u32 %v1719, 2147483648
        %v2383 = vor.u32 1.1754944e-38, %v2382
        %v2384 = vsel %vm2381, %v2383, %v2379
        %v2385 = vmul.f32 1.0, %v2384
        %v2386 = vrcp.pop %v1720
        %v2387 = vmul.f32 %v1720, %v2386
        %v2388 = vsub.f32 1.0, %v2387
        %v2389 = vmul.f32 %v2386, %v2388
        %v2390 = vadd.f32 %v2386, %v2389
        %vm2391 = vweird.f32 %v1720
        %vm2392 = vweird.f32 %v2386
        %vm2393 = vmor %vm2391, %vm2392
        %v2394 = vsel %vm2393, %v2386, %v2390
        %v2395 = vand.u32 2147483647, %v1720
        %vm2396 = vcmp.eq.f32.partialorder %v2395, 8.507059e+37
        %v2397 = vand.u32 %v1720, 2147483648
        %v2398 = vor.u32 1.1754944e-38, %v2397
        %v2399 = vsel %vm2396, %v2398, %v2394
        %v2400 = vmul.f32 1.0, %v2399
        %v2401 = vrcp.pop %v1721
        %v2402 = vmul.f32 %v1721, %v2401
        %v2403 = vsub.f32 1.0, %v2402
        %v2404 = vmul.f32 %v2401, %v2403
        %v2405 = vadd.f32 %v2401, %v2404
        %vm2406 = vweird.f32 %v1721
        %vm2407 = vweird.f32 %v2401
        %vm2408 = vmor %vm2406, %vm2407
        %v2409 = vsel %vm2408, %v2401, %v2405
        %v2410 = vand.u32 2147483647, %v1721
        %vm2411 = vcmp.eq.f32.partialorder %v2410, 8.507059e+37
        %v2412 = vand.u32 %v1721, 2147483648
        %v2413 = vor.u32 1.1754944e-38, %v2412
        %v2414 = vsel %vm2411, %v2413, %v2409
        %v2415 = vmul.f32 1.0, %v2414
        %v2416 = vrcp.pop %v1722
        %v2417 = vmul.f32 %v1722, %v2416
        %v2418 = vsub.f32 1.0, %v2417
        %v2419 = vmul.f32 %v2416, %v2418
        %v2420 = vadd.f32 %v2416, %v2419
        %vm2421 = vweird.f32 %v1722
        %vm2422 = vweird.f32 %v2416
        %vm2423 = vmor %vm2421, %vm2422
        %v2424 = vsel %vm2423, %v2416, %v2420
        %v2425 = vand.u32 2147483647, %v1722
        %vm2426 = vcmp.eq.f32.partialorder %v2425, 8.507059e+37
        %v2427 = vand.u32 %v1722, 2147483648
        %v2428 = vor.u32 1.1754944e-38, %v2427
        %v2429 = vsel %vm2426, %v2428, %v2424
        %v2430 = vmul.f32 1.0, %v2429
        %v2431 = vrcp.pop %v1723
        %v2432 = vmul.f32 %v1723, %v2431
        %v2433 = vsub.f32 1.0, %v2432
        %v2434 = vmul.f32 %v2431, %v2433
        %v2435 = vadd.f32 %v2431, %v2434
        %vm2436 = vweird.f32 %v1723
        %vm2437 = vweird.f32 %v2431
        %vm2438 = vmor %vm2436, %vm2437
        %v2439 = vsel %vm2438, %v2431, %v2435
        %v2440 = vand.u32 2147483647, %v1723
        %vm2441 = vcmp.eq.f32.partialorder %v2440, 8.507059e+37
        %v2442 = vand.u32 %v1723, 2147483648
        %v2443 = vor.u32 1.1754944e-38, %v2442
        %v2444 = vsel %vm2441, %v2443, %v2439
        %v2445 = vmul.f32 1.0, %v2444
        %v2446 = vrcp.pop %v1724
        %v2447 = vmul.f32 %v1724, %v2446
        %v2448 = vsub.f32 1.0, %v2447
        %v2449 = vmul.f32 %v2446, %v2448
        %v2450 = vadd.f32 %v2446, %v2449
        %vm2451 = vweird.f32 %v1724
        %vm2452 = vweird.f32 %v2446
        %vm2453 = vmor %vm2451, %vm2452
        %v2454 = vsel %vm2453, %v2446, %v2450
        %v2455 = vand.u32 2147483647, %v1724
        %vm2456 = vcmp.eq.f32.partialorder %v2455, 8.507059e+37
        %v2457 = vand.u32 %v1724, 2147483648
        %v2458 = vor.u32 1.1754944e-38, %v2457
        %v2459 = vsel %vm2456, %v2458, %v2454
        %v2460 = vmul.f32 1.0, %v2459
        %v2461 = vrcp.pop %v1725
        %v2462 = vmul.f32 %v1725, %v2461
        %v2463 = vsub.f32 1.0, %v2462
        %v2464 = vmul.f32 %v2461, %v2463
        %v2465 = vadd.f32 %v2461, %v2464
        %vm2466 = vweird.f32 %v1725
        %vm2467 = vweird.f32 %v2461
        %vm2468 = vmor %vm2466, %vm2467
        %v2469 = vsel %vm2468, %v2461, %v2465
        %v2470 = vand.u32 2147483647, %v1725
        %vm2471 = vcmp.eq.f32.partialorder %v2470, 8.507059e+37
        %v2472 = vand.u32 %v1725, 2147483648
        %v2473 = vor.u32 1.1754944e-38, %v2472
        %v2474 = vsel %vm2471, %v2473, %v2469
        %v2475 = vmul.f32 1.0, %v2474
        %v2476 = vrcp.pop %v1726
        %v2477 = vmul.f32 %v1726, %v2476
        %v2478 = vsub.f32 1.0, %v2477
        %v2479 = vmul.f32 %v2476, %v2478
        %v2480 = vadd.f32 %v2476, %v2479
        %vm2481 = vweird.f32 %v1726
        %vm2482 = vweird.f32 %v2476
        %vm2483 = vmor %vm2481, %vm2482
        %v2484 = vsel %vm2483, %v2476, %v2480
        %v2485 = vand.u32 2147483647, %v1726
        %vm2486 = vcmp.eq.f32.partialorder %v2485, 8.507059e+37
        %v2487 = vand.u32 %v1726, 2147483648
        %v2488 = vor.u32 1.1754944e-38, %v2487
        %v2489 = vsel %vm2486, %v2488, %v2484
        %v2490 = vmul.f32 1.0, %v2489
        %v2491 = vrcp.pop %v1727
        %v2492 = vmul.f32 %v1727, %v2491
        %v2493 = vsub.f32 1.0, %v2492
        %v2494 = vmul.f32 %v2491, %v2493
        %v2495 = vadd.f32 %v2491, %v2494
        %vm2496 = vweird.f32 %v1727
        %vm2497 = vweird.f32 %v2491
        %vm2498 = vmor %vm2496, %vm2497
        %v2499 = vsel %vm2498, %v2491, %v2495
        %v2500 = vand.u32 2147483647, %v1727
        %vm2501 = vcmp.eq.f32.partialorder %v2500, 8.507059e+37
        %v2502 = vand.u32 %v1727, 2147483648
        %v2503 = vor.u32 1.1754944e-38, %v2502
        %v2504 = vsel %vm2501, %v2503, %v2499
        %v2505 = vmul.f32 1.0, %v2504
        %v2506 = vrcp.pop %v1728
        %v2507 = vmul.f32 %v1728, %v2506
        %v2508 = vsub.f32 1.0, %v2507
        %v2509 = vmul.f32 %v2506, %v2508
        %v2510 = vadd.f32 %v2506, %v2509
        %vm2511 = vweird.f32 %v1728
        %vm2512 = vweird.f32 %v2506
        %vm2513 = vmor %vm2511, %vm2512
        %v2514 = vsel %vm2513, %v2506, %v2510
        %v2515 = vand.u32 2147483647, %v1728
        %vm2516 = vcmp.eq.f32.partialorder %v2515, 8.507059e+37
        %v2517 = vand.u32 %v1728, 2147483648
        %v2518 = vor.u32 1.1754944e-38, %v2517
        %v2519 = vsel %vm2516, %v2518, %v2514
        %v2520 = vmul.f32 1.0, %v2519
        %v2521 = vrcp.pop %v1729
        %v2522 = vmul.f32 %v1729, %v2521
        %v2523 = vsub.f32 1.0, %v2522
        %v2524 = vmul.f32 %v2521, %v2523
        %v2525 = vadd.f32 %v2521, %v2524
        %vm2526 = vweird.f32 %v1729
        %vm2527 = vweird.f32 %v2521
        %vm2528 = vmor %vm2526, %vm2527
        %v2529 = vsel %vm2528, %v2521, %v2525
        %v2530 = vand.u32 2147483647, %v1729
        %vm2531 = vcmp.eq.f32.partialorder %v2530, 8.507059e+37
        %v2532 = vand.u32 %v1729, 2147483648
        %v2533 = vor.u32 1.1754944e-38, %v2532
        %v2534 = vsel %vm2531, %v2533, %v2529
        %v2535 = vmul.f32 1.0, %v2534
        %v2536 = vrcp.pop %v1730
        %v2537 = vmul.f32 %v1730, %v2536
        %v2538 = vsub.f32 1.0, %v2537
        %v2539 = vmul.f32 %v2536, %v2538
        %v2540 = vadd.f32 %v2536, %v2539
        %vm2541 = vweird.f32 %v1730
        %vm2542 = vweird.f32 %v2536
        %vm2543 = vmor %vm2541, %vm2542
        %v2544 = vsel %vm2543, %v2536, %v2540
        %v2545 = vand.u32 2147483647, %v1730
        %vm2546 = vcmp.eq.f32.partialorder %v2545, 8.507059e+37
        %v2547 = vand.u32 %v1730, 2147483648
        %v2548 = vor.u32 1.1754944e-38, %v2547
        %v2549 = vsel %vm2546, %v2548, %v2544
        %v2550 = vmul.f32 1.0, %v2549
        %v2551 = vrcp.pop %v1731
        %v2552 = vmul.f32 %v1731, %v2551
        %v2553 = vsub.f32 1.0, %v2552
        %v2554 = vmul.f32 %v2551, %v2553
        %v2555 = vadd.f32 %v2551, %v2554
        %vm2556 = vweird.f32 %v1731
        %vm2557 = vweird.f32 %v2551
        %vm2558 = vmor %vm2556, %vm2557
        %v2559 = vsel %vm2558, %v2551, %v2555
        %v2560 = vand.u32 2147483647, %v1731
        %vm2561 = vcmp.eq.f32.partialorder %v2560, 8.507059e+37
        %v2562 = vand.u32 %v1731, 2147483648
        %v2563 = vor.u32 1.1754944e-38, %v2562
        %v2564 = vsel %vm2561, %v2563, %v2559
        %v2565 = vmul.f32 1.0, %v2564
        %v2566 = vrcp.pop %v1732
        %v2567 = vmul.f32 %v1732, %v2566
        %v2568 = vsub.f32 1.0, %v2567
        %v2569 = vmul.f32 %v2566, %v2568
        %v2570 = vadd.f32 %v2566, %v2569
        %vm2571 = vweird.f32 %v1732
        %vm2572 = vweird.f32 %v2566
        %vm2573 = vmor %vm2571, %vm2572
        %v2574 = vsel %vm2573, %v2566, %v2570
        %v2575 = vand.u32 2147483647, %v1732
        %vm2576 = vcmp.eq.f32.partialorder %v2575, 8.507059e+37
        %v2577 = vand.u32 %v1732, 2147483648
        %v2578 = vor.u32 1.1754944e-38, %v2577
        %v2579 = vsel %vm2576, %v2578, %v2574
        %v2580 = vmul.f32 1.0, %v2579
        %v2581 = vrcp.pop %v1733
        %v2582 = vmul.f32 %v1733, %v2581
        %v2583 = vsub.f32 1.0, %v2582
        %v2584 = vmul.f32 %v2581, %v2583
        %v2585 = vadd.f32 %v2581, %v2584
        %vm2586 = vweird.f32 %v1733
        %vm2587 = vweird.f32 %v2581
        %vm2588 = vmor %vm2586, %vm2587
        %v2589 = vsel %vm2588, %v2581, %v2585
        %v2590 = vand.u32 2147483647, %v1733
        %vm2591 = vcmp.eq.f32.partialorder %v2590, 8.507059e+37
        %v2592 = vand.u32 %v1733, 2147483648
        %v2593 = vor.u32 1.1754944e-38, %v2592
        %v2594 = vsel %vm2591, %v2593, %v2589
        %v2595 = vmul.f32 1.0, %v2594
        %v2596 = vrcp.pop %v1734
        %v2597 = vmul.f32 %v1734, %v2596
        %v2598 = vsub.f32 1.0, %v2597
        %v2599 = vmul.f32 %v2596, %v2598
        %v2600 = vadd.f32 %v2596, %v2599
        %vm2601 = vweird.f32 %v1734
        %vm2602 = vweird.f32 %v2596
        %vm2603 = vmor %vm2601, %vm2602
        %v2604 = vsel %vm2603, %v2596, %v2600
        %v2605 = vand.u32 2147483647, %v1734
        %vm2606 = vcmp.eq.f32.partialorder %v2605, 8.507059e+37
        %v2607 = vand.u32 %v1734, 2147483648
        %v2608 = vor.u32 1.1754944e-38, %v2607
        %v2609 = vsel %vm2606, %v2608, %v2604
        %v2610 = vmul.f32 1.0, %v2609
        %v2611 = vrcp.pop %v1735
        %v2612 = vmul.f32 %v1735, %v2611
        %v2613 = vsub.f32 1.0, %v2612
        %v2614 = vmul.f32 %v2611, %v2613
        %v2615 = vadd.f32 %v2611, %v2614
        %vm2616 = vweird.f32 %v1735
        %vm2617 = vweird.f32 %v2611
        %vm2618 = vmor %vm2616, %vm2617
        %v2619 = vsel %vm2618, %v2611, %v2615
        %v2620 = vand.u32 2147483647, %v1735
        %vm2621 = vcmp.eq.f32.partialorder %v2620, 8.507059e+37
        %v2622 = vand.u32 %v1735, 2147483648
        %v2623 = vor.u32 1.1754944e-38, %v2622
        %v2624 = vsel %vm2621, %v2623, %v2619
        %v2625 = vmul.f32 1.0, %v2624
        %v2626 = vrcp.pop %v1736
        %v2627 = vmul.f32 %v1736, %v2626
        %v2628 = vsub.f32 1.0, %v2627
        %v2629 = vmul.f32 %v2626, %v2628
        %v2630 = vadd.f32 %v2626, %v2629
        %vm2631 = vweird.f32 %v1736
        %vm2632 = vweird.f32 %v2626
        %vm2633 = vmor %vm2631, %vm2632
        %v2634 = vsel %vm2633, %v2626, %v2630
        %v2635 = vand.u32 2147483647, %v1736
        %vm2636 = vcmp.eq.f32.partialorder %v2635, 8.507059e+37
        %v2637 = vand.u32 %v1736, 2147483648
        %v2638 = vor.u32 1.1754944e-38, %v2637
        %v2639 = vsel %vm2636, %v2638, %v2634
        %v2640 = vmul.f32 1.0, %v2639
        %v2641 = vrcp.pop %v1737
        %v2642 = vmul.f32 %v1737, %v2641
        %v2643 = vsub.f32 1.0, %v2642
        %v2644 = vmul.f32 %v2641, %v2643
        %v2645 = vadd.f32 %v2641, %v2644
        %vm2646 = vweird.f32 %v1737
        %vm2647 = vweird.f32 %v2641
        %vm2648 = vmor %vm2646, %vm2647
        %v2649 = vsel %vm2648, %v2641, %v2645
        %v2650 = vand.u32 2147483647, %v1737
        %vm2651 = vcmp.eq.f32.partialorder %v2650, 8.507059e+37
        %v2652 = vand.u32 %v1737, 2147483648
        %v2653 = vor.u32 1.1754944e-38, %v2652
        %v2654 = vsel %vm2651, %v2653, %v2649
        %v2655 = vmul.f32 1.0, %v2654
        %v2656 = vrcp.pop %v1738
        %v2657 = vmul.f32 %v1738, %v2656
        %v2658 = vsub.f32 1.0, %v2657
        %v2659 = vmul.f32 %v2656, %v2658
        %v2660 = vadd.f32 %v2656, %v2659
        %vm2661 = vweird.f32 %v1738
        %vm2662 = vweird.f32 %v2656
        %vm2663 = vmor %vm2661, %vm2662
        %v2664 = vsel %vm2663, %v2656, %v2660
        %v2665 = vand.u32 2147483647, %v1738
        %vm2666 = vcmp.eq.f32.partialorder %v2665, 8.507059e+37
        %v2667 = vand.u32 %v1738, 2147483648
        %v2668 = vor.u32 1.1754944e-38, %v2667
        %v2669 = vsel %vm2666, %v2668, %v2664
        %v2670 = vmul.f32 1.0, %v2669
        %v2671 = vrcp.pop %v1739
        %v2672 = vmul.f32 %v1739, %v2671
        %v2673 = vsub.f32 1.0, %v2672
        %v2674 = vmul.f32 %v2671, %v2673
        %v2675 = vadd.f32 %v2671, %v2674
        %vm2676 = vweird.f32 %v1739
        %vm2677 = vweird.f32 %v2671
        %vm2678 = vmor %vm2676, %vm2677
        %v2679 = vsel %vm2678, %v2671, %v2675
        %v2680 = vand.u32 2147483647, %v1739
        %vm2681 = vcmp.eq.f32.partialorder %v2680, 8.507059e+37
        %v2682 = vand.u32 %v1739, 2147483648
        %v2683 = vor.u32 1.1754944e-38, %v2682
        %v2684 = vsel %vm2681, %v2683, %v2679
        %v2685 = vmul.f32 1.0, %v2684
        %v2686 = vrcp.pop %v1740
        %v2687 = vmul.f32 %v1740, %v2686
        %v2688 = vsub.f32 1.0, %v2687
        %v2689 = vmul.f32 %v2686, %v2688
        %v2690 = vadd.f32 %v2686, %v2689
        %vm2691 = vweird.f32 %v1740
        %vm2692 = vweird.f32 %v2686
        %vm2693 = vmor %vm2691, %vm2692
        %v2694 = vsel %vm2693, %v2686, %v2690
        %v2695 = vand.u32 2147483647, %v1740
        %vm2696 = vcmp.eq.f32.partialorder %v2695, 8.507059e+37
        %v2697 = vand.u32 %v1740, 2147483648
        %v2698 = vor.u32 1.1754944e-38, %v2697
        %v2699 = vsel %vm2696, %v2698, %v2694
        %v2700 = vmul.f32 1.0, %v2699
        %v2701 = vmul.f32 %v1317, %v1755
        %v2702 = vmul.f32 %v1406, %v1770
        %v2703 = vmul.f32 %v1319, %v1785
        %v2704 = vmul.f32 %v1408, %v1800
        %v2705 = vmul.f32 %v1322, %v1815
        %v2706 = vmul.f32 %v1411, %v1830
        %v2707 = vmul.f32 %v1324, %v1845
        %v2708 = vmul.f32 %v1413, %v1860
        %v2709 = vmul.f32 %v1327, %v1875
        %v2710 = vmul.f32 %v1416, %v1890
        %v2711 = vmul.f32 %v1329, %v1905
        %v2712 = vmul.f32 %v1418, %v1920
        %v2713 = vmul.f32 %v1332, %v1935
        %v2714 = vmul.f32 %v1421, %v1950
        %v2715 = vmul.f32 %v1334, %v1965
        %v2716 = vmul.f32 %v1423, %v1980
        %v2717 = vmul.f32 %v1337, %v1995
        %v2718 = vmul.f32 %v1426, %v2010
        %v2719 = vmul.f32 %v1339, %v2025
        %v2720 = vmul.f32 %v1428, %v2040
        %v2721 = vmul.f32 %v1342, %v2055
        %v2722 = vmul.f32 %v1431, %v2070
        %v2723 = vmul.f32 %v1344, %v2085
        %v2724 = vmul.f32 %v1433, %v2100
        %v2725 = vmul.f32 %v1347, %v2115
        %v2726 = vmul.f32 %v1436, %v2130
        %v2727 = vmul.f32 %v1349, %v2145
        %v2728 = vmul.f32 %v1438, %v2160
        %v2729 = vmul.f32 %v1352, %v2175
        %v2730 = vmul.f32 %v1441, %v2190
        %v2731 = vmul.f32 %v1354, %v2205
        %v2732 = vmul.f32 %v1443, %v2220
        %v2733 = vmul.f32 %v1357, %v2235
        %v2734 = vmul.f32 %v1446, %v2250
        %v2735 = vmul.f32 %v1359, %v2265
        %v2736 = vmul.f32 %v1448, %v2280
        %v2737 = vmul.f32 %v1362, %v2295
        %v2738 = vmul.f32 %v1451, %v2310
        %v2739 = vmul.f32 %v1364, %v2325
        %v2740 = vmul.f32 %v1453, %v2340
        %v2741 = vmul.f32 %v1367, %v2355
        %v2742 = vmul.f32 %v1456, %v2370
        %v2743 = vmul.f32 %v1369, %v2385
        %v2744 = vmul.f32 %v1458, %v2400
        %v2745 = vmul.f32 %v1372, %v2415
        %v2746 = vmul.f32 %v1461, %v2430
        %v2747 = vmul.f32 %v1374, %v2445
        %v2748 = vmul.f32 %v1463, %v2460
        %v2749 = vmul.f32 %v1377, %v2475
        %v2750 = vmul.f32 %v1466, %v2490
        %v2751 = vmul.f32 %v1379, %v2505
        %v2752 = vmul.f32 %v1468, %v2520
        %v2753 = vmul.f32 %v1382, %v2535
        %v2754 = vmul.f32 %v1471, %v2550
        %v2755 = vmul.f32 %v1384, %v2565
        %v2756 = vmul.f32 %v1473, %v2580
        %v2757 = vmul.f32 %v1387, %v2595
        %v2758 = vmul.f32 %v1476, %v2610
        %v2759 = vmul.f32 %v1389, %v2625
        %v2760 = vmul.f32 %v1478, %v2640
        %v2761 = vmul.f32 %v1392, %v2655
        %v2762 = vmul.f32 %v1481, %v2670
        %v2763 = vmul.f32 %v1394, %v2685
        %v2764 = vmul.f32 %v1483, %v2700
        %v2765 = vpack.c.bf16 %v2703, %v2701
        %v2766 = vpack.c.bf16 %v2704, %v2702
        %v2767 = vpack.c.bf16 %v2707, %v2705
        %v2768 = vpack.c.bf16 %v2708, %v2706
        %v2769 = vpack.c.bf16 %v2711, %v2709
        %v2770 = vpack.c.bf16 %v2712, %v2710
        %v2771 = vpack.c.bf16 %v2715, %v2713
        %v2772 = vpack.c.bf16 %v2716, %v2714
        %v2773 = vpack.c.bf16 %v2719, %v2717
        %v2774 = vpack.c.bf16 %v2720, %v2718
        %v2775 = vpack.c.bf16 %v2723, %v2721
        %v2776 = vpack.c.bf16 %v2724, %v2722
        %v2777 = vpack.c.bf16 %v2727, %v2725
        %v2778 = vpack.c.bf16 %v2728, %v2726
        %v2779 = vpack.c.bf16 %v2731, %v2729
        %v2780 = vpack.c.bf16 %v2732, %v2730
        %v2781 = vpack.c.bf16 %v2735, %v2733
        %v2782 = vpack.c.bf16 %v2736, %v2734
        %v2783 = vpack.c.bf16 %v2739, %v2737
        %v2784 = vpack.c.bf16 %v2740, %v2738
        %v2785 = vpack.c.bf16 %v2743, %v2741
        %v2786 = vpack.c.bf16 %v2744, %v2742
        %v2787 = vpack.c.bf16 %v2747, %v2745
        %v2788 = vpack.c.bf16 %v2748, %v2746
        %v2789 = vpack.c.bf16 %v2751, %v2749
        %v2790 = vpack.c.bf16 %v2752, %v2750
        %v2791 = vpack.c.bf16 %v2755, %v2753
        %v2792 = vpack.c.bf16 %v2756, %v2754
        %v2793 = vpack.c.bf16 %v2759, %v2757
        %v2794 = vpack.c.bf16 %v2760, %v2758
        %v2795 = vpack.c.bf16 %v2763, %v2761
        %v2796 = vpack.c.bf16 %v2764, %v2762
        %v2797 = vld [vmem:[#allocation8] sm:$0xf]
        %v2798 = vld [vmem:[#allocation8 + $0x4] sm:$0xf]
        %v2799 = vld [vmem:[#allocation8 + $0x8] sm:$0xf]
        %v2800 = vld [vmem:[#allocation8 + $0xc] sm:$0xf]
        %v2801 = vld [vmem:[#allocation8 + $0x10] sm:$0xf]
        %v2802 = vld [vmem:[#allocation8 + $0x14] sm:$0xf]
        %v2803 = vld [vmem:[#allocation8 + $0x18] sm:$0xf]
        %v2804 = vld [vmem:[#allocation8 + $0x1c] sm:$0xf]
        %v2805 = vld [vmem:[#allocation8 + $0x20] sm:$0xf]
        %v2806 = vld [vmem:[#allocation8 + $0x24] sm:$0xf]
        %v2807 = vld [vmem:[#allocation8 + $0x28] sm:$0xf]
        %v2808 = vld [vmem:[#allocation8 + $0x2c] sm:$0xf]
        %v2809 = vld [vmem:[#allocation8 + $0x30] sm:$0xf]
        %v2810 = vld [vmem:[#allocation8 + $0x34] sm:$0xf]
        %v2811 = vld [vmem:[#allocation8 + $0x38] sm:$0xf]
        %v2812 = vld [vmem:[#allocation8 + $0x3c] sm:$0xf]
        %v2813 = vld [vmem:[#allocation8 + $0x40] sm:$0xf]
        %v2814 = vld [vmem:[#allocation8 + $0x44] sm:$0xf]
        %v2815 = vld [vmem:[#allocation8 + $0x48] sm:$0xf]
        %v2816 = vld [vmem:[#allocation8 + $0x4c] sm:$0xf]
        %v2817 = vld [vmem:[#allocation8 + $0x50] sm:$0xf]
        %v2818 = vld [vmem:[#allocation8 + $0x54] sm:$0xf]
        %v2819 = vld [vmem:[#allocation8 + $0x58] sm:$0xf]
        %v2820 = vld [vmem:[#allocation8 + $0x5c] sm:$0xf]
        %v2821 = vld [vmem:[#allocation8 + $0x60] sm:$0xf]
        %v2822 = vld [vmem:[#allocation8 + $0x64] sm:$0xf]
        %v2823 = vld [vmem:[#allocation8 + $0x68] sm:$0xf]
        %v2824 = vld [vmem:[#allocation8 + $0x6c] sm:$0xf]
        %v2825 = vld [vmem:[#allocation8 + $0x70] sm:$0xf]
        %v2826 = vld [vmem:[#allocation8 + $0x74] sm:$0xf]
        %v2827 = vld [vmem:[#allocation8 + $0x78] sm:$0xf]
        %v2828 = vld [vmem:[#allocation8 + $0x7c] sm:$0xf]
        %v2829 = vld [vmem:[%s6] sm:$0x1]
        %v2831 = vperm.slane %v2829, 0
        %v2865 = vunpack.c.l.b16 %v2797
        %v2866 = vunpack.c.l.b16 %v2798
        %v2867 = vunpack.c.l.b16 %v2799
        %v2868 = vunpack.c.l.b16 %v2800
        %v2869 = vunpack.c.l.b16 %v2801
        %v2870 = vunpack.c.l.b16 %v2802
        %v2871 = vunpack.c.l.b16 %v2803
        %v2872 = vunpack.c.l.b16 %v2804
        %v2873 = vunpack.c.l.b16 %v2805
        %v2874 = vunpack.c.l.b16 %v2806
        %v2875 = vunpack.c.l.b16 %v2807
        %v2876 = vunpack.c.l.b16 %v2808
        %v2877 = vunpack.c.l.b16 %v2809
        %v2878 = vunpack.c.l.b16 %v2810
        %v2879 = vunpack.c.l.b16 %v2811
        %v2880 = vunpack.c.l.b16 %v2812
        %v2881 = vunpack.c.l.b16 %v2813
        %v2882 = vunpack.c.l.b16 %v2814
        %v2883 = vunpack.c.l.b16 %v2815
        %v2884 = vunpack.c.l.b16 %v2816
        %v2885 = vunpack.c.l.b16 %v2817
        %v2886 = vunpack.c.l.b16 %v2818
        %v2887 = vunpack.c.l.b16 %v2819
        %v2888 = vunpack.c.l.b16 %v2820
        %v2889 = vunpack.c.l.b16 %v2821
        %v2890 = vunpack.c.l.b16 %v2822
        %v2891 = vunpack.c.l.b16 %v2823
        %v2892 = vunpack.c.l.b16 %v2824
        %v2893 = vunpack.c.l.b16 %v2825
        %v2894 = vunpack.c.l.b16 %v2826
        %v2895 = vunpack.c.l.b16 %v2827
        %v2896 = vunpack.c.l.b16 %v2828
        %v2897 = vpack.c.b16 %v2866, %v2865
        %v2898 = vpack.c.b16 %v2868, %v2867
        %v2899 = vpack.c.b16 %v2870, %v2869
        %v2900 = vpack.c.b16 %v2872, %v2871
        %v2901 = vpack.c.b16 %v2874, %v2873
        %v2902 = vpack.c.b16 %v2876, %v2875
        %v2903 = vpack.c.b16 %v2878, %v2877
        %v2904 = vpack.c.b16 %v2880, %v2879
        %v2905 = vpack.c.b16 %v2882, %v2881
        %v2906 = vpack.c.b16 %v2884, %v2883
        %v2907 = vpack.c.b16 %v2886, %v2885
        %v2908 = vpack.c.b16 %v2888, %v2887
        %v2909 = vpack.c.b16 %v2890, %v2889
        %v2910 = vpack.c.b16 %v2892, %v2891
        %v2911 = vpack.c.b16 %v2894, %v2893
        %v2912 = vpack.c.b16 %v2896, %v2895
        %2929 = vmatpush.bf16.msra.mxu0 %v2904
        %2930 = vmatpush.bf16.msra.mxu0 %v2903
        %2931 = vmatpush.bf16.msra.mxu0 %v2902
        %2932 = vmatpush.bf16.msra.mxu0 %v2901
        %2933 = vmatpush.bf16.msra.mxu0 %v2900
        %2934 = vmatpush.bf16.msra.mxu0 %v2899
        %2935 = vmatpush.bf16.msra.mxu0 %v2898
        %2936 = vmatpush.bf16.msra.mxu0 %v2897
        %2937 = vmatmul.bf16.gmra.mxu0 %v2765
        %v2938 = vpop.f32.mrf.mxu0
        %v2939 = vadd.f32 %v2831, %v2938
        %v2940 = vpop.f32.mrf.mxu0
        %v2941 = vadd.f32 %v2831, %v2940
        %2942 = vmatmul.bf16.gmra.mxu0 %v2767
        %v2943 = vpop.f32.mrf.mxu0
        %v2944 = vadd.f32 %v2831, %v2943
        %v2945 = vpop.f32.mrf.mxu0
        %v2946 = vadd.f32 %v2831, %v2945
        %2947 = vmatmul.bf16.gmra.mxu0 %v2769
        %v2948 = vpop.f32.mrf.mxu0
        %v2949 = vadd.f32 %v2831, %v2948
        %v2950 = vpop.f32.mrf.mxu0
        %v2951 = vadd.f32 %v2831, %v2950
        %2952 = vmatmul.bf16.gmra.mxu0 %v2771
        %v2953 = vpop.f32.mrf.mxu0
        %v2954 = vadd.f32 %v2831, %v2953
        %v2955 = vpop.f32.mrf.mxu0
        %v2956 = vadd.f32 %v2831, %v2955
        %2957 = vmatmul.bf16.gmra.mxu0 %v2773
        %v2958 = vpop.f32.mrf.mxu0
        %v2959 = vadd.f32 %v2831, %v2958
        %v2960 = vpop.f32.mrf.mxu0
        %v2961 = vadd.f32 %v2831, %v2960
        %2962 = vmatmul.bf16.gmra.mxu0 %v2775
        %v2963 = vpop.f32.mrf.mxu0
        %v2964 = vadd.f32 %v2831, %v2963
        %v2965 = vpop.f32.mrf.mxu0
        %v2966 = vadd.f32 %v2831, %v2965
        %2967 = vmatmul.bf16.gmra.mxu0 %v2777
        %v2968 = vpop.f32.mrf.mxu0
        %v2969 = vadd.f32 %v2831, %v2968
        %v2970 = vpop.f32.mrf.mxu0
        %v2971 = vadd.f32 %v2831, %v2970
        %2972 = vmatmul.bf16.gmra.mxu0 %v2779
        %v2973 = vpop.f32.mrf.mxu0
        %v2974 = vadd.f32 %v2831, %v2973
        %v2975 = vpop.f32.mrf.mxu0
        %v2976 = vadd.f32 %v2831, %v2975
        %2977 = vmatmul.bf16.gmra.mxu0 %v2781
        %v2978 = vpop.f32.mrf.mxu0
        %v2979 = vadd.f32 %v2831, %v2978
        %v2980 = vpop.f32.mrf.mxu0
        %v2981 = vadd.f32 %v2831, %v2980
        %2982 = vmatmul.bf16.gmra.mxu0 %v2783
        %v2983 = vpop.f32.mrf.mxu0
        %v2984 = vadd.f32 %v2831, %v2983
        %v2985 = vpop.f32.mrf.mxu0
        %v2986 = vadd.f32 %v2831, %v2985
        %2987 = vmatmul.bf16.gmra.mxu0 %v2785
        %v2988 = vpop.f32.mrf.mxu0
        %v2989 = vadd.f32 %v2831, %v2988
        %v2990 = vpop.f32.mrf.mxu0
        %v2991 = vadd.f32 %v2831, %v2990
        %2992 = vmatmul.bf16.gmra.mxu0 %v2787
        %v2993 = vpop.f32.mrf.mxu0
        %v2994 = vadd.f32 %v2831, %v2993
        %v2995 = vpop.f32.mrf.mxu0
        %v2996 = vadd.f32 %v2831, %v2995
        %2997 = vmatmul.bf16.gmra.mxu0 %v2789
        %v2998 = vpop.f32.mrf.mxu0
        %v2999 = vadd.f32 %v2831, %v2998
        %v3000 = vpop.f32.mrf.mxu0
        %v3001 = vadd.f32 %v2831, %v3000
        %3002 = vmatmul.bf16.gmra.mxu0 %v2791
        %v3003 = vpop.f32.mrf.mxu0
        %v3004 = vadd.f32 %v2831, %v3003
        %v3005 = vpop.f32.mrf.mxu0
        %v3006 = vadd.f32 %v2831, %v3005
        %3007 = vmatmul.bf16.gmra.mxu0 %v2793
        %v3008 = vpop.f32.mrf.mxu0
        %v3009 = vadd.f32 %v2831, %v3008
        %v3010 = vpop.f32.mrf.mxu0
        %v3011 = vadd.f32 %v2831, %v3010
        %3012 = vmatmul.bf16.gmra.mxu0 %v2795
        %v3013 = vpop.f32.mrf.mxu0
        %v3014 = vadd.f32 %v2831, %v3013
        %v3015 = vpop.f32.mrf.mxu0
        %v3016 = vadd.f32 %v2831, %v3015
        %3017 = vdwg.mxu0
        %3018 = vmatpush.bf16.msra.mxu0 %v2912
        %3019 = vmatpush.bf16.msra.mxu0 %v2911
        %3020 = vmatpush.bf16.msra.mxu0 %v2910
        %3021 = vmatpush.bf16.msra.mxu0 %v2909
        %3022 = vmatpush.bf16.msra.mxu0 %v2908
        %3023 = vmatpush.bf16.msra.mxu0 %v2907
        %3024 = vmatpush.bf16.msra.mxu0 %v2906
        %3025 = vmatpush.bf16.msra.mxu0 %v2905
        %3026 = vmatmul.bf16.gmra.mxu0 %v2766
        %v3027 = vpop.f32.mrf.mxu0
        %v3028 = vadd.f32 %v2939, %v3027
        %v3029 = vpop.f32.mrf.mxu0
        %v3030 = vadd.f32 %v2941, %v3029
        %3031 = vmatmul.bf16.gmra.mxu0 %v2768
        %v3032 = vpop.f32.mrf.mxu0
        %v3033 = vadd.f32 %v2944, %v3032
        %v3034 = vpop.f32.mrf.mxu0
        %v3035 = vadd.f32 %v2946, %v3034
        %3036 = vmatmul.bf16.gmra.mxu0 %v2770
        %v3037 = vpop.f32.mrf.mxu0
        %v3038 = vadd.f32 %v2949, %v3037
        %v3039 = vpop.f32.mrf.mxu0
        %v3040 = vadd.f32 %v2951, %v3039
        %3041 = vmatmul.bf16.gmra.mxu0 %v2772
        %v3042 = vpop.f32.mrf.mxu0
        %v3043 = vadd.f32 %v2954, %v3042
        %v3044 = vpop.f32.mrf.mxu0
        %v3045 = vadd.f32 %v2956, %v3044
        %3046 = vmatmul.bf16.gmra.mxu0 %v2774
        %v3047 = vpop.f32.mrf.mxu0
        %v3048 = vadd.f32 %v2959, %v3047
        %v3049 = vpop.f32.mrf.mxu0
        %v3050 = vadd.f32 %v2961, %v3049
        %3051 = vmatmul.bf16.gmra.mxu0 %v2776
        %v3052 = vpop.f32.mrf.mxu0
        %v3053 = vadd.f32 %v2964, %v3052
        %v3054 = vpop.f32.mrf.mxu0
        %v3055 = vadd.f32 %v2966, %v3054
        %3056 = vmatmul.bf16.gmra.mxu0 %v2778
        %v3057 = vpop.f32.mrf.mxu0
        %v3058 = vadd.f32 %v2969, %v3057
        %v3059 = vpop.f32.mrf.mxu0
        %v3060 = vadd.f32 %v2971, %v3059
        %3061 = vmatmul.bf16.gmra.mxu0 %v2780
        %v3062 = vpop.f32.mrf.mxu0
        %v3063 = vadd.f32 %v2974, %v3062
        %v3064 = vpop.f32.mrf.mxu0
        %v3065 = vadd.f32 %v2976, %v3064
        %3066 = vmatmul.bf16.gmra.mxu0 %v2782
        %v3067 = vpop.f32.mrf.mxu0
        %v3068 = vadd.f32 %v2979, %v3067
        %v3069 = vpop.f32.mrf.mxu0
        %v3070 = vadd.f32 %v2981, %v3069
        %3071 = vmatmul.bf16.gmra.mxu0 %v2784
        %v3072 = vpop.f32.mrf.mxu0
        %v3073 = vadd.f32 %v2984, %v3072
        %v3074 = vpop.f32.mrf.mxu0
        %v3075 = vadd.f32 %v2986, %v3074
        %3076 = vmatmul.bf16.gmra.mxu0 %v2786
        %v3077 = vpop.f32.mrf.mxu0
        %v3078 = vadd.f32 %v2989, %v3077
        %v3079 = vpop.f32.mrf.mxu0
        %v3080 = vadd.f32 %v2991, %v3079
        %3081 = vmatmul.bf16.gmra.mxu0 %v2788
        %v3082 = vpop.f32.mrf.mxu0
        %v3083 = vadd.f32 %v2994, %v3082
        %v3084 = vpop.f32.mrf.mxu0
        %v3085 = vadd.f32 %v2996, %v3084
        %3086 = vmatmul.bf16.gmra.mxu0 %v2790
        %v3087 = vpop.f32.mrf.mxu0
        %v3088 = vadd.f32 %v2999, %v3087
        %v3089 = vpop.f32.mrf.mxu0
        %v3090 = vadd.f32 %v3001, %v3089
        %3091 = vmatmul.bf16.gmra.mxu0 %v2792
        %v3092 = vpop.f32.mrf.mxu0
        %v3093 = vadd.f32 %v3004, %v3092
        %v3094 = vpop.f32.mrf.mxu0
        %v3095 = vadd.f32 %v3006, %v3094
        %3096 = vmatmul.bf16.gmra.mxu0 %v2794
        %v3097 = vpop.f32.mrf.mxu0
        %v3098 = vadd.f32 %v3009, %v3097
        %v3099 = vpop.f32.mrf.mxu0
        %v3100 = vadd.f32 %v3011, %v3099
        %3101 = vmatmul.bf16.gmra.mxu0 %v2796
        %v3102 = vpop.f32.mrf.mxu0
        %v3103 = vadd.f32 %v3014, %v3102
        %v3104 = vpop.f32.mrf.mxu0
        %v3105 = vadd.f32 %v3016, %v3104
        %3106 = vdwg.mxu0
        %3107 = vst [vmem:[%s346] sm:$0xff] %v3028
        %3108 = vst [vmem:[%s346 + $0x8] sm:$0xff] %v3030
        %3109 = vst [vmem:[%s346 + $0x10] sm:$0xff] %v3033
        %3110 = vst [vmem:[%s346 + $0x18] sm:$0xff] %v3035
        %3111 = vst [vmem:[%s346 + $0x20] sm:$0xff] %v3038
        %3112 = vst [vmem:[%s346 + $0x28] sm:$0xff] %v3040
        %3113 = vst [vmem:[%s346 + $0x30] sm:$0xff] %v3043
        %3114 = vst [vmem:[%s346 + $0x38] sm:$0xff] %v3045
        %3115 = vst [vmem:[%s346 + $0x40] sm:$0xff] %v3048
        %3116 = vst [vmem:[%s346 + $0x48] sm:$0xff] %v3050
        %3117 = vst [vmem:[%s346 + $0x50] sm:$0xff] %v3053
        %3118 = vst [vmem:[%s346 + $0x58] sm:$0xff] %v3055
        %3119 = vst [vmem:[%s346 + $0x60] sm:$0xff] %v3058
        %3120 = vst [vmem:[%s346 + $0x68] sm:$0xff] %v3060
        %3121 = vst [vmem:[%s346 + $0x70] sm:$0xff] %v3063
        %3122 = vst [vmem:[%s346 + $0x78] sm:$0xff] %v3065
        %3123 = vst [vmem:[%s346 + $0x80] sm:$0xff] %v3068
        %3124 = vst [vmem:[%s346 + $0x88] sm:$0xff] %v3070
        %3125 = vst [vmem:[%s346 + $0x90] sm:$0xff] %v3073
        %3126 = vst [vmem:[%s346 + $0x98] sm:$0xff] %v3075
        %3127 = vst [vmem:[%s346 + $0xa0] sm:$0xff] %v3078
        %3128 = vst [vmem:[%s346 + $0xa8] sm:$0xff] %v3080
        %3129 = vst [vmem:[%s346 + $0xb0] sm:$0xff] %v3083
        %3130 = vst [vmem:[%s346 + $0xb8] sm:$0xff] %v3085
        %3131 = vst [vmem:[%s346 + $0xc0] sm:$0xff] %v3088
        %3132 = vst [vmem:[%s346 + $0xc8] sm:$0xff] %v3090
        %3133 = vst [vmem:[%s346 + $0xd0] sm:$0xff] %v3093
        %3134 = vst [vmem:[%s346 + $0xd8] sm:$0xff] %v3095
        %3135 = vst [vmem:[%s346 + $0xe0] sm:$0xff] %v3098
        %3136 = vst [vmem:[%s346 + $0xe8] sm:$0xff] %v3100
        %3137 = vst [vmem:[%s346 + $0xf0] sm:$0xff] %v3103
        %3138 = vst [vmem:[%s346 + $0xf8] sm:$0xff] %v3105
        %s3139 = sand.u32 %s186, 1
        %s3140 = scalar_lea.sflag [#allocation4], %s3139
        %s3141 = sand.u32 %s186, 1
        %s3142 = smul.addr %s3141, 256
        %s3143 = scalar_lea.vmem [#allocation10], %s3142
        // Predicated region
        $region65: #{tpu_custom_call.1} parent=47 // pred_check
          %p3144 = pneg %p196
        $region66: #{tpu_custom_call.1} parent=47 // pred_check_branch
          %3146 = sbr.rel (%p3144) target = $region68
        $region67: #{tpu_custom_call.1} parent=47 // pred_region
          %s3147 = smul.u32 32, %s26
          %3149 = vsyncadd %s3140, 0
          %s3150 = smul.addr %s3147, 8
          %s3151 = scalar_lea.hbm %s7, %s3150
          %s3152 = sshll.u32 %s3143, 4
          %s3153 = int_to_ptr.vmem [resolvable:$true] %s3152
          %s3154 = sshll.u32 %s3151, 4
          %s3155 = int_to_ptr.hbm [resolvable:$true] %s3154
          %3160 = dma.vmem_to_hbm [thread:$0]  %s3153, 4096, %s3155, %s3140, 128, 128, 8
        $region68: #{tpu_custom_call.1} parent=47 // pred_fallthru
          _
      $region48: #{tpu_custom_call.1} parent=5 // pred_fallthru
        _
      %p3161 = scmp.le.s32.totalorder 2, %s21
      // Predicated region
      $region69: #{tpu_custom_call.1} parent=5 // pred_check
        %p3162 = pneg %p3161
      $region70: #{tpu_custom_call.1} parent=5 // pred_check_branch
        %3164 = sbr.rel (%p3162) target = $region72
      $region71: #{tpu_custom_call.1} parent=5 // pred_region
        %s3165 = ssub.s32 %s21, 2
        // Predicated region
        $region73: #{tpu_custom_call.1} parent=71 // pred_check
          %p3166 = pneg %p202
        $region74: #{tpu_custom_call.1} parent=71 // pred_check_branch
          %3168 = sbr.rel (%p3166) target = $region76
        $region75: #{tpu_custom_call.1} parent=71 // pred_region
          %s3169 = sand.u32 %s187, 1
          %s3170 = scalar_lea.sflag [#allocation4], %s3169
          %s3171 = sand.u32 %s187, 1
          %s3172 = smul.addr %s3171, 256
          %s3173 = scalar_lea.vmem [#allocation10], %s3172
          %3175 = dma.done %s3170, 4096
        $region76: #{tpu_custom_call.1} parent=71 // pred_fallthru
          _
      $region72: #{tpu_custom_call.1} parent=5 // pred_fallthru
        _
    $region6: #{tpu_custom_call.1} parent=1 // loop_footer
      %s25 = sadd.s32 1, %s21
    $region7: #{tpu_custom_call.1} parent=1 // loop_footer_branch
      %20 = sbr.rel target = $region3
    $region8: #{tpu_custom_call.1} parent=1 // loop_exit
      _
    %3176 = vsyncpa [#allocation3], 1
    %s3177 = scalar_lea.sflag [#allocation3], 1
    %3178 = vsyncpa %s3177, 1
    %3179 = vsyncpa [#allocation6], 1
    %3180 = vsyncpa [#allocation9], 1
    %3181 = vsyncpa [#allocation4], 1
    %s3182 = scalar_lea.sflag [#allocation4], 1
    %3183 = vsyncpa %s3182, 1

</llo_original>
